<compile_context>
chip_gen: v5e
topology: v5e:2x2
jax: 0.10.0
libtpu: 0.0.40
codegen_flags: <defaults>
</compile_context>

<pallas_src>
import functools
import math

import jax
import jax.numpy as jnp
from jax import lax
from jax.experimental import pallas as pl
from jax.experimental.pallas import tpu as pltpu

_EPS = 1e-5          # PyTorch BatchNorm1d default
_V = 25              # NTU joint count (hard-coded in the PyTorch forward)
_VMEM_LIMIT = 32 * 1024 * 1024   # explicit scoped-VMEM cap (safe on v5e/v6e/v7x)

_NTU_PAIRS = ((1, 2), (2, 21), (3, 21), (4, 3), (5, 21), (6, 5), (7, 6),
              (8, 7), (9, 21), (10, 9), (11, 10), (12, 11), (13, 1), (14, 13),
              (15, 14), (16, 15), (17, 1), (18, 17), (19, 18), (20, 19),
              (22, 23), (21, 21), (23, 8), (24, 25), (25, 12))


def _parent_index():
    parent = [0] * _V
    for v1, v2 in _NTU_PAIRS:
        parent[v1 - 1] = v2 - 1
    return jnp.asarray(parent, dtype=jnp.int32)


def _pick_nt_tile(ntp, target=4096):
    """Largest multiple of 128 that divides ntp and is <= target."""
    best, k = 128, ntp // 128
    for m in range(1, k + 1):
        if k % m == 0 and m * 128 <= target:
            best = m * 128
    return best


# --------------------------------------------------------------------------
# Kernel 1: streaming BatchNorm statistics -> per-channel (scale, shift)
# --------------------------------------------------------------------------
def _make_stats_kernel(inv_n, num_nt_blocks):
    """x_ref: (Vb, C, nt); g/b: (Vb, C, 1); scale/shift: (Vb, C, 1) outputs
    that double as running sum / sum-of-squares accumulators."""
    def kernel(x_ref, g_ref, b_ref, scale_ref, shift_ref):
        j = pl.program_id(1)

        @pl.when(j == 0)
        def _init():
            scale_ref[...] = jnp.zeros_like(scale_ref)
            shift_ref[...] = jnp.zeros_like(shift_ref)

        x = x_ref[...].astype(jnp.float32)
        scale_ref[...] += jnp.sum(x, axis=2, keepdims=True)       # running sum
        shift_ref[...] += jnp.sum(x * x, axis=2, keepdims=True)   # running sumsq

        @pl.when(j == num_nt_blocks - 1)
        def _finalize():
            mean = scale_ref[...] * inv_n
            # E[x^2] - mean^2 accumulated in f32; clamp tiny negatives from
            # cancellation (bone data is near zero-mean, so this is benign).
            var = jnp.maximum(shift_ref[...] * inv_n - mean * mean, 0.0)
            s = g_ref[...] * lax.rsqrt(var + _EPS)
            scale_ref[...] = s
            shift_ref[...] = b_ref[...] - mean * s

    return kernel


def _bn_scale_shift(xk, gamma_vc, beta_vc, nt_true, nt_tile):
    """xk: (V, C, NTp) -> per-channel affine (scale, shift), each (V, C)."""
    V, C, NTp = xk.shape
    num_nt_blocks = NTp // nt_tile
    v_blk = 5 if V % 5 == 0 else V
    kernel = _make_stats_kernel(1.0 / float(nt_true), num_nt_blocks)

    scale, shift = pl.pallas_call(
        kernel,
        out_shape=(jax.ShapeDtypeStruct((V, C, 1), jnp.float32),
                   jax.ShapeDtypeStruct((V, C, 1), jnp.float32)),
        grid=(V // v_blk, num_nt_blocks),
        in_specs=[
            pl.BlockSpec((v_blk, C, nt_tile), lambda vb, j: (vb, 0, j)),
            pl.BlockSpec((v_blk, C, 1), lambda vb, j: (vb, 0, 0)),
            pl.BlockSpec((v_blk, C, 1), lambda vb, j: (vb, 0, 0)),
        ],
        out_specs=(pl.BlockSpec((v_blk, C, 1), lambda vb, j: (vb, 0, 0)),
                   pl.BlockSpec((v_blk, C, 1), lambda vb, j: (vb, 0, 0))),
        compiler_params=pltpu.CompilerParams(
            dimension_semantics=("parallel", "arbitrary"),
            vmem_limit_bytes=_VMEM_LIMIT),
    )(xk, gamma_vc.reshape(V, C, 1), beta_vc.reshape(V, C, 1))
    return scale[:, :, 0], shift[:, :, 0]


# --------------------------------------------------------------------------
# Kernel 2: fused (BN-folded) 1x1 conv -> ReLU -> 1x1 conv -> ReLU [-> sum]
# --------------------------------------------------------------------------
def _make_embed_kernel(n_branches):
    """Per branch refs: x (1,C,nt), w1eff (1,H,C), b1eff (1,H,1),
    w2 (O,H), b2 (O,1); output o (1,O,nt)."""
    def kernel(*refs):
        o_ref = refs[-1]
        acc = None
        for br in range(n_branches):
            x_ref, w1_ref, b1_ref, w2_ref, b2_ref = refs[5 * br:5 * br + 5]
            x = x_ref[0].astype(jnp.float32)                       # (C, nt)
            y = jnp.dot(w1_ref[0], x, preferred_element_type=jnp.float32,
                        precision=lax.Precision.HIGHEST)
            y = jnp.maximum(y + b1_ref[0], 0.0)                    # (H, nt)
            y = jnp.dot(w2_ref[...], y, preferred_element_type=jnp.float32,
                        precision=lax.Precision.HIGHEST)
            y = jnp.maximum(y + b2_ref[...], 0.0)                  # (O, nt)
            acc = y if acc is None else acc + y
        o_ref[0] = acc.astype(o_ref.dtype)

    return kernel


# --------------------------------------------------------------------------
# Forward wrapper (full block_bone_input semantics)
# --------------------------------------------------------------------------
def block_bone_input_forward(inp, params, mode=2):
    """inp: (N, T, V*C) float32; params: {'bone': {...}, 't_bone': {...}}."""
    N, T, VC = inp.shape
    V = _V
    assert VC % V == 0
    C = VC // V
    NT = N * T
    NTp = ((NT + 127) // 128) * 128       # lane-dense pad (no-op if NT%128==0)
    nt_tile = _pick_nt_tile(NTp)

    # Kernel layout (V, C, N, T): channels on sublanes, batch*time on lanes.
    # TODO(synk): joint-gather bone differencing + layout permute stay in XLA
    # (elementwise/gather glue fused into one HBM pass; no clean rectangular
    # BlockSpec for a static gather along the joint axis).
    x = jnp.transpose(inp.reshape(N, T, V, C), (2, 3, 0, 1))        # (V, C, N, T)
    bone = x - x[_parent_index()]
    t_bone = jnp.concatenate(
        [bone[..., 1:] - bone[..., :-1], jnp.zeros_like(bone[..., :1])], axis=-1)

    def prep(z):
        z = z.reshape(V, C, NT)
        if NTp != NT:
            z = jnp.pad(z, ((0, 0), (0, 0), (0, NTp - NT)))
        return z

    branch_names = {0: ("bone",), 1: ("t_bone",), 2: ("bone", "t_bone")}[mode]
    branch_x = {}
    if "bone" in branch_names:
        branch_x["bone"] = prep(bone)
    if "t_bone" in branch_names:
        branch_x["t_bone"] = prep(t_bone)

    fused_args, fused_specs = [], []
    out_ch = None
    for name in branch_names:
        p = params[name]
        xk = branch_x[name]
        hid, out_ch = p["w1"].shape[0], p["w2"].shape[0]
        # PyTorch BN channel index in view(N, C*V, T) is c*V + v.
        gamma_vc = p["gamma"].reshape(C, V).T
        beta_vc = p["beta"].reshape(C, V).T
        scale, shift = _bn_scale_shift(xk, gamma_vc, beta_vc, NT, nt_tile)
        # Fold BN affine into the first 1x1 conv (tiny tensors, wrapper-side):
        #   W1 @ (x*scale + shift) + b1 == (W1*scale) @ x + (b1 + W1 @ shift)
        w1eff = jnp.einsum("hc,vc->vhc", p["w1"], scale)             # (V, H, C)
        b1eff = (p["b1"][None, :] +
                 jnp.einsum("hc,vc->vh", p["w1"], shift,
                            precision="highest"))[:, :, None]        # (V, H, 1)
        fused_args += [xk, w1eff, b1eff, p["w2"], p["b2"].reshape(-1, 1)]
        fused_specs += [
            pl.BlockSpec((1, C, nt_tile), lambda v, j: (v, 0, j)),
            pl.BlockSpec((1, hid, C), lambda v, j: (v, 0, 0)),
            pl.BlockSpec((1, hid, 1), lambda v, j: (v, 0, 0)),
            pl.BlockSpec((out_ch, hid), lambda v, j: (0, 0)),
            pl.BlockSpec((out_ch, 1), lambda v, j: (0, 0)),
        ]

    out = pl.pallas_call(
        _make_embed_kernel(len(branch_names)),
        out_shape=jax.ShapeDtypeStruct((V, out_ch, NTp), inp.dtype),
        grid=(V, NTp // nt_tile),
        in_specs=fused_specs,
        out_specs=pl.BlockSpec((1, out_ch, nt_tile), lambda v, j: (v, 0, j)),
        compiler_params=pltpu.CompilerParams(
            dimension_semantics=("parallel", "parallel"),
            vmem_limit_bytes=_VMEM_LIMIT),
    )(*fused_args)

    out = out[:, :, :NT].reshape(V, out_ch, N, T)
    return jnp.transpose(out, (2, 1, 0, 3))          # (N, out_ch, V, T)


# --------------------------------------------------------------------------
# Pure-JAX reference (mirrors the PyTorch forward) + demo
# --------------------------------------------------------------------------
def _reference(inp, params, mode=2):
    N, T, VC = inp.shape
    V = _V
    C = VC // V
    x = jnp.transpose(inp.reshape(N, T, V, C), (0, 3, 2, 1))        # (N, C, V, T)
    bone = x - x[:, :, _parent_index(), :]
    t_bone = jnp.concatenate(
        [bone[..., 1:] - bone[..., :-1], jnp.zeros_like(bone[..., :1])], axis=-1)

    def embed(z, p):
        zr = z.reshape(N, C * V, T).astype(jnp.float32)
        mean = jnp.mean(zr, axis=(0, 2), keepdims=True)
        var = jnp.mean((zr - mean) ** 2, axis=(0, 2), keepdims=True)
        zn = (zr - mean) / jnp.sqrt(var + _EPS)
        zn = zn * p["gamma"][None, :, None] + p["beta"][None, :, None]
        zn = zn.reshape(N, C, V, T)
        y = jnp.einsum("hc,ncvt->nhvt", p["w1"], zn, precision="highest")
        y = jnp.maximum(y + p["b1"][None, :, None, None], 0.0)
        y = jnp.einsum("oh,nhvt->novt", p["w2"], y, precision="highest")
        return jnp.maximum(y + p["b2"][None, :, None, None], 0.0)

    outs = []
    if mode in (0, 2):
        outs.append(embed(bone, params["bone"]))
    if mode in (1, 2):
        outs.append(embed(t_bone, params["t_bone"]))
    return outs[0] if len(outs) == 1 else outs[0] + outs[1]


def _make_params(key, C, hid=64, out_ch=64):
    def branch(k):
        ks = jax.random.split(k, 6)
        cv = C * _V
        return {
            "gamma": 1.0 + 0.05 * jax.random.normal(ks[0], (cv,), jnp.float32),
            "beta": 0.05 * jax.random.normal(ks[1], (cv,), jnp.float32),
            "w1": 0.05 * jax.random.normal(ks[2], (hid, C), jnp.float32),
            "b1": 0.05 * jax.random.normal(ks[3], (hid,), jnp.float32),
            "w2": 0.05 * jax.random.normal(ks[4], (out_ch, hid), jnp.float32),
            "b2": 0.05 * jax.random.normal(ks[5], (out_ch,), jnp.float32),
        }
    kb, kt = jax.random.split(key)
    return {"bone": branch(kb), "t_bone": branch(kt)}


if __name__ == "__main__":
    # Small skeleton-style shapes: N=2 samples, T=16 frames, V=25 joints, C=3.
    N, T, C = 2, 16, 3
    key = jax.random.PRNGKey(0)
    k_in, k_p = jax.random.split(key)
    inp = jax.random.normal(k_in, (N, T, _V * C), dtype=jnp.float32)
    params = _make_params(k_p, C)

    fwd = jax.jit(functools.partial(block_bone_input_forward, mode=2))
    y = jax.block_until_ready(fwd(inp, params))

    y_ref = _reference(inp, params, mode=2)
    assert y.shape == (N, 64, _V, T), y.shape
    max_err = float(jnp.max(jnp.abs(y - y_ref)))
    assert jnp.allclose(y, y_ref, atol=2e-3, rtol=2e-3), max_err

    print("KERNEL_OK")
</pallas_src>

<mosaic_0001>
module attributes {stable_mosaic.version = 11 : i64} {
  func.func @kernel(%arg0: i32, %arg1: i32, %arg2: memref<5x3x128xf32, #tpu.memory_space<vmem>>, %arg3: memref<5x3x1xf32, #tpu.memory_space<vmem>>, %arg4: memref<5x3x1xf32, #tpu.memory_space<vmem>>, %arg5: memref<5x3x1xf32, #tpu.memory_space<vmem>>, %arg6: memref<5x3x1xf32, #tpu.memory_space<vmem>>) attributes {dimension_semantics = [#tpu.dimension_semantics<parallel>, #tpu.dimension_semantics<arbitrary>], iteration_bounds = array<i64: 5, 1>, scalar_prefetch = 0 : i64, scratch_operands = 0 : i64, tpu.core_type = #tpu.core_type<tc>, window_params = [{transform_indices = @transform_0, window_bounds = array<i64: 5, 3, 128>}, {transform_indices = @transform_1, window_bounds = array<i64: 5, 3, 1>}, {transform_indices = @transform_2, window_bounds = array<i64: 5, 3, 1>}, {transform_indices = @transform_3, window_bounds = array<i64: 5, 3, 1>}, {transform_indices = @transform_4, window_bounds = array<i64: 5, 3, 1>}]} {
    %c0_i32 = arith.constant 0 : i32
    %0 = arith.cmpi eq, %arg1, %c0_i32 : i32
    %1 = arith.extui %0 : i1 to i32
    %c0_i32_0 = arith.constant 0 : i32
    %2 = arith.cmpi ne, %1, %c0_i32_0 : i32
    scf.if %2 {
      %cst_18 = arith.constant 0.000000e+00 : f32
      %18 = vector.broadcast %cst_18 : f32 to vector<5x3x1xf32>
      %c0_19 = arith.constant 0 : index
      %c0_20 = arith.constant 0 : index
      %c0_21 = arith.constant 0 : index
      %19 = vector.load %arg5[%c0_19, %c0_20, %c0_21] : memref<5x3x1xf32, #tpu.memory_space<vmem>>, vector<5x3x1xf32>
      tpu.vector_store %arg5[%c0_19, %c0_20, %c0_21], %18 {strides = array<i32>} : memref<5x3x1xf32, #tpu.memory_space<vmem>>, vector<5x3x1xf32>,
      %cst_22 = arith.constant 0.000000e+00 : f32
      %20 = vector.broadcast %cst_22 : f32 to vector<5x3x1xf32>
      %c0_23 = arith.constant 0 : index
      %c0_24 = arith.constant 0 : index
      %c0_25 = arith.constant 0 : index
      %21 = vector.load %arg6[%c0_23, %c0_24, %c0_25] : memref<5x3x1xf32, #tpu.memory_space<vmem>>, vector<5x3x1xf32>
      tpu.vector_store %arg6[%c0_23, %c0_24, %c0_25], %20 {strides = array<i32>} : memref<5x3x1xf32, #tpu.memory_space<vmem>>, vector<5x3x1xf32>,
    } else {
    }
    %c0 = arith.constant 0 : index
    %c0_1 = arith.constant 0 : index
    %c0_2 = arith.constant 0 : index
    %3 = vector.load %arg2[%c0, %c0_1, %c0_2] : memref<5x3x128xf32, #tpu.memory_space<vmem>>, vector<5x3x128xf32>
    %c0_3 = arith.constant 0 : index
    %c0_4 = arith.constant 0 : index
    %c0_5 = arith.constant 0 : index
    %4 = vector.load %arg5[%c0_3, %c0_4, %c0_5] : memref<5x3x1xf32, #tpu.memory_space<vmem>>, vector<5x3x1xf32>
    %cst = arith.constant dense<0.000000e+00> : vector<5x3xf32>
    %5 = vector.multi_reduction <add>, %3, %cst [2] : vector<5x3x128xf32> to vector<5x3xf32>
    %6 = vector.shape_cast %5 : vector<5x3xf32> to vector<5x3x1xf32>
    %7 = arith.addf %4, %6 : vector<5x3x1xf32>
    %c0_6 = arith.constant 0 : index
    %c0_7 = arith.constant 0 : index
    %c0_8 = arith.constant 0 : index
    %8 = vector.load %arg5[%c0_6, %c0_7, %c0_8] : memref<5x3x1xf32, #tpu.memory_space<vmem>>, vector<5x3x1xf32>
    tpu.vector_store %arg5[%c0_6, %c0_7, %c0_8], %7 {strides = array<i32>} : memref<5x3x1xf32, #tpu.memory_space<vmem>>, vector<5x3x1xf32>,
    %c0_9 = arith.constant 0 : index
    %c0_10 = arith.constant 0 : index
    %c0_11 = arith.constant 0 : index
    %9 = vector.load %arg6[%c0_9, %c0_10, %c0_11] : memref<5x3x1xf32, #tpu.memory_space<vmem>>, vector<5x3x1xf32>
    %10 = arith.mulf %3, %3 : vector<5x3x128xf32>
    %cst_12 = arith.constant dense<0.000000e+00> : vector<5x3xf32>
    %11 = vector.multi_reduction <add>, %10, %cst_12 [2] : vector<5x3x128xf32> to vector<5x3xf32>
    %12 = vector.shape_cast %11 : vector<5x3xf32> to vector<5x3x1xf32>
    %13 = arith.addf %9, %12 : vector<5x3x1xf32>
    %c0_13 = arith.constant 0 : index
    %c0_14 = arith.constant 0 : index
    %c0_15 = arith.constant 0 : index
    %14 = vector.load %arg6[%c0_13, %c0_14, %c0_15] : memref<5x3x1xf32, #tpu.memory_space<vmem>>, vector<5x3x1xf32>
    tpu.vector_store %arg6[%c0_13, %c0_14, %c0_15], %13 {strides = array<i32>} : memref<5x3x1xf32, #tpu.memory_space<vmem>>, vector<5x3x1xf32>,
    %c0_i32_16 = arith.constant 0 : i32
    %15 = arith.cmpi eq, %arg1, %c0_i32_16 : i32
    %16 = arith.extui %15 : i1 to i32
    %c0_i32_17 = arith.constant 0 : i32
    %17 = arith.cmpi ne, %16, %c0_i32_17 : i32
    scf.if %17 {
      %c0_18 = arith.constant 0 : index
      %c0_19 = arith.constant 0 : index
      %c0_20 = arith.constant 0 : index
      %18 = vector.load %arg5[%c0_18, %c0_19, %c0_20] : memref<5x3x1xf32, #tpu.memory_space<vmem>>, vector<5x3x1xf32>
      %cst_21 = arith.constant 3.125000e-02 : f32
      %19 = vector.broadcast %cst_21 : f32 to vector<5x3x1xf32>
      %20 = arith.mulf %18, %19 : vector<5x3x1xf32>
      %c0_22 = arith.constant 0 : index
      %c0_23 = arith.constant 0 : index
      %c0_24 = arith.constant 0 : index
      %21 = vector.load %arg6[%c0_22, %c0_23, %c0_24] : memref<5x3x1xf32, #tpu.memory_space<vmem>>, vector<5x3x1xf32>
      %cst_25 = arith.constant 3.125000e-02 : f32
      %22 = vector.broadcast %cst_25 : f32 to vector<5x3x1xf32>
      %23 = arith.mulf %21, %22 : vector<5x3x1xf32>
      %24 = arith.mulf %20, %20 : vector<5x3x1xf32>
      %25 = arith.subf %23, %24 : vector<5x3x1xf32>
      %cst_26 = arith.constant 0.000000e+00 : f32
      %26 = vector.broadcast %cst_26 : f32 to vector<5x3x1xf32>
      %27 = arith.maximumf %25, %26 : vector<5x3x1xf32>
      %c0_27 = arith.constant 0 : index
      %c0_28 = arith.constant 0 : index
      %c0_29 = arith.constant 0 : index
      %28 = vector.load %arg3[%c0_27, %c0_28, %c0_29] : memref<5x3x1xf32, #tpu.memory_space<vmem>>, vector<5x3x1xf32>
      %cst_30 = arith.constant 9.99999974E-6 : f32
      %29 = vector.broadcast %cst_30 : f32 to vector<5x3x1xf32>
      %30 = arith.addf %27, %29 : vector<5x3x1xf32>
      %31 = math.rsqrt %30 : vector<5x3x1xf32>
      %32 = arith.mulf %28, %31 : vector<5x3x1xf32>
      %c0_31 = arith.constant 0 : index
      %c0_32 = arith.constant 0 : index
      %c0_33 = arith.constant 0 : index
      %33 = vector.load %arg5[%c0_31, %c0_32, %c0_33] : memref<5x3x1xf32, #tpu.memory_space<vmem>>, vector<5x3x1xf32>
      tpu.vector_store %arg5[%c0_31, %c0_32, %c0_33], %32 {strides = array<i32>} : memref<5x3x1xf32, #tpu.memory_space<vmem>>, vector<5x3x1xf32>,
      %c0_34 = arith.constant 0 : index
      %c0_35 = arith.constant 0 : index
      %c0_36 = arith.constant 0 : index
      %34 = vector.load %arg4[%c0_34, %c0_35, %c0_36] : memref<5x3x1xf32, #tpu.memory_space<vmem>>, vector<5x3x1xf32>
      %35 = arith.mulf %20, %32 : vector<5x3x1xf32>
      %36 = arith.subf %34, %35 : vector<5x3x1xf32>
      %c0_37 = arith.constant 0 : index
      %c0_38 = arith.constant 0 : index
      %c0_39 = arith.constant 0 : index
      %37 = vector.load %arg6[%c0_37, %c0_38, %c0_39] : memref<5x3x1xf32, #tpu.memory_space<vmem>>, vector<5x3x1xf32>
      tpu.vector_store %arg6[%c0_37, %c0_38, %c0_39], %36 {strides = array<i32>} : memref<5x3x1xf32, #tpu.memory_space<vmem>>, vector<5x3x1xf32>,
    } else {
    }
    return
  }
  func.func @transform_0(%arg0: i32, %arg1: i32) -> (i32, i32, i32) {
    %c0_i32 = arith.constant 0 : i32
    %c0_i32_0 = arith.constant 0 : i32
    return %arg0, %c0_i32, %arg1 : i32, i32, i32
  }
  func.func @transform_1(%arg0: i32, %arg1: i32) -> (i32, i32, i32) {
    %c0_i32 = arith.constant 0 : i32
    %c0_i32_0 = arith.constant 0 : i32
    %c0_i32_1 = arith.constant 0 : i32
    return %arg0, %c0_i32, %c0_i32_0 : i32, i32, i32
  }
  func.func @transform_2(%arg0: i32, %arg1: i32) -> (i32, i32, i32) {
    %c0_i32 = arith.constant 0 : i32
    %c0_i32_0 = arith.constant 0 : i32
    %c0_i32_1 = arith.constant 0 : i32
    return %arg0, %c0_i32, %c0_i32_0 : i32, i32, i32
  }
  func.func @transform_3(%arg0: i32, %arg1: i32) -> (i32, i32, i32) {
    %c0_i32 = arith.constant 0 : i32
    %c0_i32_0 = arith.constant 0 : i32
    %c0_i32_1 = arith.constant 0 : i32
    return %arg0, %c0_i32, %c0_i32_0 : i32, i32, i32
  }
  func.func @transform_4(%arg0: i32, %arg1: i32) -> (i32, i32, i32) {
    %c0_i32 = arith.constant 0 : i32
    %c0_i32_0 = arith.constant 0 : i32
    %c0_i32_1 = arith.constant 0 : i32
    return %arg0, %c0_i32, %c0_i32_0 : i32, i32, i32
  }
}

module attributes {stable_mosaic.version = 11 : i64} {
  func.func @kernel(%arg0: i32, %arg1: i32, %arg2: memref<1x3x128xf32, #tpu.memory_space<vmem>>, %arg3: memref<1x64x3xf32, #tpu.memory_space<vmem>>, %arg4: memref<1x64x1xf32, #tpu.memory_space<vmem>>, %arg5: memref<64x64xf32, #tpu.memory_space<vmem>>, %arg6: memref<64x1xf32, #tpu.memory_space<vmem>>, %arg7: memref<1x3x128xf32, #tpu.memory_space<vmem>>, %arg8: memref<1x64x3xf32, #tpu.memory_space<vmem>>, %arg9: memref<1x64x1xf32, #tpu.memory_space<vmem>>, %arg10: memref<64x64xf32, #tpu.memory_space<vmem>>, %arg11: memref<64x1xf32, #tpu.memory_space<vmem>>, %arg12: memref<1x64x128xf32, #tpu.memory_space<vmem>>) attributes {dimension_semantics = [#tpu.dimension_semantics<parallel>, #tpu.dimension_semantics<parallel>], iteration_bounds = array<i64: 25, 1>, scalar_prefetch = 0 : i64, scratch_operands = 0 : i64, tpu.core_type = #tpu.core_type<tc>, window_params = [{transform_indices = @transform_0, window_bounds = array<i64: 1, 3, 128>}, {transform_indices = @transform_1, window_bounds = array<i64: 1, 64, 3>}, {transform_indices = @transform_2, window_bounds = array<i64: 1, 64, 1>}, {pipeline_mode = #tpu.pipeline_mode<synchronous>, transform_indices = @transform_3, window_bounds = array<i64: 64, 64>}, {pipeline_mode = #tpu.pipeline_mode<synchronous>, transform_indices = @transform_4, window_bounds = array<i64: 64, 1>}, {transform_indices = @transform_5, window_bounds = array<i64: 1, 3, 128>}, {transform_indices = @transform_6, window_bounds = array<i64: 1, 64, 3>}, {transform_indices = @transform_7, window_bounds = array<i64: 1, 64, 1>}, {pipeline_mode = #tpu.pipeline_mode<synchronous>, transform_indices = @transform_8, window_bounds = array<i64: 64, 64>}, {pipeline_mode = #tpu.pipeline_mode<synchronous>, transform_indices = @transform_9, window_bounds = array<i64: 64, 1>}, {transform_indices = @transform_10, window_bounds = array<i64: 1, 64, 128>}]} {
    %c0 = arith.constant 0 : index
    %c0_0 = arith.constant 0 : index
    %c0_1 = arith.constant 0 : index
    %0 = vector.load %arg2[%c0, %c0_0, %c0_1] : memref<1x3x128xf32, #tpu.memory_space<vmem>>, vector<1x3x128xf32>
    %1 = vector.shape_cast %0 : vector<1x3x128xf32> to vector<3x128xf32>
    %c0_2 = arith.constant 0 : index
    %c0_3 = arith.constant 0 : index
    %c0_4 = arith.constant 0 : index
    %2 = vector.load %arg3[%c0_2, %c0_3, %c0_4] : memref<1x64x3xf32, #tpu.memory_space<vmem>>, vector<1x64x3xf32>
    %3 = vector.shape_cast %2 : vector<1x64x3xf32> to vector<64x3xf32>
    %cst = arith.constant dense<0.000000e+00> : vector<64x128xf32>
    %4 = tpu.matmul %3, %1, %cst {dimension_numbers = #tpu.dot_dimension_numbers<[1], [0], [0], [1], [0, 0, 1, 1], [], []>, precision = #tpu.contract_precision<fp32>} : vector<64x3xf32>, vector<3x128xf32>, vector<64x128xf32> -> vector<64x128xf32>
    %c0_5 = arith.constant 0 : index
    %c0_6 = arith.constant 0 : index
    %c0_7 = arith.constant 0 : index
    %5 = vector.load %arg4[%c0_5, %c0_6, %c0_7] : memref<1x64x1xf32, #tpu.memory_space<vmem>>, vector<1x64x1xf32>
    %6 = vector.shape_cast %5 : vector<1x64x1xf32> to vector<64x1xf32>
    %7 = vector.broadcast %6 : vector<64x1xf32> to vector<64x128xf32>
    %8 = arith.addf %4, %7 : vector<64x128xf32>
    %cst_8 = arith.constant 0.000000e+00 : f32
    %9 = vector.broadcast %cst_8 : f32 to vector<64x128xf32>
    %10 = arith.maximumf %8, %9 : vector<64x128xf32>
    %c0_9 = arith.constant 0 : index
    %c0_10 = arith.constant 0 : index
    %11 = vector.load %arg5[%c0_9, %c0_10] : memref<64x64xf32, #tpu.memory_space<vmem>>, vector<64x64xf32>
    %cst_11 = arith.constant dense<0.000000e+00> : vector<64x128xf32>
    %12 = tpu.matmul %11, %10, %cst_11 {dimension_numbers = #tpu.dot_dimension_numbers<[1], [0], [0], [1], [0, 0, 1, 1], [], []>, precision = #tpu.contract_precision<fp32>} : vector<64x64xf32>, vector<64x128xf32>, vector<64x128xf32> -> vector<64x128xf32>
    %c0_12 = arith.constant 0 : index
    %c0_13 = arith.constant 0 : index
    %13 = vector.load %arg6[%c0_12, %c0_13] : memref<64x1xf32, #tpu.memory_space<vmem>>, vector<64x1xf32>
    %14 = vector.broadcast %13 : vector<64x1xf32> to vector<64x128xf32>
    %15 = arith.addf %12, %14 : vector<64x128xf32>
    %cst_14 = arith.constant 0.000000e+00 : f32
    %16 = vector.broadcast %cst_14 : f32 to vector<64x128xf32>
    %17 = arith.maximumf %15, %16 : vector<64x128xf32>
    %c0_15 = arith.constant 0 : index
    %c0_16 = arith.constant 0 : index
    %c0_17 = arith.constant 0 : index
    %18 = vector.load %arg7[%c0_15, %c0_16, %c0_17] : memref<1x3x128xf32, #tpu.memory_space<vmem>>, vector<1x3x128xf32>
    %19 = vector.shape_cast %18 : vector<1x3x128xf32> to vector<3x128xf32>
    %c0_18 = arith.constant 0 : index
    %c0_19 = arith.constant 0 : index
    %c0_20 = arith.constant 0 : index
    %20 = vector.load %arg8[%c0_18, %c0_19, %c0_20] : memref<1x64x3xf32, #tpu.memory_space<vmem>>, vector<1x64x3xf32>
    %21 = vector.shape_cast %20 : vector<1x64x3xf32> to vector<64x3xf32>
    %cst_21 = arith.constant dense<0.000000e+00> : vector<64x128xf32>
    %22 = tpu.matmul %21, %19, %cst_21 {dimension_numbers = #tpu.dot_dimension_numbers<[1], [0], [0], [1], [0, 0, 1, 1], [], []>, precision = #tpu.contract_precision<fp32>} : vector<64x3xf32>, vector<3x128xf32>, vector<64x128xf32> -> vector<64x128xf32>
    %c0_22 = arith.constant 0 : index
    %c0_23 = arith.constant 0 : index
    %c0_24 = arith.constant 0 : index
    %23 = vector.load %arg9[%c0_22, %c0_23, %c0_24] : memref<1x64x1xf32, #tpu.memory_space<vmem>>, vector<1x64x1xf32>
    %24 = vector.shape_cast %23 : vector<1x64x1xf32> to vector<64x1xf32>
    %25 = vector.broadcast %24 : vector<64x1xf32> to vector<64x128xf32>
    %26 = arith.addf %22, %25 : vector<64x128xf32>
    %cst_25 = arith.constant 0.000000e+00 : f32
    %27 = vector.broadcast %cst_25 : f32 to vector<64x128xf32>
    %28 = arith.maximumf %26, %27 : vector<64x128xf32>
    %c0_26 = arith.constant 0 : index
    %c0_27 = arith.constant 0 : index
    %29 = vector.load %arg10[%c0_26, %c0_27] : memref<64x64xf32, #tpu.memory_space<vmem>>, vector<64x64xf32>
    %cst_28 = arith.constant dense<0.000000e+00> : vector<64x128xf32>
    %30 = tpu.matmul %29, %28, %cst_28 {dimension_numbers = #tpu.dot_dimension_numbers<[1], [0], [0], [1], [0, 0, 1, 1], [], []>, precision = #tpu.contract_precision<fp32>} : vector<64x64xf32>, vector<64x128xf32>, vector<64x128xf32> -> vector<64x128xf32>
    %c0_29 = arith.constant 0 : index
    %c0_30 = arith.constant 0 : index
    %31 = vector.load %arg11[%c0_29, %c0_30] : memref<64x1xf32, #tpu.memory_space<vmem>>, vector<64x1xf32>
    %32 = vector.broadcast %31 : vector<64x1xf32> to vector<64x128xf32>
    %33 = arith.addf %30, %32 : vector<64x128xf32>
    %cst_31 = arith.constant 0.000000e+00 : f32
    %34 = vector.broadcast %cst_31 : f32 to vector<64x128xf32>
    %35 = arith.maximumf %33, %34 : vector<64x128xf32>
    %36 = arith.addf %17, %35 : vector<64x128xf32>
    %c0_32 = arith.constant 0 : index
    %c0_33 = arith.constant 0 : index
    %c0_34 = arith.constant 0 : index
    %37 = vector.load %arg12[%c0_32, %c0_33, %c0_34] : memref<1x64x128xf32, #tpu.memory_space<vmem>>, vector<1x64x128xf32>
    %38 = vector.shape_cast %37 : vector<1x64x128xf32> to vector<64x128xf32>
    %39 = vector.shape_cast %36 : vector<64x128xf32> to vector<1x64x128xf32>
    tpu.vector_store %arg12[%c0_32, %c0_33, %c0_34], %39 {strides = array<i32>} : memref<1x64x128xf32, #tpu.memory_space<vmem>>, vector<1x64x128xf32>,
    return
  }
  func.func @transform_0(%arg0: i32, %arg1: i32) -> (i32, i32, i32) {
    %c0_i32 = arith.constant 0 : i32
    %c0_i32_0 = arith.constant 0 : i32
    return %arg0, %c0_i32, %arg1 : i32, i32, i32
  }
  func.func @transform_1(%arg0: i32, %arg1: i32) -> (i32, i32, i32) {
    %c0_i32 = arith.constant 0 : i32
    %c0_i32_0 = arith.constant 0 : i32
    %c0_i32_1 = arith.constant 0 : i32
    return %arg0, %c0_i32, %c0_i32_0 : i32, i32, i32
  }
  func.func @transform_2(%arg0: i32, %arg1: i32) -> (i32, i32, i32) {
    %c0_i32 = arith.constant 0 : i32
    %c0_i32_0 = arith.constant 0 : i32
    %c0_i32_1 = arith.constant 0 : i32
    return %arg0, %c0_i32, %c0_i32_0 : i32, i32, i32
  }
  func.func @transform_3(%arg0: i32, %arg1: i32) -> (i32, i32) {
    %c0_i32 = arith.constant 0 : i32
    %c0_i32_0 = arith.constant 0 : i32
    %c0_i32_1 = arith.constant 0 : i32
    return %c0_i32, %c0_i32_0 : i32, i32
  }
  func.func @transform_4(%arg0: i32, %arg1: i32) -> (i32, i32) {
    %c0_i32 = arith.constant 0 : i32
    %c0_i32_0 = arith.constant 0 : i32
    %c0_i32_1 = arith.constant 0 : i32
    return %c0_i32, %c0_i32_0 : i32, i32
  }
  func.func @transform_5(%arg0: i32, %arg1: i32) -> (i32, i32, i32) {
    %c0_i32 = arith.constant 0 : i32
    %c0_i32_0 = arith.constant 0 : i32
    return %arg0, %c0_i32, %arg1 : i32, i32, i32
  }
  func.func @transform_6(%arg0: i32, %arg1: i32) -> (i32, i32, i32) {
    %c0_i32 = arith.constant 0 : i32
    %c0_i32_0 = arith.constant 0 : i32
    %c0_i32_1 = arith.constant 0 : i32
    return %arg0, %c0_i32, %c0_i32_0 : i32, i32, i32
  }
  func.func @transform_7(%arg0: i32, %arg1: i32) -> (i32, i32, i32) {
    %c0_i32 = arith.constant 0 : i32
    %c0_i32_0 = arith.constant 0 : i32
    %c0_i32_1 = arith.constant 0 : i32
    return %arg0, %c0_i32, %c0_i32_0 : i32, i32, i32
  }
  func.func @transform_8(%arg0: i32, %arg1: i32) -> (i32, i32) {
    %c0_i32 = arith.constant 0 : i32
    %c0_i32_0 = arith.constant 0 : i32
    %c0_i32_1 = arith.constant 0 : i32
    return %c0_i32, %c0_i32_0 : i32, i32
  }
  func.func @transform_9(%arg0: i32, %arg1: i32) -> (i32, i32) {
    %c0_i32 = arith.constant 0 : i32
    %c0_i32_0 = arith.constant 0 : i32
    %c0_i32_1 = arith.constant 0 : i32
    return %c0_i32, %c0_i32_0 : i32, i32
  }
  func.func @transform_10(%arg0: i32, %arg1: i32) -> (i32, i32, i32) {
    %c0_i32 = arith.constant 0 : i32
    %c0_i32_0 = arith.constant 0 : i32
    return %arg0, %c0_i32, %arg1 : i32, i32, i32
  }
}

</mosaic_0001>

<llo_original>
// kernel: sub.2
$region0: #{sub.2}
  #allocation0 [shape = 's32[1]{0}', space=sflag, size = 0x4, scoped, tag = 'scoped memory for sub.2']
  %s0 = inlined_call_operand.vmem [shape: f32[25,3,2,16], index: 0, kind: input, shape index: {}]
  %s1 = inlined_call_operand.vmem [shape: f32[25,3,2,16], index: 1, kind: input, shape index: {}]
  %s2 = inlined_call_operand.vmem [shape: f32[25,3,2,16], index: 2, kind: output, shape index: {}]
  %v3 = vld [vmem:[%s0] sm:$0x3]
  %v4 = vld [vmem:[%s1] sm:$0x3]
  %5 = xla_tuple %v3, %v4
  %6 = xla_tuple %5
  %v7 = vsub.f32 %v3, %v4
  %8 = xla_tuple %v7
  %9 = vst [vmem:[%s2] sm:$0x3] %v7
  %s10 = scalar_lea.vmem %s0, 6
  %v11 = vld [vmem:[%s10] sm:$0x3]
  %s12 = scalar_lea.vmem %s1, 6
  %v13 = vld [vmem:[%s12] sm:$0x3]
  %14 = xla_tuple %v11, %v13
  %15 = xla_tuple %14
  %v16 = vsub.f32 %v11, %v13
  %17 = xla_tuple %v16
  %s18 = scalar_lea.vmem %s2, 6
  %19 = vst [vmem:[%s18] sm:$0x3] %v16
  %s20 = scalar_lea.vmem %s0, 12
  %v21 = vld [vmem:[%s20] sm:$0x3]
  %s22 = scalar_lea.vmem %s1, 12
  %v23 = vld [vmem:[%s22] sm:$0x3]
  %24 = xla_tuple %v21, %v23
  %25 = xla_tuple %24
  %v26 = vsub.f32 %v21, %v23
  %27 = xla_tuple %v26
  %s28 = scalar_lea.vmem %s2, 12
  %29 = vst [vmem:[%s28] sm:$0x3] %v26
  %s30 = scalar_lea.vmem %s0, 18
  %v31 = vld [vmem:[%s30] sm:$0x3]
  %s32 = scalar_lea.vmem %s1, 18
  %v33 = vld [vmem:[%s32] sm:$0x3]
  %34 = xla_tuple %v31, %v33
  %35 = xla_tuple %34
  %v36 = vsub.f32 %v31, %v33
  %37 = xla_tuple %v36
  %s38 = scalar_lea.vmem %s2, 18
  %39 = vst [vmem:[%s38] sm:$0x3] %v36
  %s40 = scalar_lea.vmem %s0, 24
  %v41 = vld [vmem:[%s40] sm:$0x3]
  %s42 = scalar_lea.vmem %s1, 24
  %v43 = vld [vmem:[%s42] sm:$0x3]
  %44 = xla_tuple %v41, %v43
  %45 = xla_tuple %44
  %v46 = vsub.f32 %v41, %v43
  %47 = xla_tuple %v46
  %s48 = scalar_lea.vmem %s2, 24
  %49 = vst [vmem:[%s48] sm:$0x3] %v46
  %s50 = scalar_lea.vmem %s0, 30
  %v51 = vld [vmem:[%s50] sm:$0x3]
  %s52 = scalar_lea.vmem %s1, 30
  %v53 = vld [vmem:[%s52] sm:$0x3]
  %54 = xla_tuple %v51, %v53
  %55 = xla_tuple %54
  %v56 = vsub.f32 %v51, %v53
  %57 = xla_tuple %v56
  %s58 = scalar_lea.vmem %s2, 30
  %59 = vst [vmem:[%s58] sm:$0x3] %v56
  %s60 = scalar_lea.vmem %s0, 36
  %v61 = vld [vmem:[%s60] sm:$0x3]
  %s62 = scalar_lea.vmem %s1, 36
  %v63 = vld [vmem:[%s62] sm:$0x3]
  %64 = xla_tuple %v61, %v63
  %65 = xla_tuple %64
  %v66 = vsub.f32 %v61, %v63
  %67 = xla_tuple %v66
  %s68 = scalar_lea.vmem %s2, 36
  %69 = vst [vmem:[%s68] sm:$0x3] %v66
  %s70 = scalar_lea.vmem %s0, 42
  %v71 = vld [vmem:[%s70] sm:$0x3]
  %s72 = scalar_lea.vmem %s1, 42
  %v73 = vld [vmem:[%s72] sm:$0x3]
  %74 = xla_tuple %v71, %v73
  %75 = xla_tuple %74
  %v76 = vsub.f32 %v71, %v73
  %77 = xla_tuple %v76
  %s78 = scalar_lea.vmem %s2, 42
  %79 = vst [vmem:[%s78] sm:$0x3] %v76
  %s80 = scalar_lea.vmem %s0, 48
  %v81 = vld [vmem:[%s80] sm:$0x3]
  %s82 = scalar_lea.vmem %s1, 48
  %v83 = vld [vmem:[%s82] sm:$0x3]
  %84 = xla_tuple %v81, %v83
  %85 = xla_tuple %84
  %v86 = vsub.f32 %v81, %v83
  %87 = xla_tuple %v86
  %s88 = scalar_lea.vmem %s2, 48
  %89 = vst [vmem:[%s88] sm:$0x3] %v86
  %s90 = scalar_lea.vmem %s0, 54
  %v91 = vld [vmem:[%s90] sm:$0x3]
  %s92 = scalar_lea.vmem %s1, 54
  %v93 = vld [vmem:[%s92] sm:$0x3]
  %94 = xla_tuple %v91, %v93
  %95 = xla_tuple %94
  %v96 = vsub.f32 %v91, %v93
  %97 = xla_tuple %v96
  %s98 = scalar_lea.vmem %s2, 54
  %99 = vst [vmem:[%s98] sm:$0x3] %v96
  %s100 = scalar_lea.vmem %s0, 60
  %v101 = vld [vmem:[%s100] sm:$0x3]
  %s102 = scalar_lea.vmem %s1, 60
  %v103 = vld [vmem:[%s102] sm:$0x3]
  %104 = xla_tuple %v101, %v103
  %105 = xla_tuple %104
  %v106 = vsub.f32 %v101, %v103
  %107 = xla_tuple %v106
  %s108 = scalar_lea.vmem %s2, 60
  %109 = vst [vmem:[%s108] sm:$0x3] %v106
  %s110 = scalar_lea.vmem %s0, 66
  %v111 = vld [vmem:[%s110] sm:$0x3]
  %s112 = scalar_lea.vmem %s1, 66
  %v113 = vld [vmem:[%s112] sm:$0x3]
  %114 = xla_tuple %v111, %v113
  %115 = xla_tuple %114
  %v116 = vsub.f32 %v111, %v113
  %117 = xla_tuple %v116
  %s118 = scalar_lea.vmem %s2, 66
  %119 = vst [vmem:[%s118] sm:$0x3] %v116
  %s120 = scalar_lea.vmem %s0, 72
  %v121 = vld [vmem:[%s120] sm:$0x3]
  %s122 = scalar_lea.vmem %s1, 72
  %v123 = vld [vmem:[%s122] sm:$0x3]
  %124 = xla_tuple %v121, %v123
  %125 = xla_tuple %124
  %v126 = vsub.f32 %v121, %v123
  %127 = xla_tuple %v126
  %s128 = scalar_lea.vmem %s2, 72
  %129 = vst [vmem:[%s128] sm:$0x3] %v126
  %s130 = scalar_lea.vmem %s0, 78
  %v131 = vld [vmem:[%s130] sm:$0x3]
  %s132 = scalar_lea.vmem %s1, 78
  %v133 = vld [vmem:[%s132] sm:$0x3]
  %134 = xla_tuple %v131, %v133
  %135 = xla_tuple %134
  %v136 = vsub.f32 %v131, %v133
  %137 = xla_tuple %v136
  %s138 = scalar_lea.vmem %s2, 78
  %139 = vst [vmem:[%s138] sm:$0x3] %v136
  %s140 = scalar_lea.vmem %s0, 84
  %v141 = vld [vmem:[%s140] sm:$0x3]
  %s142 = scalar_lea.vmem %s1, 84
  %v143 = vld [vmem:[%s142] sm:$0x3]
  %144 = xla_tuple %v141, %v143
  %145 = xla_tuple %144
  %v146 = vsub.f32 %v141, %v143
  %147 = xla_tuple %v146
  %s148 = scalar_lea.vmem %s2, 84
  %149 = vst [vmem:[%s148] sm:$0x3] %v146
  %s150 = scalar_lea.vmem %s0, 90
  %v151 = vld [vmem:[%s150] sm:$0x3]
  %s152 = scalar_lea.vmem %s1, 90
  %v153 = vld [vmem:[%s152] sm:$0x3]
  %154 = xla_tuple %v151, %v153
  %155 = xla_tuple %154
  %v156 = vsub.f32 %v151, %v153
  %157 = xla_tuple %v156
  %s158 = scalar_lea.vmem %s2, 90
  %159 = vst [vmem:[%s158] sm:$0x3] %v156
  %s160 = scalar_lea.vmem %s0, 96
  %v161 = vld [vmem:[%s160] sm:$0x3]
  %s162 = scalar_lea.vmem %s1, 96
  %v163 = vld [vmem:[%s162] sm:$0x3]
  %164 = xla_tuple %v161, %v163
  %165 = xla_tuple %164
  %v166 = vsub.f32 %v161, %v163
  %167 = xla_tuple %v166
  %s168 = scalar_lea.vmem %s2, 96
  %169 = vst [vmem:[%s168] sm:$0x3] %v166
  %s170 = scalar_lea.vmem %s0, 102
  %v171 = vld [vmem:[%s170] sm:$0x3]
  %s172 = scalar_lea.vmem %s1, 102
  %v173 = vld [vmem:[%s172] sm:$0x3]
  %174 = xla_tuple %v171, %v173
  %175 = xla_tuple %174
  %v176 = vsub.f32 %v171, %v173
  %177 = xla_tuple %v176
  %s178 = scalar_lea.vmem %s2, 102
  %179 = vst [vmem:[%s178] sm:$0x3] %v176
  %s180 = scalar_lea.vmem %s0, 108
  %v181 = vld [vmem:[%s180] sm:$0x3]
  %s182 = scalar_lea.vmem %s1, 108
  %v183 = vld [vmem:[%s182] sm:$0x3]
  %184 = xla_tuple %v181, %v183
  %185 = xla_tuple %184
  %v186 = vsub.f32 %v181, %v183
  %187 = xla_tuple %v186
  %s188 = scalar_lea.vmem %s2, 108
  %189 = vst [vmem:[%s188] sm:$0x3] %v186
  %s190 = scalar_lea.vmem %s0, 114
  %v191 = vld [vmem:[%s190] sm:$0x3]
  %s192 = scalar_lea.vmem %s1, 114
  %v193 = vld [vmem:[%s192] sm:$0x3]
  %194 = xla_tuple %v191, %v193
  %195 = xla_tuple %194
  %v196 = vsub.f32 %v191, %v193
  %197 = xla_tuple %v196
  %s198 = scalar_lea.vmem %s2, 114
  %199 = vst [vmem:[%s198] sm:$0x3] %v196
  %s200 = scalar_lea.vmem %s0, 120
  %v201 = vld [vmem:[%s200] sm:$0x3]
  %s202 = scalar_lea.vmem %s1, 120
  %v203 = vld [vmem:[%s202] sm:$0x3]
  %204 = xla_tuple %v201, %v203
  %205 = xla_tuple %204
  %v206 = vsub.f32 %v201, %v203
  %207 = xla_tuple %v206
  %s208 = scalar_lea.vmem %s2, 120
  %209 = vst [vmem:[%s208] sm:$0x3] %v206
  %s210 = scalar_lea.vmem %s0, 126
  %v211 = vld [vmem:[%s210] sm:$0x3]
  %s212 = scalar_lea.vmem %s1, 126
  %v213 = vld [vmem:[%s212] sm:$0x3]
  %214 = xla_tuple %v211, %v213
  %215 = xla_tuple %214
  %v216 = vsub.f32 %v211, %v213
  %217 = xla_tuple %v216
  %s218 = scalar_lea.vmem %s2, 126
  %219 = vst [vmem:[%s218] sm:$0x3] %v216
  %s220 = scalar_lea.vmem %s0, 132
  %v221 = vld [vmem:[%s220] sm:$0x3]
  %s222 = scalar_lea.vmem %s1, 132
  %v223 = vld [vmem:[%s222] sm:$0x3]
  %224 = xla_tuple %v221, %v223
  %225 = xla_tuple %224
  %v226 = vsub.f32 %v221, %v223
  %227 = xla_tuple %v226
  %s228 = scalar_lea.vmem %s2, 132
  %229 = vst [vmem:[%s228] sm:$0x3] %v226
  %s230 = scalar_lea.vmem %s0, 138
  %v231 = vld [vmem:[%s230] sm:$0x3]
  %s232 = scalar_lea.vmem %s1, 138
  %v233 = vld [vmem:[%s232] sm:$0x3]
  %234 = xla_tuple %v231, %v233
  %235 = xla_tuple %234
  %v236 = vsub.f32 %v231, %v233
  %237 = xla_tuple %v236
  %s238 = scalar_lea.vmem %s2, 138
  %239 = vst [vmem:[%s238] sm:$0x3] %v236
  %s240 = scalar_lea.vmem %s0, 144
  %v241 = vld [vmem:[%s240] sm:$0x3]
  %s242 = scalar_lea.vmem %s1, 144
  %v243 = vld [vmem:[%s242] sm:$0x3]
  %244 = xla_tuple %v241, %v243
  %245 = xla_tuple %244
  %v246 = vsub.f32 %v241, %v243
  %247 = xla_tuple %v246
  %s248 = scalar_lea.vmem %s2, 144
  %249 = vst [vmem:[%s248] sm:$0x3] %v246
  %s250 = scalar_lea.vmem %s0, 2
  %v251 = vld [vmem:[%s250] sm:$0x3]
  %s252 = scalar_lea.vmem %s1, 2
  %v253 = vld [vmem:[%s252] sm:$0x3]
  %254 = xla_tuple %v251, %v253
  %255 = xla_tuple %254
  %v256 = vsub.f32 %v251, %v253
  %257 = xla_tuple %v256
  %s258 = scalar_lea.vmem %s2, 2
  %259 = vst [vmem:[%s258] sm:$0x3] %v256
  %s260 = scalar_lea.vmem %s0, 8
  %v261 = vld [vmem:[%s260] sm:$0x3]
  %s262 = scalar_lea.vmem %s1, 8
  %v263 = vld [vmem:[%s262] sm:$0x3]
  %264 = xla_tuple %v261, %v263
  %265 = xla_tuple %264
  %v266 = vsub.f32 %v261, %v263
  %267 = xla_tuple %v266
  %s268 = scalar_lea.vmem %s2, 8
  %269 = vst [vmem:[%s268] sm:$0x3] %v266
  %s270 = scalar_lea.vmem %s0, 14
  %v271 = vld [vmem:[%s270] sm:$0x3]
  %s272 = scalar_lea.vmem %s1, 14
  %v273 = vld [vmem:[%s272] sm:$0x3]
  %274 = xla_tuple %v271, %v273
  %275 = xla_tuple %274
  %v276 = vsub.f32 %v271, %v273
  %277 = xla_tuple %v276
  %s278 = scalar_lea.vmem %s2, 14
  %279 = vst [vmem:[%s278] sm:$0x3] %v276
  %s280 = scalar_lea.vmem %s0, 20
  %v281 = vld [vmem:[%s280] sm:$0x3]
  %s282 = scalar_lea.vmem %s1, 20
  %v283 = vld [vmem:[%s282] sm:$0x3]
  %284 = xla_tuple %v281, %v283
  %285 = xla_tuple %284
  %v286 = vsub.f32 %v281, %v283
  %287 = xla_tuple %v286
  %s288 = scalar_lea.vmem %s2, 20
  %289 = vst [vmem:[%s288] sm:$0x3] %v286
  %s290 = scalar_lea.vmem %s0, 26
  %v291 = vld [vmem:[%s290] sm:$0x3]
  %s292 = scalar_lea.vmem %s1, 26
  %v293 = vld [vmem:[%s292] sm:$0x3]
  %294 = xla_tuple %v291, %v293
  %295 = xla_tuple %294
  %v296 = vsub.f32 %v291, %v293
  %297 = xla_tuple %v296
  %s298 = scalar_lea.vmem %s2, 26
  %299 = vst [vmem:[%s298] sm:$0x3] %v296
  %s300 = scalar_lea.vmem %s0, 32
  %v301 = vld [vmem:[%s300] sm:$0x3]
  %s302 = scalar_lea.vmem %s1, 32
  %v303 = vld [vmem:[%s302] sm:$0x3]
  %304 = xla_tuple %v301, %v303
  %305 = xla_tuple %304
  %v306 = vsub.f32 %v301, %v303
  %307 = xla_tuple %v306
  %s308 = scalar_lea.vmem %s2, 32
  %309 = vst [vmem:[%s308] sm:$0x3] %v306
  %s310 = scalar_lea.vmem %s0, 38
  %v311 = vld [vmem:[%s310] sm:$0x3]
  %s312 = scalar_lea.vmem %s1, 38
  %v313 = vld [vmem:[%s312] sm:$0x3]
  %314 = xla_tuple %v311, %v313
  %315 = xla_tuple %314
  %v316 = vsub.f32 %v311, %v313
  %317 = xla_tuple %v316
  %s318 = scalar_lea.vmem %s2, 38
  %319 = vst [vmem:[%s318] sm:$0x3] %v316
  %s320 = scalar_lea.vmem %s0, 44
  %v321 = vld [vmem:[%s320] sm:$0x3]
  %s322 = scalar_lea.vmem %s1, 44
  %v323 = vld [vmem:[%s322] sm:$0x3]
  %324 = xla_tuple %v321, %v323
  %325 = xla_tuple %324
  %v326 = vsub.f32 %v321, %v323
  %327 = xla_tuple %v326
  %s328 = scalar_lea.vmem %s2, 44
  %329 = vst [vmem:[%s328] sm:$0x3] %v326
  %s330 = scalar_lea.vmem %s0, 50
  %v331 = vld [vmem:[%s330] sm:$0x3]
  %s332 = scalar_lea.vmem %s1, 50
  %v333 = vld [vmem:[%s332] sm:$0x3]
  %334 = xla_tuple %v331, %v333
  %335 = xla_tuple %334
  %v336 = vsub.f32 %v331, %v333
  %337 = xla_tuple %v336
  %s338 = scalar_lea.vmem %s2, 50
  %339 = vst [vmem:[%s338] sm:$0x3] %v336
  %s340 = scalar_lea.vmem %s0, 56
  %v341 = vld [vmem:[%s340] sm:$0x3]
  %s342 = scalar_lea.vmem %s1, 56
  %v343 = vld [vmem:[%s342] sm:$0x3]
  %344 = xla_tuple %v341, %v343
  %345 = xla_tuple %344
  %v346 = vsub.f32 %v341, %v343
  %347 = xla_tuple %v346
  %s348 = scalar_lea.vmem %s2, 56
  %349 = vst [vmem:[%s348] sm:$0x3] %v346
  %s350 = scalar_lea.vmem %s0, 62
  %v351 = vld [vmem:[%s350] sm:$0x3]
  %s352 = scalar_lea.vmem %s1, 62
  %v353 = vld [vmem:[%s352] sm:$0x3]
  %354 = xla_tuple %v351, %v353
  %355 = xla_tuple %354
  %v356 = vsub.f32 %v351, %v353
  %357 = xla_tuple %v356
  %s358 = scalar_lea.vmem %s2, 62
  %359 = vst [vmem:[%s358] sm:$0x3] %v356
  %s360 = scalar_lea.vmem %s0, 68
  %v361 = vld [vmem:[%s360] sm:$0x3]
  %s362 = scalar_lea.vmem %s1, 68
  %v363 = vld [vmem:[%s362] sm:$0x3]
  %364 = xla_tuple %v361, %v363
  %365 = xla_tuple %364
  %v366 = vsub.f32 %v361, %v363
  %367 = xla_tuple %v366
  %s368 = scalar_lea.vmem %s2, 68
  %369 = vst [vmem:[%s368] sm:$0x3] %v366
  %s370 = scalar_lea.vmem %s0, 74
  %v371 = vld [vmem:[%s370] sm:$0x3]
  %s372 = scalar_lea.vmem %s1, 74
  %v373 = vld [vmem:[%s372] sm:$0x3]
  %374 = xla_tuple %v371, %v373
  %375 = xla_tuple %374
  %v376 = vsub.f32 %v371, %v373
  %377 = xla_tuple %v376
  %s378 = scalar_lea.vmem %s2, 74
  %379 = vst [vmem:[%s378] sm:$0x3] %v376
  %s380 = scalar_lea.vmem %s0, 80
  %v381 = vld [vmem:[%s380] sm:$0x3]
  %s382 = scalar_lea.vmem %s1, 80
  %v383 = vld [vmem:[%s382] sm:$0x3]
  %384 = xla_tuple %v381, %v383
  %385 = xla_tuple %384
  %v386 = vsub.f32 %v381, %v383
  %387 = xla_tuple %v386
  %s388 = scalar_lea.vmem %s2, 80
  %389 = vst [vmem:[%s388] sm:$0x3] %v386
  %s390 = scalar_lea.vmem %s0, 86
  %v391 = vld [vmem:[%s390] sm:$0x3]
  %s392 = scalar_lea.vmem %s1, 86
  %v393 = vld [vmem:[%s392] sm:$0x3]
  %394 = xla_tuple %v391, %v393
  %395 = xla_tuple %394
  %v396 = vsub.f32 %v391, %v393
  %397 = xla_tuple %v396
  %s398 = scalar_lea.vmem %s2, 86
  %399 = vst [vmem:[%s398] sm:$0x3] %v396
  %s400 = scalar_lea.vmem %s0, 92
  %v401 = vld [vmem:[%s400] sm:$0x3]
  %s402 = scalar_lea.vmem %s1, 92
  %v403 = vld [vmem:[%s402] sm:$0x3]
  %404 = xla_tuple %v401, %v403
  %405 = xla_tuple %404
  %v406 = vsub.f32 %v401, %v403
  %407 = xla_tuple %v406
  %s408 = scalar_lea.vmem %s2, 92
  %409 = vst [vmem:[%s408] sm:$0x3] %v406
  %s410 = scalar_lea.vmem %s0, 98
  %v411 = vld [vmem:[%s410] sm:$0x3]
  %s412 = scalar_lea.vmem %s1, 98
  %v413 = vld [vmem:[%s412] sm:$0x3]
  %414 = xla_tuple %v411, %v413
  %415 = xla_tuple %414
  %v416 = vsub.f32 %v411, %v413
  %417 = xla_tuple %v416
  %s418 = scalar_lea.vmem %s2, 98
  %419 = vst [vmem:[%s418] sm:$0x3] %v416
  %s420 = scalar_lea.vmem %s0, 104
  %v421 = vld [vmem:[%s420] sm:$0x3]
  %s422 = scalar_lea.vmem %s1, 104
  %v423 = vld [vmem:[%s422] sm:$0x3]
  %424 = xla_tuple %v421, %v423
  %425 = xla_tuple %424
  %v426 = vsub.f32 %v421, %v423
  %427 = xla_tuple %v426
  %s428 = scalar_lea.vmem %s2, 104
  %429 = vst [vmem:[%s428] sm:$0x3] %v426
  %s430 = scalar_lea.vmem %s0, 110
  %v431 = vld [vmem:[%s430] sm:$0x3]
  %s432 = scalar_lea.vmem %s1, 110
  %v433 = vld [vmem:[%s432] sm:$0x3]
  %434 = xla_tuple %v431, %v433
  %435 = xla_tuple %434
  %v436 = vsub.f32 %v431, %v433
  %437 = xla_tuple %v436
  %s438 = scalar_lea.vmem %s2, 110
  %439 = vst [vmem:[%s438] sm:$0x3] %v436
  %s440 = scalar_lea.vmem %s0, 116
  %v441 = vld [vmem:[%s440] sm:$0x3]
  %s442 = scalar_lea.vmem %s1, 116
  %v443 = vld [vmem:[%s442] sm:$0x3]
  %444 = xla_tuple %v441, %v443
  %445 = xla_tuple %444
  %v446 = vsub.f32 %v441, %v443
  %447 = xla_tuple %v446
  %s448 = scalar_lea.vmem %s2, 116
  %449 = vst [vmem:[%s448] sm:$0x3] %v446
  %s450 = scalar_lea.vmem %s0, 122
  %v451 = vld [vmem:[%s450] sm:$0x3]
  %s452 = scalar_lea.vmem %s1, 122
  %v453 = vld [vmem:[%s452] sm:$0x3]
  %454 = xla_tuple %v451, %v453
  %455 = xla_tuple %454
  %v456 = vsub.f32 %v451, %v453
  %457 = xla_tuple %v456
  %s458 = scalar_lea.vmem %s2, 122
  %459 = vst [vmem:[%s458] sm:$0x3] %v456
  %s460 = scalar_lea.vmem %s0, 128
  %v461 = vld [vmem:[%s460] sm:$0x3]
  %s462 = scalar_lea.vmem %s1, 128
  %v463 = vld [vmem:[%s462] sm:$0x3]
  %464 = xla_tuple %v461, %v463
  %465 = xla_tuple %464
  %v466 = vsub.f32 %v461, %v463
  %467 = xla_tuple %v466
  %s468 = scalar_lea.vmem %s2, 128
  %469 = vst [vmem:[%s468] sm:$0x3] %v466
  %s470 = scalar_lea.vmem %s0, 134
  %v471 = vld [vmem:[%s470] sm:$0x3]
  %s472 = scalar_lea.vmem %s1, 134
  %v473 = vld [vmem:[%s472] sm:$0x3]
  %474 = xla_tuple %v471, %v473
  %475 = xla_tuple %474
  %v476 = vsub.f32 %v471, %v473
  %477 = xla_tuple %v476
  %s478 = scalar_lea.vmem %s2, 134
  %479 = vst [vmem:[%s478] sm:$0x3] %v476
  %s480 = scalar_lea.vmem %s0, 140
  %v481 = vld [vmem:[%s480] sm:$0x3]
  %s482 = scalar_lea.vmem %s1, 140
  %v483 = vld [vmem:[%s482] sm:$0x3]
  %484 = xla_tuple %v481, %v483
  %485 = xla_tuple %484
  %v486 = vsub.f32 %v481, %v483
  %487 = xla_tuple %v486
  %s488 = scalar_lea.vmem %s2, 140
  %489 = vst [vmem:[%s488] sm:$0x3] %v486
  %s490 = scalar_lea.vmem %s0, 146
  %v491 = vld [vmem:[%s490] sm:$0x3]
  %s492 = scalar_lea.vmem %s1, 146
  %v493 = vld [vmem:[%s492] sm:$0x3]
  %494 = xla_tuple %v491, %v493
  %495 = xla_tuple %494
  %v496 = vsub.f32 %v491, %v493
  %497 = xla_tuple %v496
  %s498 = scalar_lea.vmem %s2, 146
  %499 = vst [vmem:[%s498] sm:$0x3] %v496
  %s500 = scalar_lea.vmem %s0, 4
  %v501 = vld [vmem:[%s500] sm:$0x3]
  %s502 = scalar_lea.vmem %s1, 4
  %v503 = vld [vmem:[%s502] sm:$0x3]
  %504 = xla_tuple %v501, %v503
  %505 = xla_tuple %504
  %v506 = vsub.f32 %v501, %v503
  %507 = xla_tuple %v506
  %s508 = scalar_lea.vmem %s2, 4
  %509 = vst [vmem:[%s508] sm:$0x3] %v506
  %s510 = scalar_lea.vmem %s0, 10
  %v511 = vld [vmem:[%s510] sm:$0x3]
  %s512 = scalar_lea.vmem %s1, 10
  %v513 = vld [vmem:[%s512] sm:$0x3]
  %514 = xla_tuple %v511, %v513
  %515 = xla_tuple %514
  %v516 = vsub.f32 %v511, %v513
  %517 = xla_tuple %v516
  %s518 = scalar_lea.vmem %s2, 10
  %519 = vst [vmem:[%s518] sm:$0x3] %v516
  %s520 = scalar_lea.vmem %s0, 16
  %v521 = vld [vmem:[%s520] sm:$0x3]
  %s522 = scalar_lea.vmem %s1, 16
  %v523 = vld [vmem:[%s522] sm:$0x3]
  %524 = xla_tuple %v521, %v523
  %525 = xla_tuple %524
  %v526 = vsub.f32 %v521, %v523
  %527 = xla_tuple %v526
  %s528 = scalar_lea.vmem %s2, 16
  %529 = vst [vmem:[%s528] sm:$0x3] %v526
  %s530 = scalar_lea.vmem %s0, 22
  %v531 = vld [vmem:[%s530] sm:$0x3]
  %s532 = scalar_lea.vmem %s1, 22
  %v533 = vld [vmem:[%s532] sm:$0x3]
  %534 = xla_tuple %v531, %v533
  %535 = xla_tuple %534
  %v536 = vsub.f32 %v531, %v533
  %537 = xla_tuple %v536
  %s538 = scalar_lea.vmem %s2, 22
  %539 = vst [vmem:[%s538] sm:$0x3] %v536
  %s540 = scalar_lea.vmem %s0, 28
  %v541 = vld [vmem:[%s540] sm:$0x3]
  %s542 = scalar_lea.vmem %s1, 28
  %v543 = vld [vmem:[%s542] sm:$0x3]
  %544 = xla_tuple %v541, %v543
  %545 = xla_tuple %544
  %v546 = vsub.f32 %v541, %v543
  %547 = xla_tuple %v546
  %s548 = scalar_lea.vmem %s2, 28
  %549 = vst [vmem:[%s548] sm:$0x3] %v546
  %s550 = scalar_lea.vmem %s0, 34
  %v551 = vld [vmem:[%s550] sm:$0x3]
  %s552 = scalar_lea.vmem %s1, 34
  %v553 = vld [vmem:[%s552] sm:$0x3]
  %554 = xla_tuple %v551, %v553
  %555 = xla_tuple %554
  %v556 = vsub.f32 %v551, %v553
  %557 = xla_tuple %v556
  %s558 = scalar_lea.vmem %s2, 34
  %559 = vst [vmem:[%s558] sm:$0x3] %v556
  %s560 = scalar_lea.vmem %s0, 40
  %v561 = vld [vmem:[%s560] sm:$0x3]
  %s562 = scalar_lea.vmem %s1, 40
  %v563 = vld [vmem:[%s562] sm:$0x3]
  %564 = xla_tuple %v561, %v563
  %565 = xla_tuple %564
  %v566 = vsub.f32 %v561, %v563
  %567 = xla_tuple %v566
  %s568 = scalar_lea.vmem %s2, 40
  %569 = vst [vmem:[%s568] sm:$0x3] %v566
  %s570 = scalar_lea.vmem %s0, 46
  %v571 = vld [vmem:[%s570] sm:$0x3]
  %s572 = scalar_lea.vmem %s1, 46
  %v573 = vld [vmem:[%s572] sm:$0x3]
  %574 = xla_tuple %v571, %v573
  %575 = xla_tuple %574
  %v576 = vsub.f32 %v571, %v573
  %577 = xla_tuple %v576
  %s578 = scalar_lea.vmem %s2, 46
  %579 = vst [vmem:[%s578] sm:$0x3] %v576
  %s580 = scalar_lea.vmem %s0, 52
  %v581 = vld [vmem:[%s580] sm:$0x3]
  %s582 = scalar_lea.vmem %s1, 52
  %v583 = vld [vmem:[%s582] sm:$0x3]
  %584 = xla_tuple %v581, %v583
  %585 = xla_tuple %584
  %v586 = vsub.f32 %v581, %v583
  %587 = xla_tuple %v586
  %s588 = scalar_lea.vmem %s2, 52
  %589 = vst [vmem:[%s588] sm:$0x3] %v586
  %s590 = scalar_lea.vmem %s0, 58
  %v591 = vld [vmem:[%s590] sm:$0x3]
  %s592 = scalar_lea.vmem %s1, 58
  %v593 = vld [vmem:[%s592] sm:$0x3]
  %594 = xla_tuple %v591, %v593
  %595 = xla_tuple %594
  %v596 = vsub.f32 %v591, %v593
  %597 = xla_tuple %v596
  %s598 = scalar_lea.vmem %s2, 58
  %599 = vst [vmem:[%s598] sm:$0x3] %v596
  %s600 = scalar_lea.vmem %s0, 64
  %v601 = vld [vmem:[%s600] sm:$0x3]
  %s602 = scalar_lea.vmem %s1, 64
  %v603 = vld [vmem:[%s602] sm:$0x3]
  %604 = xla_tuple %v601, %v603
  %605 = xla_tuple %604
  %v606 = vsub.f32 %v601, %v603
  %607 = xla_tuple %v606
  %s608 = scalar_lea.vmem %s2, 64
  %609 = vst [vmem:[%s608] sm:$0x3] %v606
  %s610 = scalar_lea.vmem %s0, 70
  %v611 = vld [vmem:[%s610] sm:$0x3]
  %s612 = scalar_lea.vmem %s1, 70
  %v613 = vld [vmem:[%s612] sm:$0x3]
  %614 = xla_tuple %v611, %v613
  %615 = xla_tuple %614
  %v616 = vsub.f32 %v611, %v613
  %617 = xla_tuple %v616
  %s618 = scalar_lea.vmem %s2, 70
  %619 = vst [vmem:[%s618] sm:$0x3] %v616
  %s620 = scalar_lea.vmem %s0, 76
  %v621 = vld [vmem:[%s620] sm:$0x3]
  %s622 = scalar_lea.vmem %s1, 76
  %v623 = vld [vmem:[%s622] sm:$0x3]
  %624 = xla_tuple %v621, %v623
  %625 = xla_tuple %624
  %v626 = vsub.f32 %v621, %v623
  %627 = xla_tuple %v626
  %s628 = scalar_lea.vmem %s2, 76
  %629 = vst [vmem:[%s628] sm:$0x3] %v626
  %s630 = scalar_lea.vmem %s0, 82
  %v631 = vld [vmem:[%s630] sm:$0x3]
  %s632 = scalar_lea.vmem %s1, 82
  %v633 = vld [vmem:[%s632] sm:$0x3]
  %634 = xla_tuple %v631, %v633
  %635 = xla_tuple %634
  %v636 = vsub.f32 %v631, %v633
  %637 = xla_tuple %v636
  %s638 = scalar_lea.vmem %s2, 82
  %639 = vst [vmem:[%s638] sm:$0x3] %v636
  %s640 = scalar_lea.vmem %s0, 88
  %v641 = vld [vmem:[%s640] sm:$0x3]
  %s642 = scalar_lea.vmem %s1, 88
  %v643 = vld [vmem:[%s642] sm:$0x3]
  %644 = xla_tuple %v641, %v643
  %645 = xla_tuple %644
  %v646 = vsub.f32 %v641, %v643
  %647 = xla_tuple %v646
  %s648 = scalar_lea.vmem %s2, 88
  %649 = vst [vmem:[%s648] sm:$0x3] %v646
  %s650 = scalar_lea.vmem %s0, 94
  %v651 = vld [vmem:[%s650] sm:$0x3]
  %s652 = scalar_lea.vmem %s1, 94
  %v653 = vld [vmem:[%s652] sm:$0x3]
  %654 = xla_tuple %v651, %v653
  %655 = xla_tuple %654
  %v656 = vsub.f32 %v651, %v653
  %657 = xla_tuple %v656
  %s658 = scalar_lea.vmem %s2, 94
  %659 = vst [vmem:[%s658] sm:$0x3] %v656
  %s660 = scalar_lea.vmem %s0, 100
  %v661 = vld [vmem:[%s660] sm:$0x3]
  %s662 = scalar_lea.vmem %s1, 100
  %v663 = vld [vmem:[%s662] sm:$0x3]
  %664 = xla_tuple %v661, %v663
  %665 = xla_tuple %664
  %v666 = vsub.f32 %v661, %v663
  %667 = xla_tuple %v666
  %s668 = scalar_lea.vmem %s2, 100
  %669 = vst [vmem:[%s668] sm:$0x3] %v666
  %s670 = scalar_lea.vmem %s0, 106
  %v671 = vld [vmem:[%s670] sm:$0x3]
  %s672 = scalar_lea.vmem %s1, 106
  %v673 = vld [vmem:[%s672] sm:$0x3]
  %674 = xla_tuple %v671, %v673
  %675 = xla_tuple %674
  %v676 = vsub.f32 %v671, %v673
  %677 = xla_tuple %v676
  %s678 = scalar_lea.vmem %s2, 106
  %679 = vst [vmem:[%s678] sm:$0x3] %v676
  %s680 = scalar_lea.vmem %s0, 112
  %v681 = vld [vmem:[%s680] sm:$0x3]
  %s682 = scalar_lea.vmem %s1, 112
  %v683 = vld [vmem:[%s682] sm:$0x3]
  %684 = xla_tuple %v681, %v683
  %685 = xla_tuple %684
  %v686 = vsub.f32 %v681, %v683
  %687 = xla_tuple %v686
  %s688 = scalar_lea.vmem %s2, 112
  %689 = vst [vmem:[%s688] sm:$0x3] %v686
  %s690 = scalar_lea.vmem %s0, 118
  %v691 = vld [vmem:[%s690] sm:$0x3]
  %s692 = scalar_lea.vmem %s1, 118
  %v693 = vld [vmem:[%s692] sm:$0x3]
  %694 = xla_tuple %v691, %v693
  %695 = xla_tuple %694
  %v696 = vsub.f32 %v691, %v693
  %697 = xla_tuple %v696
  %s698 = scalar_lea.vmem %s2, 118
  %699 = vst [vmem:[%s698] sm:$0x3] %v696
  %s700 = scalar_lea.vmem %s0, 124
  %v701 = vld [vmem:[%s700] sm:$0x3]
  %s702 = scalar_lea.vmem %s1, 124
  %v703 = vld [vmem:[%s702] sm:$0x3]
  %704 = xla_tuple %v701, %v703
  %705 = xla_tuple %704
  %v706 = vsub.f32 %v701, %v703
  %707 = xla_tuple %v706
  %s708 = scalar_lea.vmem %s2, 124
  %709 = vst [vmem:[%s708] sm:$0x3] %v706
  %s710 = scalar_lea.vmem %s0, 130
  %v711 = vld [vmem:[%s710] sm:$0x3]
  %s712 = scalar_lea.vmem %s1, 130
  %v713 = vld [vmem:[%s712] sm:$0x3]
  %714 = xla_tuple %v711, %v713
  %715 = xla_tuple %714
  %v716 = vsub.f32 %v711, %v713
  %717 = xla_tuple %v716
  %s718 = scalar_lea.vmem %s2, 130
  %719 = vst [vmem:[%s718] sm:$0x3] %v716
  %s720 = scalar_lea.vmem %s0, 136
  %v721 = vld [vmem:[%s720] sm:$0x3]
  %s722 = scalar_lea.vmem %s1, 136
  %v723 = vld [vmem:[%s722] sm:$0x3]
  %724 = xla_tuple %v721, %v723
  %725 = xla_tuple %724
  %v726 = vsub.f32 %v721, %v723
  %727 = xla_tuple %v726
  %s728 = scalar_lea.vmem %s2, 136
  %729 = vst [vmem:[%s728] sm:$0x3] %v726
  %s730 = scalar_lea.vmem %s0, 142
  %v731 = vld [vmem:[%s730] sm:$0x3]
  %s732 = scalar_lea.vmem %s1, 142
  %v733 = vld [vmem:[%s732] sm:$0x3]
  %734 = xla_tuple %v731, %v733
  %735 = xla_tuple %734
  %v736 = vsub.f32 %v731, %v733
  %737 = xla_tuple %v736
  %s738 = scalar_lea.vmem %s2, 142
  %739 = vst [vmem:[%s738] sm:$0x3] %v736
  %s740 = scalar_lea.vmem %s0, 148
  %v741 = vld [vmem:[%s740] sm:$0x3]
  %s742 = scalar_lea.vmem %s1, 148
  %v743 = vld [vmem:[%s742] sm:$0x3]
  %744 = xla_tuple %v741, %v743
  %745 = xla_tuple %744
  %v746 = vsub.f32 %v741, %v743
  %747 = xla_tuple %v746
  %s748 = scalar_lea.vmem %s2, 148
  %749 = vst [vmem:[%s748] sm:$0x3] %v746

// kernel: block_bone_input_forward.3
$region0: #{block_bone_input_forward.3}
  #allocation0 [shape = 'u32[]', space=smem, size = 0x4, offset = 0x4, fixed_abs, tag = 'smem constant byte address 0x4 - core index']
  #allocation1 [shape = 'u32[72,128]{1,0:T(1,128)}', space=vmem, size = 0x9000, scoped, tag = 'internal scratch']
  %s0 = inlined_call_operand.vmem [shape: f32[25,3,128], index: 0, kind: input, shape index: {}]
  %s1 = inlined_call_operand.vmem [shape: f32[25,3,1], index: 1, kind: input, shape index: {}]
  %s2 = inlined_call_operand.vmem [shape: f32[25,3,1], index: 2, kind: input, shape index: {}]
  %s3 = inlined_call_operand.vmem [shape: f32[25,3,1], index: 3, kind: output, shape index: {0}]
  %s4 = inlined_call_operand.vmem [shape: f32[25,3,1], index: 4, kind: output, shape index: {1}]
  %5 = xla_tuple %s3, %s4
  %s6 = sld [smem:[#allocation0]]
  $region61: #{block_bone_input_forward.3} parent=0
    _
  %s8 = ssub.s32 1, %s6
  %s9 = scalar_select 0, %s8, %s6
  loop: start=0, step=1, limit=7
  $region2: #{block_bone_input_forward.3} parent=0 // loop_pre_header
    _
  $region3: #{block_bone_input_forward.3} parent=0 // loop_header
    %s11 = sphi 0, %s15
    %p12 = scmp.ge.s32.totalorder %s11, 7
    %s18 = sphi 0, %s30
    %s19 = sphi 0, %s26
    %s20 = sphi 0, %s18
    %s21 = sphi 0, %s19
    %s22 = sphi 0, %s20
    %s23 = sphi 0, %s21
    %s35 = sphi 0, %s37
    %s38 = sphi 0, %s35
    %s39 = sphi 0, %s38
    %s55 = sphi 0, %s39
    %s61 = sphi 0, %s63
    %s64 = sphi 0, %s61
    %s65 = sphi 0, %s64
    %s81 = sphi 0, %s65
    %s87 = sphi 0, %s89
    %s90 = sphi 0, %s87
    %s91 = sphi 0, %s90
    %s107 = sphi 0, %s91
    %s113 = sphi 0, %s115
    %s116 = sphi 0, %s113
    %s117 = sphi 0, %s116
    %s133 = sphi 0, %s117
    %s139 = sphi 0, %s141
    %s142 = sphi 0, %s139
    %s143 = sphi 0, %s142
    %s159 = sphi 0, %s143
  $region4: #{block_bone_input_forward.3} parent=0 // loop_header_branch
    %14 = sbr.rel (%p12) target = $region8
  $region5: #{block_bone_input_forward.3} parent=0 // loop_body
    %s16 = ssub.s32 %s11, 1
    %s17 = ssub.s32 %s11, 2
    %s24 = sadd.s32 1, %s19
    %p25 = scmp.ge.s32.totalorder %s24, 1
    %s26 = scalar_select %p25, 0, %s24
    %s27 = sadd.s32 1, %s18
    %s28 = scalar_select %p25, %s27, %s18
    %p29 = scmp.ge.s32.totalorder %s28, 5
    %s30 = scalar_select %p29, 0, %s28
    %s31 = ssub.s32 %s18, %s30
    %s32 = ssub.s32 %s19, %s26
    %s33 = sor.u32 %s31, %s32
    %p34 = scmp.eq.s32.totalorder %s33, 0
    %s36 = sadd.s32 %s35, 1
    %s37 = scalar_select %p34, %s35, %s36
    %p40 = pneg %p34
    %p41 = scmp.eq.s32.totalorder %s11, 4
    %p42 = por %p40, %p41
    %p43 = scmp.ne.s32.totalorder %s35, %s38
    %p44 = scmp.eq.s32.totalorder %s11, 0
    %p45 = por %p43, %p44
    %p46 = scmp.ne.s32.totalorder %s35, %s38
    %p47 = scmp.eq.s32.totalorder %s16, 4
    %p48 = por %p46, %p47
    %p49 = scmp.ne.s32.totalorder %s38, %s39
    %p50 = scmp.eq.s32.totalorder %s16, 0
    %p51 = por %p49, %p50
    %p52 = scmp.ne.s32.totalorder %s38, %s39
    %p53 = scmp.eq.s32.totalorder %s17, 4
    %p54 = por %p52, %p53
    %p56 = scmp.ne.s32.totalorder %s39, %s55
    %p57 = scmp.eq.s32.totalorder %s17, 0
    %p58 = por %p56, %p57
    %s59 = ssub.s32 %s18, %s30
    %p60 = scmp.eq.s32.totalorder %s59, 0
    %s62 = sadd.s32 %s61, 1
    %s63 = scalar_select %p60, %s61, %s62
    %p66 = pneg %p60
    %p67 = scmp.eq.s32.totalorder %s11, 4
    %p68 = por %p66, %p67
    %p69 = scmp.ne.s32.totalorder %s61, %s64
    %p70 = scmp.eq.s32.totalorder %s11, 0
    %p71 = por %p69, %p70
    %p72 = scmp.ne.s32.totalorder %s61, %s64
    %p73 = scmp.eq.s32.totalorder %s16, 4
    %p74 = por %p72, %p73
    %p75 = scmp.ne.s32.totalorder %s64, %s65
    %p76 = scmp.eq.s32.totalorder %s16, 0
    %p77 = por %p75, %p76
    %p78 = scmp.ne.s32.totalorder %s64, %s65
    %p79 = scmp.eq.s32.totalorder %s17, 4
    %p80 = por %p78, %p79
    %p82 = scmp.ne.s32.totalorder %s65, %s81
    %p83 = scmp.eq.s32.totalorder %s17, 0
    %p84 = por %p82, %p83
    %s85 = ssub.s32 %s18, %s30
    %p86 = scmp.eq.s32.totalorder %s85, 0
    %s88 = sadd.s32 %s87, 1
    %s89 = scalar_select %p86, %s87, %s88
    %p92 = pneg %p86
    %p93 = scmp.eq.s32.totalorder %s11, 4
    %p94 = por %p92, %p93
    %p95 = scmp.ne.s32.totalorder %s87, %s90
    %p96 = scmp.eq.s32.totalorder %s11, 0
    %p97 = por %p95, %p96
    %p98 = scmp.ne.s32.totalorder %s87, %s90
    %p99 = scmp.eq.s32.totalorder %s16, 4
    %p100 = por %p98, %p99
    %p101 = scmp.ne.s32.totalorder %s90, %s91
    %p102 = scmp.eq.s32.totalorder %s16, 0
    %p103 = por %p101, %p102
    %p104 = scmp.ne.s32.totalorder %s90, %s91
    %p105 = scmp.eq.s32.totalorder %s17, 4
    %p106 = por %p104, %p105
    %p108 = scmp.ne.s32.totalorder %s91, %s107
    %p109 = scmp.eq.s32.totalorder %s17, 0
    %p110 = por %p108, %p109
    %s111 = ssub.s32 %s18, %s30
    %p112 = scmp.eq.s32.totalorder %s111, 0
    %s114 = sadd.s32 %s113, 1
    %s115 = scalar_select %p112, %s113, %s114
    %p118 = pneg %p112
    %p119 = scmp.eq.s32.totalorder %s11, 4
    %p120 = por %p118, %p119
    %p121 = scmp.ne.s32.totalorder %s113, %s116
    %p122 = scmp.eq.s32.totalorder %s11, 0
    %p123 = por %p121, %p122
    %p124 = scmp.ne.s32.totalorder %s113, %s116
    %p125 = scmp.eq.s32.totalorder %s16, 4
    %p126 = por %p124, %p125
    %p127 = scmp.ne.s32.totalorder %s116, %s117
    %p128 = scmp.eq.s32.totalorder %s16, 0
    %p129 = por %p127, %p128
    %p130 = scmp.ne.s32.totalorder %s116, %s117
    %p131 = scmp.eq.s32.totalorder %s17, 4
    %p132 = por %p130, %p131
    %p134 = scmp.ne.s32.totalorder %s117, %s133
    %p135 = scmp.eq.s32.totalorder %s17, 0
    %p136 = por %p134, %p135
    %s137 = ssub.s32 %s18, %s30
    %p138 = scmp.eq.s32.totalorder %s137, 0
    %s140 = sadd.s32 %s139, 1
    %s141 = scalar_select %p138, %s139, %s140
    %p144 = pneg %p138
    %p145 = scmp.eq.s32.totalorder %s11, 4
    %p146 = por %p144, %p145
    %p147 = scmp.ne.s32.totalorder %s139, %s142
    %p148 = scmp.eq.s32.totalorder %s11, 0
    %p149 = por %p147, %p148
    %p150 = scmp.ne.s32.totalorder %s139, %s142
    %p151 = scmp.eq.s32.totalorder %s16, 4
    %p152 = por %p150, %p151
    %p153 = scmp.ne.s32.totalorder %s142, %s143
    %p154 = scmp.eq.s32.totalorder %s16, 0
    %p155 = por %p153, %p154
    %p156 = scmp.ne.s32.totalorder %s142, %s143
    %p157 = scmp.eq.s32.totalorder %s17, 4
    %p158 = por %p156, %p157
    %p160 = scmp.ne.s32.totalorder %s143, %s159
    %p161 = scmp.eq.s32.totalorder %s17, 0
    %p162 = por %p160, %p161
    %p163 = scmp.le.s32.totalorder 1, %s11
    %p164 = scmp.lt.s32.totalorder %s11, 6
    %p165 = pnand %p163, %p164
    %p166 = pneg %p165
    // Predicated region
    $region9: #{block_bone_input_forward.3} parent=5 // pred_check
      _
    $region10: #{block_bone_input_forward.3} parent=5 // pred_check_branch
      %168 = sbr.rel (%p165) target = $region12
    $region11: #{block_bone_input_forward.3} parent=5 // pred_region
      %s169 = ssub.s32 %s11, 1
    $region12: #{block_bone_input_forward.3} parent=5 // pred_fallthru
      _
    %p170 = scmp.lt.s32.totalorder %s11, 5
    // Predicated region
    $region13: #{block_bone_input_forward.3} parent=5 // pred_check
      %p171 = pneg %p170
    $region14: #{block_bone_input_forward.3} parent=5 // pred_check_branch
      %173 = sbr.rel (%p171) target = $region16
    $region15: #{block_bone_input_forward.3} parent=5 // pred_region
      // Predicated region
      $region17: #{block_bone_input_forward.3} parent=15 // pred_check
        %p174 = pneg %p45
      $region18: #{block_bone_input_forward.3} parent=15 // pred_check_branch
        %176 = sbr.rel (%p174) target = $region20
      $region19: #{block_bone_input_forward.3} parent=15 // pred_region
        %s177 = smul.u32 5, %s18
        %p178 = scmp.lt.s32.totalorder %s177, 24
        %s179 = scalar_select %p178, %s177, 24
        %p180 = scmp.lt.s32.totalorder %s19, 0
        %s181 = scalar_select %p180, %s19, 0
        %s182 = sadd.s32 %s181, %s179
        %s183 = smul.addr %s182, 4
        %s184 = scalar_lea.vmem %s0, %s183
        %s185 = smul.u32 5, %s18
      $region20: #{block_bone_input_forward.3} parent=15 // pred_fallthru
        _
      // Predicated region
      $region21: #{block_bone_input_forward.3} parent=15 // pred_check
        %p186 = pneg %p71
      $region22: #{block_bone_input_forward.3} parent=15 // pred_check_branch
        %188 = sbr.rel (%p186) target = $region24
      $region23: #{block_bone_input_forward.3} parent=15 // pred_region
        %s189 = smul.u32 5, %s18
        %p190 = scmp.lt.s32.totalorder %s189, 24
        %s191 = scalar_select %p190, %s189, 24
        %s192 = smul.addr %s191, 4
        %s193 = scalar_lea.vmem %s1, %s192
        %s194 = smul.u32 5, %s18
      $region24: #{block_bone_input_forward.3} parent=15 // pred_fallthru
        _
      // Predicated region
      $region25: #{block_bone_input_forward.3} parent=15 // pred_check
        %p195 = pneg %p97
      $region26: #{block_bone_input_forward.3} parent=15 // pred_check_branch
        %197 = sbr.rel (%p195) target = $region28
      $region27: #{block_bone_input_forward.3} parent=15 // pred_region
        %s198 = smul.u32 5, %s18
        %p199 = scmp.lt.s32.totalorder %s198, 24
        %s200 = scalar_select %p199, %s198, 24
        %s201 = smul.addr %s200, 4
        %s202 = scalar_lea.vmem %s2, %s201
        %s203 = smul.u32 5, %s18
      $region28: #{block_bone_input_forward.3} parent=15 // pred_fallthru
        _
    $region16: #{block_bone_input_forward.3} parent=5 // pred_fallthru
      _
    %p204 = scmp.le.s32.totalorder 1, %s11
    %p205 = scmp.lt.s32.totalorder %s11, 6
    %p206 = pnand %p204, %p205
    %p207 = pneg %p206
    // Predicated region
    $region29: #{block_bone_input_forward.3} parent=5 // pred_check
      _
    $region30: #{block_bone_input_forward.3} parent=5 // pred_check_branch
      %209 = sbr.rel (%p206) target = $region32
    $region31: #{block_bone_input_forward.3} parent=5 // pred_region
      %s210 = ssub.s32 %s11, 1
      %s211 = smul.u32 5, %s20
      %p212 = scmp.lt.s32.totalorder %s211, 24
      %s213 = scalar_select %p212, %s211, 24
      %p214 = scmp.lt.s32.totalorder %s21, 0
      %s215 = scalar_select %p214, %s21, 0
      %s216 = sadd.s32 %s215, %s213
      %s217 = smul.addr %s216, 4
      %s218 = scalar_lea.vmem %s0, %s217
      %p219 = pneg %p51
      %p220 = pneg %p48
      %s221 = smul.u32 5, %s20
      %p222 = scmp.lt.s32.totalorder %s221, 24
      %s223 = scalar_select %p222, %s221, 24
      %s224 = smul.addr %s223, 4
      %s225 = scalar_lea.vmem %s1, %s224
      %p226 = pneg %p77
      %p227 = pneg %p74
      %s228 = smul.u32 5, %s20
      %p229 = scmp.lt.s32.totalorder %s228, 24
      %s230 = scalar_select %p229, %s228, 24
      %s231 = smul.addr %s230, 4
      %s232 = scalar_lea.vmem %s2, %s231
      %p233 = pneg %p103
      %p234 = pneg %p100
      %p235 = pneg %p129
      %p236 = pneg %p126
      %s237 = smul.u32 5, %s20
      %p238 = scmp.lt.s32.totalorder %s237, 24
      %s239 = scalar_select %p238, %s237, 24
      %s240 = smul.addr %s239, 4
      %s241 = scalar_lea.vmem %s3, %s240
      %p242 = pneg %p155
      %p243 = pneg %p152
      %s244 = smul.u32 5, %s20
      %p245 = scmp.lt.s32.totalorder %s244, 24
      %s246 = scalar_select %p245, %s244, 24
      %s247 = smul.addr %s246, 4
      %s248 = scalar_lea.vmem %s4, %s247
      %s249 = smul.u32 5, %s20
      %p250 = scmp.lt.s32.totalorder %s249, 24
      %s251 = scalar_select %p250, %s249, 24
      %p252 = scmp.lt.s32.totalorder %s21, 0
      %s253 = scalar_select %p252, %s21, 0
      %s254 = sadd.s32 %s253, %s251
      %s255 = smul.addr %s254, 4
      %s256 = scalar_lea.vmem %s0, %s255
      %s257 = smul.u32 5, %s20
      %s258 = smul.u32 5, %s20
      %p259 = scmp.lt.s32.totalorder %s258, 24
      %s260 = scalar_select %p259, %s258, 24
      %s261 = smul.addr %s260, 4
      %s262 = scalar_lea.vmem %s1, %s261
      %s263 = smul.u32 5, %s20
      %s264 = smul.u32 5, %s20
      %p265 = scmp.lt.s32.totalorder %s264, 24
      %s266 = scalar_select %p265, %s264, 24
      %s267 = smul.addr %s266, 4
      %s268 = scalar_lea.vmem %s2, %s267
      %s269 = smul.u32 5, %s20
      %s270 = smul.u32 5, %s20
      %p271 = scmp.lt.s32.totalorder %s270, 24
      %s272 = scalar_select %p271, %s270, 24
      %s273 = smul.addr %s272, 4
      %s274 = scalar_lea.vmem %s3, %s273
      %s275 = smul.u32 5, %s20
      %s276 = smul.u32 5, %s20
      %p277 = scmp.lt.s32.totalorder %s276, 24
      %s278 = scalar_select %p277, %s276, 24
      %s279 = smul.addr %s278, 4
      %s280 = scalar_lea.vmem %s4, %s279
      %s281 = smul.u32 5, %s20
      %p282 = scmp.eq.s32.totalorder %s21, 0
      // Predicated region
      $region33: #{block_bone_input_forward.3} parent=31 // pred_check
        %p283 = pneg %p282
      $region34: #{block_bone_input_forward.3} parent=31 // pred_check_branch
        %285 = sbr.rel (%p283) target = $region36
      $region35: #{block_bone_input_forward.3} parent=31 // pred_region
        %vm286 = vcmask 2048
        %287 = vst.msk [vmem:[%s274] sm:$0x7] %vm286, 0.0
        %288 = vst.msk [vmem:[%s274 + $0x4] sm:$0x7] %vm286, 0.0
        %289 = vst.msk [vmem:[%s274 + $0x8] sm:$0x7] %vm286, 0.0
        %290 = vst.msk [vmem:[%s274 + $0xc] sm:$0x7] %vm286, 0.0
        %291 = vst.msk [vmem:[%s274 + $0x10] sm:$0x7] %vm286, 0.0
        %292 = vst.msk [vmem:[%s280] sm:$0x7] %vm286, 0.0
        %293 = vst.msk [vmem:[%s280 + $0x4] sm:$0x7] %vm286, 0.0
        %294 = vst.msk [vmem:[%s280 + $0x8] sm:$0x7] %vm286, 0.0
        %295 = vst.msk [vmem:[%s280 + $0xc] sm:$0x7] %vm286, 0.0
        %296 = vst.msk [vmem:[%s280 + $0x10] sm:$0x7] %vm286, 0.0
      $region36: #{block_bone_input_forward.3} parent=31 // pred_fallthru
        _
      %v297 = vld [vmem:[%s256] sm:$0x7]
      %v298 = vld [vmem:[%s256 + $0x4] sm:$0x7]
      %v299 = vld [vmem:[%s256 + $0x8] sm:$0x7]
      %v300 = vld [vmem:[%s256 + $0xc] sm:$0x7]
      %v301 = vld [vmem:[%s256 + $0x10] sm:$0x7]
      %v302 = vld [vmem:[%s274] sm:$0x7]
      %v303 = vld [vmem:[%s274 + $0x4] sm:$0x7]
      %v304 = vld [vmem:[%s274 + $0x8] sm:$0x7]
      %v305 = vld [vmem:[%s274 + $0xc] sm:$0x7]
      %v306 = vld [vmem:[%s274 + $0x10] sm:$0x7]
      %vm307 = vcmask 1042432
      %v308 = vsel %vm307, %v297, 0.0
      %309 = vadd.xlane.f32.xlu0 %v308
      %v310 = vpop.xlane.xlu0 %309
      %v311 = vsel %vm307, %v298, 0.0
      %312 = vadd.xlane.f32.xlu0 %v311
      %v313 = vpop.xlane.xlu0 %312
      %v314 = vsel %vm307, %v299, 0.0
      %315 = vadd.xlane.f32.xlu0 %v314
      %v316 = vpop.xlane.xlu0 %315
      %v317 = vsel %vm307, %v300, 0.0
      %318 = vadd.xlane.f32.xlu0 %v317
      %v319 = vpop.xlane.xlu0 %318
      %v320 = vsel %vm307, %v301, 0.0
      %321 = vadd.xlane.f32.xlu0 %v320
      %v322 = vpop.xlane.xlu0 %321
      %v323 = vadd.f32 %v302, %v310
      %v324 = vadd.f32 %v303, %v313
      %v325 = vadd.f32 %v304, %v316
      %v326 = vadd.f32 %v305, %v319
      %v327 = vadd.f32 %v306, %v322
      %vm328 = vcmask 2048
      %329 = vst.msk [vmem:[%s274] sm:$0x7] %vm328, %v323
      %330 = vst.msk [vmem:[%s274 + $0x4] sm:$0x7] %vm328, %v324
      %331 = vst.msk [vmem:[%s274 + $0x8] sm:$0x7] %vm328, %v325
      %332 = vst.msk [vmem:[%s274 + $0xc] sm:$0x7] %vm328, %v326
      %333 = vst.msk [vmem:[%s274 + $0x10] sm:$0x7] %vm328, %v327
      %v334 = vld [vmem:[%s280] sm:$0x7]
      %v335 = vld [vmem:[%s280 + $0x4] sm:$0x7]
      %v336 = vld [vmem:[%s280 + $0x8] sm:$0x7]
      %v337 = vld [vmem:[%s280 + $0xc] sm:$0x7]
      %v338 = vld [vmem:[%s280 + $0x10] sm:$0x7]
      %v339 = vmul.f32 %v297, %v297
      %v340 = vmul.f32 %v298, %v298
      %v341 = vmul.f32 %v299, %v299
      %v342 = vmul.f32 %v300, %v300
      %v343 = vmul.f32 %v301, %v301
      %v344 = vsel %vm307, %v339, 0.0
      %345 = vadd.xlane.f32.xlu0 %v344
      %v346 = vpop.xlane.xlu0 %345
      %v347 = vsel %vm307, %v340, 0.0
      %348 = vadd.xlane.f32.xlu0 %v347
      %v349 = vpop.xlane.xlu0 %348
      %v350 = vsel %vm307, %v341, 0.0
      %351 = vadd.xlane.f32.xlu0 %v350
      %v352 = vpop.xlane.xlu0 %351
      %v353 = vsel %vm307, %v342, 0.0
      %354 = vadd.xlane.f32.xlu0 %v353
      %v355 = vpop.xlane.xlu0 %354
      %v356 = vsel %vm307, %v343, 0.0
      %357 = vadd.xlane.f32.xlu0 %v356
      %v358 = vpop.xlane.xlu0 %357
      %v359 = vadd.f32 %v334, %v346
      %v360 = vadd.f32 %v335, %v349
      %v361 = vadd.f32 %v336, %v352
      %v362 = vadd.f32 %v337, %v355
      %v363 = vadd.f32 %v338, %v358
      %364 = vst.msk [vmem:[%s280] sm:$0x7] %vm328, %v359
      %365 = vst.msk [vmem:[%s280 + $0x4] sm:$0x7] %vm328, %v360
      %366 = vst.msk [vmem:[%s280 + $0x8] sm:$0x7] %vm328, %v361
      %367 = vst.msk [vmem:[%s280 + $0xc] sm:$0x7] %vm328, %v362
      %368 = vst.msk [vmem:[%s280 + $0x10] sm:$0x7] %vm328, %v363
      // Predicated region
      $region37: #{block_bone_input_forward.3} parent=31 // pred_check
        %p369 = pneg %p282
      $region38: #{block_bone_input_forward.3} parent=31 // pred_check_branch
        %371 = sbr.rel (%p369) target = $region40
      $region39: #{block_bone_input_forward.3} parent=31 // pred_region
        %v372 = vld [vmem:[%s274] sm:$0x7]
        %v373 = vld [vmem:[%s274 + $0x4] sm:$0x7]
        %v374 = vld [vmem:[%s274 + $0x8] sm:$0x7]
        %v375 = vld [vmem:[%s274 + $0xc] sm:$0x7]
        %v376 = vld [vmem:[%s274 + $0x10] sm:$0x7]
        %v377 = vmul.f32 %v372, 0.03125
        %v378 = vmul.f32 %v373, 0.03125
        %v379 = vmul.f32 %v374, 0.03125
        %v380 = vmul.f32 %v375, 0.03125
        %v381 = vmul.f32 %v376, 0.03125
        %v382 = vld [vmem:[%s280] sm:$0x7]
        %v383 = vld [vmem:[%s280 + $0x4] sm:$0x7]
        %v384 = vld [vmem:[%s280 + $0x8] sm:$0x7]
        %v385 = vld [vmem:[%s280 + $0xc] sm:$0x7]
        %v386 = vld [vmem:[%s280 + $0x10] sm:$0x7]
        %v387 = vmul.f32 %v382, 0.03125
        %v388 = vmul.f32 %v383, 0.03125
        %v389 = vmul.f32 %v384, 0.03125
        %v390 = vmul.f32 %v385, 0.03125
        %v391 = vmul.f32 %v386, 0.03125
        %v392 = vmul.f32 %v377, %v377
        %v393 = vmul.f32 %v378, %v378
        %v394 = vmul.f32 %v379, %v379
        %v395 = vmul.f32 %v380, %v380
        %v396 = vmul.f32 %v381, %v381
        %v397 = vsub.f32 %v387, %v392
        %v398 = vsub.f32 %v388, %v393
        %v399 = vsub.f32 %v389, %v394
        %v400 = vsub.f32 %v390, %v395
        %v401 = vsub.f32 %v391, %v396
        %v402 = vmax.f32 %v397, 0.0
        %v403 = vmax.f32 %v398, 0.0
        %v404 = vmax.f32 %v399, 0.0
        %v405 = vmax.f32 %v400, 0.0
        %v406 = vmax.f32 %v401, 0.0
        %v407 = vld [vmem:[%s262] sm:$0x7]
        %v408 = vld [vmem:[%s262 + $0x4] sm:$0x7]
        %v409 = vld [vmem:[%s262 + $0x8] sm:$0x7]
        %v410 = vld [vmem:[%s262 + $0xc] sm:$0x7]
        %v411 = vld [vmem:[%s262 + $0x10] sm:$0x7]
        %v412 = vadd.f32 %v402, 1e-05
        %v413 = vadd.f32 %v403, 1e-05
        %v414 = vadd.f32 %v404, 1e-05
        %v415 = vadd.f32 %v405, 1e-05
        %v416 = vadd.f32 %v406, 1e-05
        %v417 = vrsqrt.pop %v412
        %v418 = vmul.f32 %v417, %v412
        %v419 = vmul.f32 %v418, %v417
        %v420 = vmul.f32 0.5, %v419
        %v421 = vsub.f32 1.5, %v420
        %v422 = vmul.f32 %v417, %v421
        %vm423 = vweird.f32 %v412
        %vm424 = vweird.f32 %v417
        %vm425 = vmor %vm423, %vm424
        %v426 = vsel %vm425, %v417, %v422
        %v427 = vrsqrt.pop %v413
        %v428 = vmul.f32 %v427, %v413
        %v429 = vmul.f32 %v428, %v427
        %v430 = vmul.f32 0.5, %v429
        %v431 = vsub.f32 1.5, %v430
        %v432 = vmul.f32 %v427, %v431
        %vm433 = vweird.f32 %v413
        %vm434 = vweird.f32 %v427
        %vm435 = vmor %vm433, %vm434
        %v436 = vsel %vm435, %v427, %v432
        %v437 = vrsqrt.pop %v414
        %v438 = vmul.f32 %v437, %v414
        %v439 = vmul.f32 %v438, %v437
        %v440 = vmul.f32 0.5, %v439
        %v441 = vsub.f32 1.5, %v440
        %v442 = vmul.f32 %v437, %v441
        %vm443 = vweird.f32 %v414
        %vm444 = vweird.f32 %v437
        %vm445 = vmor %vm443, %vm444
        %v446 = vsel %vm445, %v437, %v442
        %v447 = vrsqrt.pop %v415
        %v448 = vmul.f32 %v447, %v415
        %v449 = vmul.f32 %v448, %v447
        %v450 = vmul.f32 0.5, %v449
        %v451 = vsub.f32 1.5, %v450
        %v452 = vmul.f32 %v447, %v451
        %vm453 = vweird.f32 %v415
        %vm454 = vweird.f32 %v447
        %vm455 = vmor %vm453, %vm454
        %v456 = vsel %vm455, %v447, %v452
        %v457 = vrsqrt.pop %v416
        %v458 = vmul.f32 %v457, %v416
        %v459 = vmul.f32 %v458, %v457
        %v460 = vmul.f32 0.5, %v459
        %v461 = vsub.f32 1.5, %v460
        %v462 = vmul.f32 %v457, %v461
        %vm463 = vweird.f32 %v416
        %vm464 = vweird.f32 %v457
        %vm465 = vmor %vm463, %vm464
        %v466 = vsel %vm465, %v457, %v462
        %v467 = vmul.f32 %v407, %v426
        %v468 = vmul.f32 %v408, %v436
        %v469 = vmul.f32 %v409, %v446
        %v470 = vmul.f32 %v410, %v456
        %v471 = vmul.f32 %v411, %v466
        %472 = vst.msk [vmem:[%s274] sm:$0x7] %vm328, %v467
        %473 = vst.msk [vmem:[%s274 + $0x4] sm:$0x7] %vm328, %v468
        %474 = vst.msk [vmem:[%s274 + $0x8] sm:$0x7] %vm328, %v469
        %475 = vst.msk [vmem:[%s274 + $0xc] sm:$0x7] %vm328, %v470
        %476 = vst.msk [vmem:[%s274 + $0x10] sm:$0x7] %vm328, %v471
        %v477 = vld [vmem:[%s268] sm:$0x7]
        %v478 = vld [vmem:[%s268 + $0x4] sm:$0x7]
        %v479 = vld [vmem:[%s268 + $0x8] sm:$0x7]
        %v480 = vld [vmem:[%s268 + $0xc] sm:$0x7]
        %v481 = vld [vmem:[%s268 + $0x10] sm:$0x7]
        %v482 = vmul.f32 %v377, %v467
        %v483 = vmul.f32 %v378, %v468
        %v484 = vmul.f32 %v379, %v469
        %v485 = vmul.f32 %v380, %v470
        %v486 = vmul.f32 %v381, %v471
        %v487 = vsub.f32 %v477, %v482
        %v488 = vsub.f32 %v478, %v483
        %v489 = vsub.f32 %v479, %v484
        %v490 = vsub.f32 %v480, %v485
        %v491 = vsub.f32 %v481, %v486
        %492 = vst.msk [vmem:[%s280] sm:$0x7] %vm328, %v487
        %493 = vst.msk [vmem:[%s280 + $0x4] sm:$0x7] %vm328, %v488
        %494 = vst.msk [vmem:[%s280 + $0x8] sm:$0x7] %vm328, %v489
        %495 = vst.msk [vmem:[%s280 + $0xc] sm:$0x7] %vm328, %v490
        %496 = vst.msk [vmem:[%s280 + $0x10] sm:$0x7] %vm328, %v491
      $region40: #{block_bone_input_forward.3} parent=31 // pred_fallthru
        _
      %s497 = smul.u32 5, %s20
      %p498 = scmp.lt.s32.totalorder %s497, 24
      %s499 = scalar_select %p498, %s497, 24
      %s500 = smul.addr %s499, 4
      %s501 = scalar_lea.vmem %s3, %s500
      %s502 = smul.u32 5, %s20
      %p503 = scmp.lt.s32.totalorder %s502, 24
      %s504 = scalar_select %p503, %s502, 24
      %s505 = smul.addr %s504, 4
      %s506 = scalar_lea.vmem %s4, %s505
      // Predicated region
      $region41: #{block_bone_input_forward.3} parent=31 // pred_check
        %p507 = pneg %p126
      $region42: #{block_bone_input_forward.3} parent=31 // pred_check_branch
        %509 = sbr.rel (%p507) target = $region44
      $region43: #{block_bone_input_forward.3} parent=31 // pred_region
        %s510 = smul.u32 5, %s20
      $region44: #{block_bone_input_forward.3} parent=31 // pred_fallthru
        _
      // Predicated region
      $region45: #{block_bone_input_forward.3} parent=31 // pred_check
        %p511 = pneg %p152
      $region46: #{block_bone_input_forward.3} parent=31 // pred_check_branch
        %513 = sbr.rel (%p511) target = $region48
      $region47: #{block_bone_input_forward.3} parent=31 // pred_region
        %s514 = smul.u32 5, %s20
      $region48: #{block_bone_input_forward.3} parent=31 // pred_fallthru
        _
    $region32: #{block_bone_input_forward.3} parent=5 // pred_fallthru
      _
    %p515 = scmp.le.s32.totalorder 2, %s11
    // Predicated region
    $region49: #{block_bone_input_forward.3} parent=5 // pred_check
      %p516 = pneg %p515
    $region50: #{block_bone_input_forward.3} parent=5 // pred_check_branch
      %518 = sbr.rel (%p516) target = $region52
    $region51: #{block_bone_input_forward.3} parent=5 // pred_region
      %s519 = ssub.s32 %s11, 2
      // Predicated region
      $region53: #{block_bone_input_forward.3} parent=51 // pred_check
        %p520 = pneg %p132
      $region54: #{block_bone_input_forward.3} parent=51 // pred_check_branch
        %522 = sbr.rel (%p520) target = $region56
      $region55: #{block_bone_input_forward.3} parent=51 // pred_region
        %s523 = smul.u32 5, %s22
        %p524 = scmp.lt.s32.totalorder %s523, 24
        %s525 = scalar_select %p524, %s523, 24
        %s526 = smul.addr %s525, 4
        %s527 = scalar_lea.vmem %s3, %s526
      $region56: #{block_bone_input_forward.3} parent=51 // pred_fallthru
        _
      // Predicated region
      $region57: #{block_bone_input_forward.3} parent=51 // pred_check
        %p528 = pneg %p158
      $region58: #{block_bone_input_forward.3} parent=51 // pred_check_branch
        %530 = sbr.rel (%p528) target = $region60
      $region59: #{block_bone_input_forward.3} parent=51 // pred_region
        %s531 = smul.u32 5, %s22
        %p532 = scmp.lt.s32.totalorder %s531, 24
        %s533 = scalar_select %p532, %s531, 24
        %s534 = smul.addr %s533, 4
        %s535 = scalar_lea.vmem %s4, %s534
      $region60: #{block_bone_input_forward.3} parent=51 // pred_fallthru
        _
    $region52: #{block_bone_input_forward.3} parent=5 // pred_fallthru
      _
  $region6: #{block_bone_input_forward.3} parent=0 // loop_footer
    %s15 = sadd.s32 1, %s11
  $region7: #{block_bone_input_forward.3} parent=0 // loop_footer_branch
    %10 = sbr.rel target = $region3
  $region8: #{block_bone_input_forward.3} parent=0 // loop_exit
    _

// kernel: block_bone_input_forward.5
$region0: #{block_bone_input_forward.5}
  #allocation0 [shape = 'u32[]', space=smem, size = 0x4, offset = 0x4, fixed_abs, tag = 'smem constant byte address 0x4 - core index']
  #allocation1 [shape = 'u32[72,128]{1,0:T(1,128)}', space=vmem, size = 0x9000, scoped, tag = 'internal scratch']
  %s0 = inlined_call_operand.vmem [shape: f32[25,3,128], index: 0, kind: input, shape index: {}]
  %s1 = inlined_call_operand.vmem [shape: f32[25,64,3], index: 1, kind: input, shape index: {}]
  %s2 = inlined_call_operand.vmem [shape: f32[25,64,1], index: 2, kind: input, shape index: {}]
  %s3 = inlined_call_operand.vmem [shape: f32[64,64], index: 3, kind: input, shape index: {}]
  %s4 = inlined_call_operand.vmem [shape: f32[64,1], index: 4, kind: input, shape index: {}]
  %s5 = inlined_call_operand.vmem [shape: f32[25,3,128], index: 5, kind: input, shape index: {}]
  %s6 = inlined_call_operand.vmem [shape: f32[25,64,3], index: 6, kind: input, shape index: {}]
  %s7 = inlined_call_operand.vmem [shape: f32[25,64,1], index: 7, kind: input, shape index: {}]
  %s8 = inlined_call_operand.vmem [shape: f32[64,64], index: 8, kind: input, shape index: {}]
  %s9 = inlined_call_operand.vmem [shape: f32[64,1], index: 9, kind: input, shape index: {}]
  %s10 = inlined_call_operand.vmem [shape: f32[25,64,128], index: 10, kind: output, shape index: {}]
  %s11 = sld [smem:[#allocation0]]
  $region73: #{block_bone_input_forward.5} parent=0
    _
  %s13 = ssub.s32 1, %s11
  %s14 = scalar_select 0, %s13, %s11
  loop: start=0, step=1, limit=27
  $region2: #{block_bone_input_forward.5} parent=0 // loop_pre_header
    _
  $region3: #{block_bone_input_forward.5} parent=0 // loop_header
    %s16 = sphi 0, %s20
    %p17 = scmp.ge.s32.totalorder %s16, 27
    %s23 = sphi 0, %s35
    %s24 = sphi 0, %s31
    %s25 = sphi 0, %s23
    %s26 = sphi 0, %s24
    %s27 = sphi 0, %s25
    %s28 = sphi 0, %s26
    %s40 = sphi 0, %s42
    %s43 = sphi 0, %s40
    %s44 = sphi 0, %s43
    %s60 = sphi 0, %s44
    %s66 = sphi 0, %s68
    %s69 = sphi 0, %s66
    %s70 = sphi 0, %s69
    %s86 = sphi 0, %s70
    %s92 = sphi 0, %s94
    %s95 = sphi 0, %s92
    %s96 = sphi 0, %s95
    %s112 = sphi 0, %s96
    %s116 = sphi 0, %s116
    %s118 = sphi 0, %s116
    %s119 = sphi 0, %s118
    %s133 = sphi 0, %s119
    %s137 = sphi 0, %s137
    %s139 = sphi 0, %s137
    %s140 = sphi 0, %s139
    %s154 = sphi 0, %s140
    %s162 = sphi 0, %s164
    %s165 = sphi 0, %s162
    %s166 = sphi 0, %s165
    %s182 = sphi 0, %s166
    %s188 = sphi 0, %s190
    %s191 = sphi 0, %s188
    %s192 = sphi 0, %s191
    %s208 = sphi 0, %s192
    %s214 = sphi 0, %s216
    %s217 = sphi 0, %s214
    %s218 = sphi 0, %s217
    %s234 = sphi 0, %s218
    %s238 = sphi 0, %s238
    %s240 = sphi 0, %s238
    %s241 = sphi 0, %s240
    %s255 = sphi 0, %s241
    %s259 = sphi 0, %s259
    %s261 = sphi 0, %s259
    %s262 = sphi 0, %s261
    %s276 = sphi 0, %s262
    %s284 = sphi 0, %s286
    %s287 = sphi 0, %s284
    %s288 = sphi 0, %s287
    %s304 = sphi 0, %s288
  $region4: #{block_bone_input_forward.5} parent=0 // loop_header_branch
    %19 = sbr.rel (%p17) target = $region8
  $region5: #{block_bone_input_forward.5} parent=0 // loop_body
    %s21 = ssub.s32 %s16, 1
    %s22 = ssub.s32 %s16, 2
    %s29 = sadd.s32 1, %s24
    %p30 = scmp.ge.s32.totalorder %s29, 1
    %s31 = scalar_select %p30, 0, %s29
    %s32 = sadd.s32 1, %s23
    %s33 = scalar_select %p30, %s32, %s23
    %p34 = scmp.ge.s32.totalorder %s33, 25
    %s35 = scalar_select %p34, 0, %s33
    %s36 = ssub.s32 %s23, %s35
    %s37 = ssub.s32 %s24, %s31
    %s38 = sor.u32 %s36, %s37
    %p39 = scmp.eq.s32.totalorder %s38, 0
    %s41 = sadd.s32 %s40, 1
    %s42 = scalar_select %p39, %s40, %s41
    %p45 = pneg %p39
    %p46 = scmp.eq.s32.totalorder %s16, 24
    %p47 = por %p45, %p46
    %p48 = scmp.ne.s32.totalorder %s40, %s43
    %p49 = scmp.eq.s32.totalorder %s16, 0
    %p50 = por %p48, %p49
    %p51 = scmp.ne.s32.totalorder %s40, %s43
    %p52 = scmp.eq.s32.totalorder %s21, 24
    %p53 = por %p51, %p52
    %p54 = scmp.ne.s32.totalorder %s43, %s44
    %p55 = scmp.eq.s32.totalorder %s21, 0
    %p56 = por %p54, %p55
    %p57 = scmp.ne.s32.totalorder %s43, %s44
    %p58 = scmp.eq.s32.totalorder %s22, 24
    %p59 = por %p57, %p58
    %p61 = scmp.ne.s32.totalorder %s44, %s60
    %p62 = scmp.eq.s32.totalorder %s22, 0
    %p63 = por %p61, %p62
    %s64 = ssub.s32 %s23, %s35
    %p65 = scmp.eq.s32.totalorder %s64, 0
    %s67 = sadd.s32 %s66, 1
    %s68 = scalar_select %p65, %s66, %s67
    %p71 = pneg %p65
    %p72 = scmp.eq.s32.totalorder %s16, 24
    %p73 = por %p71, %p72
    %p74 = scmp.ne.s32.totalorder %s66, %s69
    %p75 = scmp.eq.s32.totalorder %s16, 0
    %p76 = por %p74, %p75
    %p77 = scmp.ne.s32.totalorder %s66, %s69
    %p78 = scmp.eq.s32.totalorder %s21, 24
    %p79 = por %p77, %p78
    %p80 = scmp.ne.s32.totalorder %s69, %s70
    %p81 = scmp.eq.s32.totalorder %s21, 0
    %p82 = por %p80, %p81
    %p83 = scmp.ne.s32.totalorder %s69, %s70
    %p84 = scmp.eq.s32.totalorder %s22, 24
    %p85 = por %p83, %p84
    %p87 = scmp.ne.s32.totalorder %s70, %s86
    %p88 = scmp.eq.s32.totalorder %s22, 0
    %p89 = por %p87, %p88
    %s90 = ssub.s32 %s23, %s35
    %p91 = scmp.eq.s32.totalorder %s90, 0
    %s93 = sadd.s32 %s92, 1
    %s94 = scalar_select %p91, %s92, %s93
    %p97 = pneg %p91
    %p98 = scmp.eq.s32.totalorder %s16, 24
    %p99 = por %p97, %p98
    %p100 = scmp.ne.s32.totalorder %s92, %s95
    %p101 = scmp.eq.s32.totalorder %s16, 0
    %p102 = por %p100, %p101
    %p103 = scmp.ne.s32.totalorder %s92, %s95
    %p104 = scmp.eq.s32.totalorder %s21, 24
    %p105 = por %p103, %p104
    %p106 = scmp.ne.s32.totalorder %s95, %s96
    %p107 = scmp.eq.s32.totalorder %s21, 0
    %p108 = por %p106, %p107
    %p109 = scmp.ne.s32.totalorder %s95, %s96
    %p110 = scmp.eq.s32.totalorder %s22, 24
    %p111 = por %p109, %p110
    %p113 = scmp.ne.s32.totalorder %s96, %s112
    %p114 = scmp.eq.s32.totalorder %s22, 0
    %p115 = por %p113, %p114
    %s117 = sadd.s32 %s116, 1
    %p120 = scmp.eq.s32.totalorder %s16, 24
    %p121 = scmp.ne.s32.totalorder %s116, %s118
    %p122 = scmp.eq.s32.totalorder %s16, 0
    %p123 = por %p121, %p122
    %p124 = scmp.ne.s32.totalorder %s116, %s118
    %p125 = scmp.eq.s32.totalorder %s21, 24
    %p126 = por %p124, %p125
    %p127 = scmp.ne.s32.totalorder %s118, %s119
    %p128 = scmp.eq.s32.totalorder %s21, 0
    %p129 = por %p127, %p128
    %p130 = scmp.ne.s32.totalorder %s118, %s119
    %p131 = scmp.eq.s32.totalorder %s22, 24
    %p132 = por %p130, %p131
    %p134 = scmp.ne.s32.totalorder %s119, %s133
    %p135 = scmp.eq.s32.totalorder %s22, 0
    %p136 = por %p134, %p135
    %s138 = sadd.s32 %s137, 1
    %p141 = scmp.eq.s32.totalorder %s16, 24
    %p142 = scmp.ne.s32.totalorder %s137, %s139
    %p143 = scmp.eq.s32.totalorder %s16, 0
    %p144 = por %p142, %p143
    %p145 = scmp.ne.s32.totalorder %s137, %s139
    %p146 = scmp.eq.s32.totalorder %s21, 24
    %p147 = por %p145, %p146
    %p148 = scmp.ne.s32.totalorder %s139, %s140
    %p149 = scmp.eq.s32.totalorder %s21, 0
    %p150 = por %p148, %p149
    %p151 = scmp.ne.s32.totalorder %s139, %s140
    %p152 = scmp.eq.s32.totalorder %s22, 24
    %p153 = por %p151, %p152
    %p155 = scmp.ne.s32.totalorder %s140, %s154
    %p156 = scmp.eq.s32.totalorder %s22, 0
    %p157 = por %p155, %p156
    %s158 = ssub.s32 %s23, %s35
    %s159 = ssub.s32 %s24, %s31
    %s160 = sor.u32 %s158, %s159
    %p161 = scmp.eq.s32.totalorder %s160, 0
    %s163 = sadd.s32 %s162, 1
    %s164 = scalar_select %p161, %s162, %s163
    %p167 = pneg %p161
    %p168 = scmp.eq.s32.totalorder %s16, 24
    %p169 = por %p167, %p168
    %p170 = scmp.ne.s32.totalorder %s162, %s165
    %p171 = scmp.eq.s32.totalorder %s16, 0
    %p172 = por %p170, %p171
    %p173 = scmp.ne.s32.totalorder %s162, %s165
    %p174 = scmp.eq.s32.totalorder %s21, 24
    %p175 = por %p173, %p174
    %p176 = scmp.ne.s32.totalorder %s165, %s166
    %p177 = scmp.eq.s32.totalorder %s21, 0
    %p178 = por %p176, %p177
    %p179 = scmp.ne.s32.totalorder %s165, %s166
    %p180 = scmp.eq.s32.totalorder %s22, 24
    %p181 = por %p179, %p180
    %p183 = scmp.ne.s32.totalorder %s166, %s182
    %p184 = scmp.eq.s32.totalorder %s22, 0
    %p185 = por %p183, %p184
    %s186 = ssub.s32 %s23, %s35
    %p187 = scmp.eq.s32.totalorder %s186, 0
    %s189 = sadd.s32 %s188, 1
    %s190 = scalar_select %p187, %s188, %s189
    %p193 = pneg %p187
    %p194 = scmp.eq.s32.totalorder %s16, 24
    %p195 = por %p193, %p194
    %p196 = scmp.ne.s32.totalorder %s188, %s191
    %p197 = scmp.eq.s32.totalorder %s16, 0
    %p198 = por %p196, %p197
    %p199 = scmp.ne.s32.totalorder %s188, %s191
    %p200 = scmp.eq.s32.totalorder %s21, 24
    %p201 = por %p199, %p200
    %p202 = scmp.ne.s32.totalorder %s191, %s192
    %p203 = scmp.eq.s32.totalorder %s21, 0
    %p204 = por %p202, %p203
    %p205 = scmp.ne.s32.totalorder %s191, %s192
    %p206 = scmp.eq.s32.totalorder %s22, 24
    %p207 = por %p205, %p206
    %p209 = scmp.ne.s32.totalorder %s192, %s208
    %p210 = scmp.eq.s32.totalorder %s22, 0
    %p211 = por %p209, %p210
    %s212 = ssub.s32 %s23, %s35
    %p213 = scmp.eq.s32.totalorder %s212, 0
    %s215 = sadd.s32 %s214, 1
    %s216 = scalar_select %p213, %s214, %s215
    %p219 = pneg %p213
    %p220 = scmp.eq.s32.totalorder %s16, 24
    %p221 = por %p219, %p220
    %p222 = scmp.ne.s32.totalorder %s214, %s217
    %p223 = scmp.eq.s32.totalorder %s16, 0
    %p224 = por %p222, %p223
    %p225 = scmp.ne.s32.totalorder %s214, %s217
    %p226 = scmp.eq.s32.totalorder %s21, 24
    %p227 = por %p225, %p226
    %p228 = scmp.ne.s32.totalorder %s217, %s218
    %p229 = scmp.eq.s32.totalorder %s21, 0
    %p230 = por %p228, %p229
    %p231 = scmp.ne.s32.totalorder %s217, %s218
    %p232 = scmp.eq.s32.totalorder %s22, 24
    %p233 = por %p231, %p232
    %p235 = scmp.ne.s32.totalorder %s218, %s234
    %p236 = scmp.eq.s32.totalorder %s22, 0
    %p237 = por %p235, %p236
    %s239 = sadd.s32 %s238, 1
    %p242 = scmp.eq.s32.totalorder %s16, 24
    %p243 = scmp.ne.s32.totalorder %s238, %s240
    %p244 = scmp.eq.s32.totalorder %s16, 0
    %p245 = por %p243, %p244
    %p246 = scmp.ne.s32.totalorder %s238, %s240
    %p247 = scmp.eq.s32.totalorder %s21, 24
    %p248 = por %p246, %p247
    %p249 = scmp.ne.s32.totalorder %s240, %s241
    %p250 = scmp.eq.s32.totalorder %s21, 0
    %p251 = por %p249, %p250
    %p252 = scmp.ne.s32.totalorder %s240, %s241
    %p253 = scmp.eq.s32.totalorder %s22, 24
    %p254 = por %p252, %p253
    %p256 = scmp.ne.s32.totalorder %s241, %s255
    %p257 = scmp.eq.s32.totalorder %s22, 0
    %p258 = por %p256, %p257
    %s260 = sadd.s32 %s259, 1
    %p263 = scmp.eq.s32.totalorder %s16, 24
    %p264 = scmp.ne.s32.totalorder %s259, %s261
    %p265 = scmp.eq.s32.totalorder %s16, 0
    %p266 = por %p264, %p265
    %p267 = scmp.ne.s32.totalorder %s259, %s261
    %p268 = scmp.eq.s32.totalorder %s21, 24
    %p269 = por %p267, %p268
    %p270 = scmp.ne.s32.totalorder %s261, %s262
    %p271 = scmp.eq.s32.totalorder %s21, 0
    %p272 = por %p270, %p271
    %p273 = scmp.ne.s32.totalorder %s261, %s262
    %p274 = scmp.eq.s32.totalorder %s22, 24
    %p275 = por %p273, %p274
    %p277 = scmp.ne.s32.totalorder %s262, %s276
    %p278 = scmp.eq.s32.totalorder %s22, 0
    %p279 = por %p277, %p278
    %s280 = ssub.s32 %s23, %s35
    %s281 = ssub.s32 %s24, %s31
    %s282 = sor.u32 %s280, %s281
    %p283 = scmp.eq.s32.totalorder %s282, 0
    %s285 = sadd.s32 %s284, 1
    %s286 = scalar_select %p283, %s284, %s285
    %p289 = pneg %p283
    %p290 = scmp.eq.s32.totalorder %s16, 24
    %p291 = por %p289, %p290
    %p292 = scmp.ne.s32.totalorder %s284, %s287
    %p293 = scmp.eq.s32.totalorder %s16, 0
    %p294 = por %p292, %p293
    %p295 = scmp.ne.s32.totalorder %s284, %s287
    %p296 = scmp.eq.s32.totalorder %s21, 24
    %p297 = por %p295, %p296
    %p298 = scmp.ne.s32.totalorder %s287, %s288
    %p299 = scmp.eq.s32.totalorder %s21, 0
    %p300 = por %p298, %p299
    %p301 = scmp.ne.s32.totalorder %s287, %s288
    %p302 = scmp.eq.s32.totalorder %s22, 24
    %p303 = por %p301, %p302
    %p305 = scmp.ne.s32.totalorder %s288, %s304
    %p306 = scmp.eq.s32.totalorder %s22, 0
    %p307 = por %p305, %p306
    %p308 = scmp.le.s32.totalorder 1, %s16
    %p309 = scmp.lt.s32.totalorder %s16, 26
    %p310 = pnand %p308, %p309
    %p311 = pneg %p310
    // Predicated region
    $region9: #{block_bone_input_forward.5} parent=5 // pred_check
      _
    $region10: #{block_bone_input_forward.5} parent=5 // pred_check_branch
      %313 = sbr.rel (%p310) target = $region12
    $region11: #{block_bone_input_forward.5} parent=5 // pred_region
      %s314 = ssub.s32 %s16, 1
      // Predicated region
      $region13: #{block_bone_input_forward.5} parent=11 // pred_check
        %p315 = pneg %p129
      $region14: #{block_bone_input_forward.5} parent=11 // pred_check_branch
        %317 = sbr.rel (%p315) target = $region16
      $region15: #{block_bone_input_forward.5} parent=11 // pred_region
        _
      $region16: #{block_bone_input_forward.5} parent=11 // pred_fallthru
        _
      // Predicated region
      $region17: #{block_bone_input_forward.5} parent=11 // pred_check
        %p318 = pneg %p150
      $region18: #{block_bone_input_forward.5} parent=11 // pred_check_branch
        %320 = sbr.rel (%p318) target = $region20
      $region19: #{block_bone_input_forward.5} parent=11 // pred_region
        _
      $region20: #{block_bone_input_forward.5} parent=11 // pred_fallthru
        _
      // Predicated region
      $region21: #{block_bone_input_forward.5} parent=11 // pred_check
        %p321 = pneg %p251
      $region22: #{block_bone_input_forward.5} parent=11 // pred_check_branch
        %323 = sbr.rel (%p321) target = $region24
      $region23: #{block_bone_input_forward.5} parent=11 // pred_region
        _
      $region24: #{block_bone_input_forward.5} parent=11 // pred_fallthru
        _
      // Predicated region
      $region25: #{block_bone_input_forward.5} parent=11 // pred_check
        %p324 = pneg %p272
      $region26: #{block_bone_input_forward.5} parent=11 // pred_check_branch
        %326 = sbr.rel (%p324) target = $region28
      $region27: #{block_bone_input_forward.5} parent=11 // pred_region
        _
      $region28: #{block_bone_input_forward.5} parent=11 // pred_fallthru
        _
    $region12: #{block_bone_input_forward.5} parent=5 // pred_fallthru
      _
    %p327 = scmp.lt.s32.totalorder %s16, 25
    // Predicated region
    $region29: #{block_bone_input_forward.5} parent=5 // pred_check
      %p328 = pneg %p327
    $region30: #{block_bone_input_forward.5} parent=5 // pred_check_branch
      %330 = sbr.rel (%p328) target = $region32
    $region31: #{block_bone_input_forward.5} parent=5 // pred_region
      // Predicated region
      $region33: #{block_bone_input_forward.5} parent=31 // pred_check
        %p331 = pneg %p50
      $region34: #{block_bone_input_forward.5} parent=31 // pred_check_branch
        %333 = sbr.rel (%p331) target = $region36
      $region35: #{block_bone_input_forward.5} parent=31 // pred_region
        %p334 = scmp.lt.s32.totalorder %s23, 24
        %s335 = scalar_select %p334, %s23, 24
        %p336 = scmp.lt.s32.totalorder %s24, 0
        %s337 = scalar_select %p336, %s24, 0
        %s338 = sadd.s32 %s337, %s335
        %s339 = smul.addr %s338, 4
        %s340 = scalar_lea.vmem %s0, %s339
      $region36: #{block_bone_input_forward.5} parent=31 // pred_fallthru
        _
      // Predicated region
      $region37: #{block_bone_input_forward.5} parent=31 // pred_check
        %p341 = pneg %p76
      $region38: #{block_bone_input_forward.5} parent=31 // pred_check_branch
        %343 = sbr.rel (%p341) target = $region40
      $region39: #{block_bone_input_forward.5} parent=31 // pred_region
        %p344 = scmp.lt.s32.totalorder %s23, 24
        %s345 = scalar_select %p344, %s23, 24
        %s346 = smul.addr %s345, 8
        %s347 = smul.addr %s346, 8
        %s348 = scalar_lea.vmem %s1, %s347
      $region40: #{block_bone_input_forward.5} parent=31 // pred_fallthru
        _
      // Predicated region
      $region41: #{block_bone_input_forward.5} parent=31 // pred_check
        %p349 = pneg %p102
      $region42: #{block_bone_input_forward.5} parent=31 // pred_check_branch
        %351 = sbr.rel (%p349) target = $region44
      $region43: #{block_bone_input_forward.5} parent=31 // pred_region
        %p352 = scmp.lt.s32.totalorder %s23, 24
        %s353 = scalar_select %p352, %s23, 24
        %s354 = smul.addr %s353, 8
        %s355 = smul.addr %s354, 8
        %s356 = scalar_lea.vmem %s2, %s355
      $region44: #{block_bone_input_forward.5} parent=31 // pred_fallthru
        _
      // Predicated region
      $region45: #{block_bone_input_forward.5} parent=31 // pred_check
        %p357 = pneg %p172
      $region46: #{block_bone_input_forward.5} parent=31 // pred_check_branch
        %359 = sbr.rel (%p357) target = $region48
      $region47: #{block_bone_input_forward.5} parent=31 // pred_region
        %p360 = scmp.lt.s32.totalorder %s23, 24
        %s361 = scalar_select %p360, %s23, 24
        %p362 = scmp.lt.s32.totalorder %s24, 0
        %s363 = scalar_select %p362, %s24, 0
        %s364 = sadd.s32 %s363, %s361
        %s365 = smul.addr %s364, 4
        %s366 = scalar_lea.vmem %s5, %s365
      $region48: #{block_bone_input_forward.5} parent=31 // pred_fallthru
        _
      // Predicated region
      $region49: #{block_bone_input_forward.5} parent=31 // pred_check
        %p367 = pneg %p198
      $region50: #{block_bone_input_forward.5} parent=31 // pred_check_branch
        %369 = sbr.rel (%p367) target = $region52
      $region51: #{block_bone_input_forward.5} parent=31 // pred_region
        %p370 = scmp.lt.s32.totalorder %s23, 24
        %s371 = scalar_select %p370, %s23, 24
        %s372 = smul.addr %s371, 8
        %s373 = smul.addr %s372, 8
        %s374 = scalar_lea.vmem %s6, %s373
      $region52: #{block_bone_input_forward.5} parent=31 // pred_fallthru
        _
      // Predicated region
      $region53: #{block_bone_input_forward.5} parent=31 // pred_check
        %p375 = pneg %p224
      $region54: #{block_bone_input_forward.5} parent=31 // pred_check_branch
        %377 = sbr.rel (%p375) target = $region56
      $region55: #{block_bone_input_forward.5} parent=31 // pred_region
        %p378 = scmp.lt.s32.totalorder %s23, 24
        %s379 = scalar_select %p378, %s23, 24
        %s380 = smul.addr %s379, 8
        %s381 = smul.addr %s380, 8
        %s382 = scalar_lea.vmem %s7, %s381
      $region56: #{block_bone_input_forward.5} parent=31 // pred_fallthru
        _
    $region32: #{block_bone_input_forward.5} parent=5 // pred_fallthru
      _
    %p383 = scmp.le.s32.totalorder 1, %s16
    %p384 = scmp.lt.s32.totalorder %s16, 26
    %p385 = pnand %p383, %p384
    %p386 = pneg %p385
    // Predicated region
    $region57: #{block_bone_input_forward.5} parent=5 // pred_check
      _
    $region58: #{block_bone_input_forward.5} parent=5 // pred_check_branch
      %388 = sbr.rel (%p385) target = $region60
    $region59: #{block_bone_input_forward.5} parent=5 // pred_region
      %s389 = ssub.s32 %s16, 1
      %p390 = scmp.lt.s32.totalorder %s25, 24
      %s391 = scalar_select %p390, %s25, 24
      %p392 = scmp.lt.s32.totalorder %s26, 0
      %s393 = scalar_select %p392, %s26, 0
      %s394 = sadd.s32 %s393, %s391
      %s395 = smul.addr %s394, 4
      %s396 = scalar_lea.vmem %s0, %s395
      %p397 = pneg %p56
      %p398 = pneg %p53
      %p399 = scmp.lt.s32.totalorder %s25, 24
      %s400 = scalar_select %p399, %s25, 24
      %s401 = smul.addr %s400, 8
      %s402 = smul.addr %s401, 8
      %s403 = scalar_lea.vmem %s1, %s402
      %p404 = pneg %p82
      %p405 = pneg %p79
      %p406 = scmp.lt.s32.totalorder %s25, 24
      %s407 = scalar_select %p406, %s25, 24
      %s408 = smul.addr %s407, 8
      %s409 = smul.addr %s408, 8
      %s410 = scalar_lea.vmem %s2, %s409
      %p411 = pneg %p108
      %p412 = pneg %p105
      %p413 = pneg %p129
      %p414 = pneg %p126
      %p415 = pneg %p150
      %p416 = pneg %p147
      %p417 = scmp.lt.s32.totalorder %s25, 24
      %s418 = scalar_select %p417, %s25, 24
      %p419 = scmp.lt.s32.totalorder %s26, 0
      %s420 = scalar_select %p419, %s26, 0
      %s421 = sadd.s32 %s420, %s418
      %s422 = smul.addr %s421, 4
      %s423 = scalar_lea.vmem %s5, %s422
      %p424 = pneg %p178
      %p425 = pneg %p175
      %p426 = scmp.lt.s32.totalorder %s25, 24
      %s427 = scalar_select %p426, %s25, 24
      %s428 = smul.addr %s427, 8
      %s429 = smul.addr %s428, 8
      %s430 = scalar_lea.vmem %s6, %s429
      %p431 = pneg %p204
      %p432 = pneg %p201
      %p433 = scmp.lt.s32.totalorder %s25, 24
      %s434 = scalar_select %p433, %s25, 24
      %s435 = smul.addr %s434, 8
      %s436 = smul.addr %s435, 8
      %s437 = scalar_lea.vmem %s7, %s436
      %p438 = pneg %p230
      %p439 = pneg %p227
      %p440 = pneg %p251
      %p441 = pneg %p248
      %p442 = pneg %p272
      %p443 = pneg %p269
      %p444 = pneg %p300
      %p445 = pneg %p297
      %p446 = scmp.lt.s32.totalorder %s25, 24
      %s447 = scalar_select %p446, %s25, 24
      %p448 = scmp.lt.s32.totalorder %s26, 0
      %s449 = scalar_select %p448, %s26, 0
      %s450 = smul.addr %s447, 8
      %s451 = sadd.s32 %s449, %s450
      %s452 = smul.addr %s451, 8
      %s453 = scalar_lea.vmem %s10, %s452
      %p454 = scmp.lt.s32.totalorder %s25, 24
      %s455 = scalar_select %p454, %s25, 24
      %p456 = scmp.lt.s32.totalorder %s26, 0
      %s457 = scalar_select %p456, %s26, 0
      %s458 = sadd.s32 %s457, %s455
      %s459 = smul.addr %s458, 4
      %s460 = scalar_lea.vmem %s0, %s459
      %p461 = scmp.lt.s32.totalorder %s25, 24
      %s462 = scalar_select %p461, %s25, 24
      %s463 = smul.addr %s462, 8
      %s464 = smul.addr %s463, 8
      %s465 = scalar_lea.vmem %s1, %s464
      %p466 = scmp.lt.s32.totalorder %s25, 24
      %s467 = scalar_select %p466, %s25, 24
      %s468 = smul.addr %s467, 8
      %s469 = smul.addr %s468, 8
      %s470 = scalar_lea.vmem %s2, %s469
      %p471 = scmp.lt.s32.totalorder %s25, 24
      %s472 = scalar_select %p471, %s25, 24
      %p473 = scmp.lt.s32.totalorder %s26, 0
      %s474 = scalar_select %p473, %s26, 0
      %s475 = sadd.s32 %s474, %s472
      %s476 = smul.addr %s475, 4
      %s477 = scalar_lea.vmem %s5, %s476
      %p478 = scmp.lt.s32.totalorder %s25, 24
      %s479 = scalar_select %p478, %s25, 24
      %s480 = smul.addr %s479, 8
      %s481 = smul.addr %s480, 8
      %s482 = scalar_lea.vmem %s6, %s481
      %p483 = scmp.lt.s32.totalorder %s25, 24
      %s484 = scalar_select %p483, %s25, 24
      %s485 = smul.addr %s484, 8
      %s486 = smul.addr %s485, 8
      %s487 = scalar_lea.vmem %s7, %s486
      %p488 = scmp.lt.s32.totalorder %s25, 24
      %s489 = scalar_select %p488, %s25, 24
      %p490 = scmp.lt.s32.totalorder %s26, 0
      %s491 = scalar_select %p490, %s26, 0
      %s492 = smul.addr %s489, 8
      %s493 = sadd.s32 %s491, %s492
      %s494 = smul.addr %s493, 8
      %s495 = scalar_lea.vmem %s10, %s494
      %v496 = vld [vmem:[%s460] sm:$0x7]
      %v497 = vld [vmem:[%s465] sm:$0xff]
      %v498 = vld [vmem:[%s465 + $0x8] sm:$0xff]
      %v499 = vld [vmem:[%s465 + $0x10] sm:$0xff]
      %v500 = vld [vmem:[%s465 + $0x18] sm:$0xff]
      %v501 = vld [vmem:[%s465 + $0x20] sm:$0xff]
      %v502 = vld [vmem:[%s465 + $0x28] sm:$0xff]
      %v503 = vld [vmem:[%s465 + $0x30] sm:$0xff]
      %v504 = vld [vmem:[%s465 + $0x38] sm:$0xff]
      %v505 = vld [vmem:[%s470] sm:$0xff]
      %v506 = vld [vmem:[%s470 + $0x8] sm:$0xff]
      %v507 = vld [vmem:[%s470 + $0x10] sm:$0xff]
      %v508 = vld [vmem:[%s470 + $0x18] sm:$0xff]
      %v509 = vld [vmem:[%s470 + $0x20] sm:$0xff]
      %v510 = vld [vmem:[%s470 + $0x28] sm:$0xff]
      %v511 = vld [vmem:[%s470 + $0x30] sm:$0xff]
      %v512 = vld [vmem:[%s470 + $0x38] sm:$0xff]
      %514 = vset.pattern.permute.xlu0 0
      %515 = vperm.xlu0 %514, %v505
      %v516 = vpop.permute.xlu0 %515
      %519 = vset.pattern.permute.xlu0 0
      %520 = vperm.xlu0 %519, %v506
      %v521 = vpop.permute.xlu0 %520
      %524 = vset.pattern.permute.xlu0 0
      %525 = vperm.xlu0 %524, %v507
      %v526 = vpop.permute.xlu0 %525
      %529 = vset.pattern.permute.xlu0 0
      %530 = vperm.xlu0 %529, %v508
      %v531 = vpop.permute.xlu0 %530
      %534 = vset.pattern.permute.xlu0 0
      %535 = vperm.xlu0 %534, %v509
      %v536 = vpop.permute.xlu0 %535
      %539 = vset.pattern.permute.xlu0 0
      %540 = vperm.xlu0 %539, %v510
      %v541 = vpop.permute.xlu0 %540
      %544 = vset.pattern.permute.xlu0 0
      %545 = vperm.xlu0 %544, %v511
      %v546 = vpop.permute.xlu0 %545
      %549 = vset.pattern.permute.xlu0 0
      %550 = vperm.xlu0 %549, %v512
      %v551 = vpop.permute.xlu0 %550
      %vm553 = vcmask 23552
      %v555 = vsel %vm553, %v497, 0
      %v558 = vsel %vm553, %v498, 0
      %v561 = vsel %vm553, %v499, 0
      %v564 = vsel %vm553, %v500, 0
      %v567 = vsel %vm553, %v501, 0
      %v570 = vsel %vm553, %v502, 0
      %v573 = vsel %vm553, %v503, 0
      %v576 = vsel %vm553, %v504, 0
      %vm578 = vcmask 1042432
      %v580 = vsel %vm578, %v496, 0
      %582 = vmatpush.msra.mxu0 0.0
      %583 = vmatpush.msra.mxu0 0.0
      %584 = vmatpush.msra.mxu0 0.0
      %585 = vmatpush.msra.mxu0 0.0
      %586 = vmatpush.msra.mxu0 0.0
      %587 = vmatpush.msra.mxu0 0.0
      %588 = vmatpush.msra.mxu0 0.0
      %589 = vmatpush.msra.mxu0 0.0
      %590 = vmatpush.msra.mxu0 0.0
      %591 = vmatpush.msra.mxu0 0.0
      %592 = vmatpush.msra.mxu0 0.0
      %593 = vmatpush.msra.mxu0 0.0
      %594 = vmatpush.msra.mxu0 0.0
      %595 = vmatpush.msra.mxu0 0.0
      %596 = vmatpush.msra.mxu0 0.0
      %v597 = vand.u32 %v580, 4294901760
      %598 = vmatpush.msra.mxu0 %v597
      %v599 = vand.u32 %v555, 4294901760
      %v600 = vsub.f32 %v555, %v599
      %v601 = vand.u32 %v600, 4294901760
      %v602 = vsub.f32 %v600, %v601
      %v603 = vand.u32 %v602, 4294901760
      %604 = vmatmul.f32.gmra.mxu0 %v603
      %v605 = vpop.f32.mrf.mxu0
      %v606 = vadd.f32 %v516, %v605
      %v607 = vand.u32 %v558, 4294901760
      %v608 = vsub.f32 %v558, %v607
      %v609 = vand.u32 %v608, 4294901760
      %v610 = vsub.f32 %v608, %v609
      %v611 = vand.u32 %v610, 4294901760
      %612 = vmatmul.f32.gmra.mxu0 %v611
      %v613 = vpop.f32.mrf.mxu0
      %v614 = vadd.f32 %v521, %v613
      %v615 = vand.u32 %v561, 4294901760
      %v616 = vsub.f32 %v561, %v615
      %v617 = vand.u32 %v616, 4294901760
      %v618 = vsub.f32 %v616, %v617
      %v619 = vand.u32 %v618, 4294901760
      %620 = vmatmul.f32.gmra.mxu0 %v619
      %v621 = vpop.f32.mrf.mxu0
      %v622 = vadd.f32 %v526, %v621
      %v623 = vand.u32 %v564, 4294901760
      %v624 = vsub.f32 %v564, %v623
      %v625 = vand.u32 %v624, 4294901760
      %v626 = vsub.f32 %v624, %v625
      %v627 = vand.u32 %v626, 4294901760
      %628 = vmatmul.f32.gmra.mxu0 %v627
      %v629 = vpop.f32.mrf.mxu0
      %v630 = vadd.f32 %v531, %v629
      %v631 = vand.u32 %v567, 4294901760
      %v632 = vsub.f32 %v567, %v631
      %v633 = vand.u32 %v632, 4294901760
      %v634 = vsub.f32 %v632, %v633
      %v635 = vand.u32 %v634, 4294901760
      %636 = vmatmul.f32.gmra.mxu0 %v635
      %v637 = vpop.f32.mrf.mxu0
      %v638 = vadd.f32 %v536, %v637
      %v639 = vand.u32 %v570, 4294901760
      %v640 = vsub.f32 %v570, %v639
      %v641 = vand.u32 %v640, 4294901760
      %v642 = vsub.f32 %v640, %v641
      %v643 = vand.u32 %v642, 4294901760
      %644 = vmatmul.f32.gmra.mxu0 %v643
      %v645 = vpop.f32.mrf.mxu0
      %v646 = vadd.f32 %v541, %v645
      %v647 = vand.u32 %v573, 4294901760
      %v648 = vsub.f32 %v573, %v647
      %v649 = vand.u32 %v648, 4294901760
      %v650 = vsub.f32 %v648, %v649
      %v651 = vand.u32 %v650, 4294901760
      %652 = vmatmul.f32.gmra.mxu0 %v651
      %v653 = vpop.f32.mrf.mxu0
      %v654 = vadd.f32 %v546, %v653
      %v655 = vand.u32 %v576, 4294901760
      %v656 = vsub.f32 %v576, %v655
      %v657 = vand.u32 %v656, 4294901760
      %v658 = vsub.f32 %v656, %v657
      %v659 = vand.u32 %v658, 4294901760
      %660 = vmatmul.f32.gmra.mxu0 %v659
      %v661 = vpop.f32.mrf.mxu0
      %v662 = vadd.f32 %v551, %v661
      %663 = vdwg.mxu0
      %664 = vmatpush.msra.mxu0 0.0
      %665 = vmatpush.msra.mxu0 0.0
      %666 = vmatpush.msra.mxu0 0.0
      %667 = vmatpush.msra.mxu0 0.0
      %668 = vmatpush.msra.mxu0 0.0
      %669 = vmatpush.msra.mxu0 0.0
      %670 = vmatpush.msra.mxu0 0.0
      %671 = vmatpush.msra.mxu0 0.0
      %672 = vmatpush.msra.mxu0 0.0
      %673 = vmatpush.msra.mxu0 0.0
      %674 = vmatpush.msra.mxu0 0.0
      %675 = vmatpush.msra.mxu0 0.0
      %676 = vmatpush.msra.mxu0 0.0
      %677 = vmatpush.msra.mxu0 0.0
      %678 = vmatpush.msra.mxu0 0.0
      %v679 = vand.u32 %v580, 4294901760
      %v680 = vsub.f32 %v580, %v679
      %v681 = vand.u32 %v680, 4294901760
      %v682 = vsub.f32 %v680, %v681
      %v683 = vand.u32 %v682, 4294901760
      %684 = vmatpush.msra.mxu0 %v683
      %v685 = vand.u32 %v555, 4294901760
      %686 = vmatmul.f32.gmra.mxu0 %v685
      %v687 = vpop.f32.mrf.mxu0
      %v688 = vadd.f32 %v606, %v687
      %v689 = vand.u32 %v558, 4294901760
      %690 = vmatmul.f32.gmra.mxu0 %v689
      %v691 = vpop.f32.mrf.mxu0
      %v692 = vadd.f32 %v614, %v691
      %v693 = vand.u32 %v561, 4294901760
      %694 = vmatmul.f32.gmra.mxu0 %v693
      %v695 = vpop.f32.mrf.mxu0
      %v696 = vadd.f32 %v622, %v695
      %v697 = vand.u32 %v564, 4294901760
      %698 = vmatmul.f32.gmra.mxu0 %v697
      %v699 = vpop.f32.mrf.mxu0
      %v700 = vadd.f32 %v630, %v699
      %v701 = vand.u32 %v567, 4294901760
      %702 = vmatmul.f32.gmra.mxu0 %v701
      %v703 = vpop.f32.mrf.mxu0
      %v704 = vadd.f32 %v638, %v703
      %v705 = vand.u32 %v570, 4294901760
      %706 = vmatmul.f32.gmra.mxu0 %v705
      %v707 = vpop.f32.mrf.mxu0
      %v708 = vadd.f32 %v646, %v707
      %v709 = vand.u32 %v573, 4294901760
      %710 = vmatmul.f32.gmra.mxu0 %v709
      %v711 = vpop.f32.mrf.mxu0
      %v712 = vadd.f32 %v654, %v711
      %v713 = vand.u32 %v576, 4294901760
      %714 = vmatmul.f32.gmra.mxu0 %v713
      %v715 = vpop.f32.mrf.mxu0
      %v716 = vadd.f32 %v662, %v715
      %717 = vdwg.mxu0
      %718 = vmatpush.msra.mxu0 0.0
      %719 = vmatpush.msra.mxu0 0.0
      %720 = vmatpush.msra.mxu0 0.0
      %721 = vmatpush.msra.mxu0 0.0
      %722 = vmatpush.msra.mxu0 0.0
      %723 = vmatpush.msra.mxu0 0.0
      %724 = vmatpush.msra.mxu0 0.0
      %725 = vmatpush.msra.mxu0 0.0
      %726 = vmatpush.msra.mxu0 0.0
      %727 = vmatpush.msra.mxu0 0.0
      %728 = vmatpush.msra.mxu0 0.0
      %729 = vmatpush.msra.mxu0 0.0
      %730 = vmatpush.msra.mxu0 0.0
      %731 = vmatpush.msra.mxu0 0.0
      %732 = vmatpush.msra.mxu0 0.0
      %v733 = vand.u32 %v580, 4294901760
      %v734 = vsub.f32 %v580, %v733
      %735 = vmatpush.msra.mxu0 %v734
      %v736 = vand.u32 %v555, 4294901760
      %v737 = vsub.f32 %v555, %v736
      %738 = vmatmul.f32.gmra.mxu0 %v737
      %v739 = vpop.f32.mrf.mxu0
      %v740 = vadd.f32 %v688, %v739
      %v741 = vand.u32 %v558, 4294901760
      %v742 = vsub.f32 %v558, %v741
      %743 = vmatmul.f32.gmra.mxu0 %v742
      %v744 = vpop.f32.mrf.mxu0
      %v745 = vadd.f32 %v692, %v744
      %v746 = vand.u32 %v561, 4294901760
      %v747 = vsub.f32 %v561, %v746
      %748 = vmatmul.f32.gmra.mxu0 %v747
      %v749 = vpop.f32.mrf.mxu0
      %v750 = vadd.f32 %v696, %v749
      %v751 = vand.u32 %v564, 4294901760
      %v752 = vsub.f32 %v564, %v751
      %753 = vmatmul.f32.gmra.mxu0 %v752
      %v754 = vpop.f32.mrf.mxu0
      %v755 = vadd.f32 %v700, %v754
      %v756 = vand.u32 %v567, 4294901760
      %v757 = vsub.f32 %v567, %v756
      %758 = vmatmul.f32.gmra.mxu0 %v757
      %v759 = vpop.f32.mrf.mxu0
      %v760 = vadd.f32 %v704, %v759
      %v761 = vand.u32 %v570, 4294901760
      %v762 = vsub.f32 %v570, %v761
      %763 = vmatmul.f32.gmra.mxu0 %v762
      %v764 = vpop.f32.mrf.mxu0
      %v765 = vadd.f32 %v708, %v764
      %v766 = vand.u32 %v573, 4294901760
      %v767 = vsub.f32 %v573, %v766
      %768 = vmatmul.f32.gmra.mxu0 %v767
      %v769 = vpop.f32.mrf.mxu0
      %v770 = vadd.f32 %v712, %v769
      %v771 = vand.u32 %v576, 4294901760
      %v772 = vsub.f32 %v576, %v771
      %773 = vmatmul.f32.gmra.mxu0 %v772
      %v774 = vpop.f32.mrf.mxu0
      %v775 = vadd.f32 %v716, %v774
      %776 = vdwg.mxu0
      %777 = vmatpush.msra.mxu0 0.0
      %778 = vmatpush.msra.mxu0 0.0
      %779 = vmatpush.msra.mxu0 0.0
      %780 = vmatpush.msra.mxu0 0.0
      %781 = vmatpush.msra.mxu0 0.0
      %782 = vmatpush.msra.mxu0 0.0
      %783 = vmatpush.msra.mxu0 0.0
      %784 = vmatpush.msra.mxu0 0.0
      %785 = vmatpush.msra.mxu0 0.0
      %786 = vmatpush.msra.mxu0 0.0
      %787 = vmatpush.msra.mxu0 0.0
      %788 = vmatpush.msra.mxu0 0.0
      %789 = vmatpush.msra.mxu0 0.0
      %790 = vmatpush.msra.mxu0 0.0
      %791 = vmatpush.msra.mxu0 0.0
      %v792 = vand.u32 %v580, 4294901760
      %793 = vmatpush.msra.mxu0 %v792
      %v794 = vand.u32 %v555, 4294901760
      %v795 = vsub.f32 %v555, %v794
      %v796 = vand.u32 %v795, 4294901760
      %797 = vmatmul.f32.gmra.mxu0 %v796
      %v798 = vpop.f32.mrf.mxu0
      %v799 = vadd.f32 %v740, %v798
      %v800 = vand.u32 %v558, 4294901760
      %v801 = vsub.f32 %v558, %v800
      %v802 = vand.u32 %v801, 4294901760
      %803 = vmatmul.f32.gmra.mxu0 %v802
      %v804 = vpop.f32.mrf.mxu0
      %v805 = vadd.f32 %v745, %v804
      %v806 = vand.u32 %v561, 4294901760
      %v807 = vsub.f32 %v561, %v806
      %v808 = vand.u32 %v807, 4294901760
      %809 = vmatmul.f32.gmra.mxu0 %v808
      %v810 = vpop.f32.mrf.mxu0
      %v811 = vadd.f32 %v750, %v810
      %v812 = vand.u32 %v564, 4294901760
      %v813 = vsub.f32 %v564, %v812
      %v814 = vand.u32 %v813, 4294901760
      %815 = vmatmul.f32.gmra.mxu0 %v814
      %v816 = vpop.f32.mrf.mxu0
      %v817 = vadd.f32 %v755, %v816
      %v818 = vand.u32 %v567, 4294901760
      %v819 = vsub.f32 %v567, %v818
      %v820 = vand.u32 %v819, 4294901760
      %821 = vmatmul.f32.gmra.mxu0 %v820
      %v822 = vpop.f32.mrf.mxu0
      %v823 = vadd.f32 %v760, %v822
      %v824 = vand.u32 %v570, 4294901760
      %v825 = vsub.f32 %v570, %v824
      %v826 = vand.u32 %v825, 4294901760
      %827 = vmatmul.f32.gmra.mxu0 %v826
      %v828 = vpop.f32.mrf.mxu0
      %v829 = vadd.f32 %v765, %v828
      %v830 = vand.u32 %v573, 4294901760
      %v831 = vsub.f32 %v573, %v830
      %v832 = vand.u32 %v831, 4294901760
      %833 = vmatmul.f32.gmra.mxu0 %v832
      %v834 = vpop.f32.mrf.mxu0
      %v835 = vadd.f32 %v770, %v834
      %v836 = vand.u32 %v576, 4294901760
      %v837 = vsub.f32 %v576, %v836
      %v838 = vand.u32 %v837, 4294901760
      %839 = vmatmul.f32.gmra.mxu0 %v838
      %v840 = vpop.f32.mrf.mxu0
      %v841 = vadd.f32 %v775, %v840
      %842 = vdwg.mxu0
      %843 = vmatpush.msra.mxu0 0.0
      %844 = vmatpush.msra.mxu0 0.0
      %845 = vmatpush.msra.mxu0 0.0
      %846 = vmatpush.msra.mxu0 0.0
      %847 = vmatpush.msra.mxu0 0.0
      %848 = vmatpush.msra.mxu0 0.0
      %849 = vmatpush.msra.mxu0 0.0
      %850 = vmatpush.msra.mxu0 0.0
      %851 = vmatpush.msra.mxu0 0.0
      %852 = vmatpush.msra.mxu0 0.0
      %853 = vmatpush.msra.mxu0 0.0
      %854 = vmatpush.msra.mxu0 0.0
      %855 = vmatpush.msra.mxu0 0.0
      %856 = vmatpush.msra.mxu0 0.0
      %857 = vmatpush.msra.mxu0 0.0
      %v858 = vand.u32 %v580, 4294901760
      %v859 = vsub.f32 %v580, %v858
      %v860 = vand.u32 %v859, 4294901760
      %861 = vmatpush.msra.mxu0 %v860
      %v862 = vand.u32 %v555, 4294901760
      %863 = vmatmul.f32.gmra.mxu0 %v862
      %v864 = vpop.f32.mrf.mxu0
      %v865 = vadd.f32 %v799, %v864
      %v866 = vand.u32 %v558, 4294901760
      %867 = vmatmul.f32.gmra.mxu0 %v866
      %v868 = vpop.f32.mrf.mxu0
      %v869 = vadd.f32 %v805, %v868
      %v870 = vand.u32 %v561, 4294901760
      %871 = vmatmul.f32.gmra.mxu0 %v870
      %v872 = vpop.f32.mrf.mxu0
      %v873 = vadd.f32 %v811, %v872
      %v874 = vand.u32 %v564, 4294901760
      %875 = vmatmul.f32.gmra.mxu0 %v874
      %v876 = vpop.f32.mrf.mxu0
      %v877 = vadd.f32 %v817, %v876
      %v878 = vand.u32 %v567, 4294901760
      %879 = vmatmul.f32.gmra.mxu0 %v878
      %v880 = vpop.f32.mrf.mxu0
      %v881 = vadd.f32 %v823, %v880
      %v882 = vand.u32 %v570, 4294901760
      %883 = vmatmul.f32.gmra.mxu0 %v882
      %v884 = vpop.f32.mrf.mxu0
      %v885 = vadd.f32 %v829, %v884
      %v886 = vand.u32 %v573, 4294901760
      %887 = vmatmul.f32.gmra.mxu0 %v886
      %v888 = vpop.f32.mrf.mxu0
      %v889 = vadd.f32 %v835, %v888
      %v890 = vand.u32 %v576, 4294901760
      %891 = vmatmul.f32.gmra.mxu0 %v890
      %v892 = vpop.f32.mrf.mxu0
      %v893 = vadd.f32 %v841, %v892
      %894 = vdwg.mxu0
      %895 = vmatpush.msra.mxu0 0.0
      %896 = vmatpush.msra.mxu0 0.0
      %897 = vmatpush.msra.mxu0 0.0
      %898 = vmatpush.msra.mxu0 0.0
      %899 = vmatpush.msra.mxu0 0.0
      %900 = vmatpush.msra.mxu0 0.0
      %901 = vmatpush.msra.mxu0 0.0
      %902 = vmatpush.msra.mxu0 0.0
      %903 = vmatpush.msra.mxu0 0.0
      %904 = vmatpush.msra.mxu0 0.0
      %905 = vmatpush.msra.mxu0 0.0
      %906 = vmatpush.msra.mxu0 0.0
      %907 = vmatpush.msra.mxu0 0.0
      %908 = vmatpush.msra.mxu0 0.0
      %909 = vmatpush.msra.mxu0 0.0
      %v910 = vand.u32 %v580, 4294901760
      %911 = vmatpush.msra.mxu0 %v910
      %v912 = vand.u32 %v555, 4294901760
      %913 = vmatmul.f32.gmra.mxu0 %v912
      %v914 = vpop.f32.mrf.mxu0
      %v915 = vadd.f32 %v865, %v914
      %v916 = vand.u32 %v558, 4294901760
      %917 = vmatmul.f32.gmra.mxu0 %v916
      %v918 = vpop.f32.mrf.mxu0
      %v919 = vadd.f32 %v869, %v918
      %v920 = vand.u32 %v561, 4294901760
      %921 = vmatmul.f32.gmra.mxu0 %v920
      %v922 = vpop.f32.mrf.mxu0
      %v923 = vadd.f32 %v873, %v922
      %v924 = vand.u32 %v564, 4294901760
      %925 = vmatmul.f32.gmra.mxu0 %v924
      %v926 = vpop.f32.mrf.mxu0
      %v927 = vadd.f32 %v877, %v926
      %v928 = vand.u32 %v567, 4294901760
      %929 = vmatmul.f32.gmra.mxu0 %v928
      %v930 = vpop.f32.mrf.mxu0
      %v931 = vadd.f32 %v881, %v930
      %v932 = vand.u32 %v570, 4294901760
      %933 = vmatmul.f32.gmra.mxu0 %v932
      %v934 = vpop.f32.mrf.mxu0
      %v935 = vadd.f32 %v885, %v934
      %v936 = vand.u32 %v573, 4294901760
      %937 = vmatmul.f32.gmra.mxu0 %v936
      %v938 = vpop.f32.mrf.mxu0
      %v939 = vadd.f32 %v889, %v938
      %v940 = vand.u32 %v576, 4294901760
      %941 = vmatmul.f32.gmra.mxu0 %v940
      %v942 = vpop.f32.mrf.mxu0
      %v943 = vadd.f32 %v893, %v942
      %944 = vdwg.mxu0
      %v945 = vmax.f32 %v915, 0.0
      %v946 = vmax.f32 %v919, 0.0
      %v947 = vmax.f32 %v923, 0.0
      %v948 = vmax.f32 %v927, 0.0
      %v949 = vmax.f32 %v931, 0.0
      %v950 = vmax.f32 %v935, 0.0
      %v951 = vmax.f32 %v939, 0.0
      %v952 = vmax.f32 %v943, 0.0
      %v953 = vld [vmem:[%s3] sm:$0xff]
      %v954 = vld [vmem:[%s3 + $0x8] sm:$0xff]
      %v955 = vld [vmem:[%s3 + $0x10] sm:$0xff]
      %v956 = vld [vmem:[%s3 + $0x18] sm:$0xff]
      %v957 = vld [vmem:[%s3 + $0x20] sm:$0xff]
      %v958 = vld [vmem:[%s3 + $0x28] sm:$0xff]
      %v959 = vld [vmem:[%s3 + $0x30] sm:$0xff]
      %v960 = vld [vmem:[%s3 + $0x38] sm:$0xff]
      %v961 = vld [vmem:[%s4] sm:$0xff]
      %v962 = vld [vmem:[%s4 + $0x8] sm:$0xff]
      %v963 = vld [vmem:[%s4 + $0x10] sm:$0xff]
      %v964 = vld [vmem:[%s4 + $0x18] sm:$0xff]
      %v965 = vld [vmem:[%s4 + $0x20] sm:$0xff]
      %v966 = vld [vmem:[%s4 + $0x28] sm:$0xff]
      %v967 = vld [vmem:[%s4 + $0x30] sm:$0xff]
      %v968 = vld [vmem:[%s4 + $0x38] sm:$0xff]
      %970 = vset.pattern.permute.xlu0 0
      %971 = vperm.xlu0 %970, %v961
      %v972 = vpop.permute.xlu0 %971
      %975 = vset.pattern.permute.xlu0 0
      %976 = vperm.xlu0 %975, %v962
      %v977 = vpop.permute.xlu0 %976
      %980 = vset.pattern.permute.xlu0 0
      %981 = vperm.xlu0 %980, %v963
      %v982 = vpop.permute.xlu0 %981
      %985 = vset.pattern.permute.xlu0 0
      %986 = vperm.xlu0 %985, %v964
      %v987 = vpop.permute.xlu0 %986
      %990 = vset.pattern.permute.xlu0 0
      %991 = vperm.xlu0 %990, %v965
      %v992 = vpop.permute.xlu0 %991
      %995 = vset.pattern.permute.xlu0 0
      %996 = vperm.xlu0 %995, %v966
      %v997 = vpop.permute.xlu0 %996
      %1000 = vset.pattern.permute.xlu0 0
      %1001 = vperm.xlu0 %1000, %v967
      %v1002 = vpop.permute.xlu0 %1001
      %1005 = vset.pattern.permute.xlu0 0
      %1006 = vperm.xlu0 %1005, %v968
      %v1007 = vpop.permute.xlu0 %1006
      %vm1009 = vcmask 523264
      %v1011 = vsel %vm1009, %v953, 0
      %v1014 = vsel %vm1009, %v954, 0
      %v1017 = vsel %vm1009, %v955, 0
      %v1020 = vsel %vm1009, %v956, 0
      %v1023 = vsel %vm1009, %v957, 0
      %v1026 = vsel %vm1009, %v958, 0
      %v1029 = vsel %vm1009, %v959, 0
      %v1032 = vsel %vm1009, %v960, 0
      %1034 = vmatpush.msra.mxu0 0.0
      %1035 = vmatpush.msra.mxu0 0.0
      %1036 = vmatpush.msra.mxu0 0.0
      %1037 = vmatpush.msra.mxu0 0.0
      %1038 = vmatpush.msra.mxu0 0.0
      %1039 = vmatpush.msra.mxu0 0.0
      %1040 = vmatpush.msra.mxu0 0.0
      %1041 = vmatpush.msra.mxu0 0.0
      %v1042 = vand.u32 %v952, 4294901760
      %1043 = vmatpush.msra.mxu0 %v1042
      %v1044 = vand.u32 %v951, 4294901760
      %1045 = vmatpush.msra.mxu0 %v1044
      %v1046 = vand.u32 %v950, 4294901760
      %1047 = vmatpush.msra.mxu0 %v1046
      %v1048 = vand.u32 %v949, 4294901760
      %1049 = vmatpush.msra.mxu0 %v1048
      %v1050 = vand.u32 %v948, 4294901760
      %1051 = vmatpush.msra.mxu0 %v1050
      %v1052 = vand.u32 %v947, 4294901760
      %1053 = vmatpush.msra.mxu0 %v1052
      %v1054 = vand.u32 %v946, 4294901760
      %1055 = vmatpush.msra.mxu0 %v1054
      %v1056 = vand.u32 %v945, 4294901760
      %1057 = vmatpush.msra.mxu0 %v1056
      %v1058 = vand.u32 %v1011, 4294901760
      %v1059 = vsub.f32 %v1011, %v1058
      %v1060 = vand.u32 %v1059, 4294901760
      %v1061 = vsub.f32 %v1059, %v1060
      %v1062 = vand.u32 %v1061, 4294901760
      %1063 = vmatmul.f32.gmra.mxu0 %v1062
      %v1064 = vpop.f32.mrf.mxu0
      %v1065 = vadd.f32 %v972, %v1064
      %v1066 = vand.u32 %v1014, 4294901760
      %v1067 = vsub.f32 %v1014, %v1066
      %v1068 = vand.u32 %v1067, 4294901760
      %v1069 = vsub.f32 %v1067, %v1068
      %v1070 = vand.u32 %v1069, 4294901760
      %1071 = vmatmul.f32.gmra.mxu0 %v1070
      %v1072 = vpop.f32.mrf.mxu0
      %v1073 = vadd.f32 %v977, %v1072
      %v1074 = vand.u32 %v1017, 4294901760
      %v1075 = vsub.f32 %v1017, %v1074
      %v1076 = vand.u32 %v1075, 4294901760
      %v1077 = vsub.f32 %v1075, %v1076
      %v1078 = vand.u32 %v1077, 4294901760
      %1079 = vmatmul.f32.gmra.mxu0 %v1078
      %v1080 = vpop.f32.mrf.mxu0
      %v1081 = vadd.f32 %v982, %v1080
      %v1082 = vand.u32 %v1020, 4294901760
      %v1083 = vsub.f32 %v1020, %v1082
      %v1084 = vand.u32 %v1083, 4294901760
      %v1085 = vsub.f32 %v1083, %v1084
      %v1086 = vand.u32 %v1085, 4294901760
      %1087 = vmatmul.f32.gmra.mxu0 %v1086
      %v1088 = vpop.f32.mrf.mxu0
      %v1089 = vadd.f32 %v987, %v1088
      %v1090 = vand.u32 %v1023, 4294901760
      %v1091 = vsub.f32 %v1023, %v1090
      %v1092 = vand.u32 %v1091, 4294901760
      %v1093 = vsub.f32 %v1091, %v1092
      %v1094 = vand.u32 %v1093, 4294901760
      %1095 = vmatmul.f32.gmra.mxu0 %v1094
      %v1096 = vpop.f32.mrf.mxu0
      %v1097 = vadd.f32 %v992, %v1096
      %v1098 = vand.u32 %v1026, 4294901760
      %v1099 = vsub.f32 %v1026, %v1098
      %v1100 = vand.u32 %v1099, 4294901760
      %v1101 = vsub.f32 %v1099, %v1100
      %v1102 = vand.u32 %v1101, 4294901760
      %1103 = vmatmul.f32.gmra.mxu0 %v1102
      %v1104 = vpop.f32.mrf.mxu0
      %v1105 = vadd.f32 %v997, %v1104
      %v1106 = vand.u32 %v1029, 4294901760
      %v1107 = vsub.f32 %v1029, %v1106
      %v1108 = vand.u32 %v1107, 4294901760
      %v1109 = vsub.f32 %v1107, %v1108
      %v1110 = vand.u32 %v1109, 4294901760
      %1111 = vmatmul.f32.gmra.mxu0 %v1110
      %v1112 = vpop.f32.mrf.mxu0
      %v1113 = vadd.f32 %v1002, %v1112
      %v1114 = vand.u32 %v1032, 4294901760
      %v1115 = vsub.f32 %v1032, %v1114
      %v1116 = vand.u32 %v1115, 4294901760
      %v1117 = vsub.f32 %v1115, %v1116
      %v1118 = vand.u32 %v1117, 4294901760
      %1119 = vmatmul.f32.gmra.mxu0 %v1118
      %v1120 = vpop.f32.mrf.mxu0
      %v1121 = vadd.f32 %v1007, %v1120
      %1122 = vdwg.mxu0
      %1123 = vmatpush.msra.mxu0 0.0
      %1124 = vmatpush.msra.mxu0 0.0
      %1125 = vmatpush.msra.mxu0 0.0
      %1126 = vmatpush.msra.mxu0 0.0
      %1127 = vmatpush.msra.mxu0 0.0
      %1128 = vmatpush.msra.mxu0 0.0
      %1129 = vmatpush.msra.mxu0 0.0
      %1130 = vmatpush.msra.mxu0 0.0
      %v1131 = vand.u32 %v952, 4294901760
      %v1132 = vsub.f32 %v952, %v1131
      %v1133 = vand.u32 %v1132, 4294901760
      %v1134 = vsub.f32 %v1132, %v1133
      %v1135 = vand.u32 %v1134, 4294901760
      %1136 = vmatpush.msra.mxu0 %v1135
      %v1137 = vand.u32 %v951, 4294901760
      %v1138 = vsub.f32 %v951, %v1137
      %v1139 = vand.u32 %v1138, 4294901760
      %v1140 = vsub.f32 %v1138, %v1139
      %v1141 = vand.u32 %v1140, 4294901760
      %1142 = vmatpush.msra.mxu0 %v1141
      %v1143 = vand.u32 %v950, 4294901760
      %v1144 = vsub.f32 %v950, %v1143
      %v1145 = vand.u32 %v1144, 4294901760
      %v1146 = vsub.f32 %v1144, %v1145
      %v1147 = vand.u32 %v1146, 4294901760
      %1148 = vmatpush.msra.mxu0 %v1147
      %v1149 = vand.u32 %v949, 4294901760
      %v1150 = vsub.f32 %v949, %v1149
      %v1151 = vand.u32 %v1150, 4294901760
      %v1152 = vsub.f32 %v1150, %v1151
      %v1153 = vand.u32 %v1152, 4294901760
      %1154 = vmatpush.msra.mxu0 %v1153
      %v1155 = vand.u32 %v948, 4294901760
      %v1156 = vsub.f32 %v948, %v1155
      %v1157 = vand.u32 %v1156, 4294901760
      %v1158 = vsub.f32 %v1156, %v1157
      %v1159 = vand.u32 %v1158, 4294901760
      %1160 = vmatpush.msra.mxu0 %v1159
      %v1161 = vand.u32 %v947, 4294901760
      %v1162 = vsub.f32 %v947, %v1161
      %v1163 = vand.u32 %v1162, 4294901760
      %v1164 = vsub.f32 %v1162, %v1163
      %v1165 = vand.u32 %v1164, 4294901760
      %1166 = vmatpush.msra.mxu0 %v1165
      %v1167 = vand.u32 %v946, 4294901760
      %v1168 = vsub.f32 %v946, %v1167
      %v1169 = vand.u32 %v1168, 4294901760
      %v1170 = vsub.f32 %v1168, %v1169
      %v1171 = vand.u32 %v1170, 4294901760
      %1172 = vmatpush.msra.mxu0 %v1171
      %v1173 = vand.u32 %v945, 4294901760
      %v1174 = vsub.f32 %v945, %v1173
      %v1175 = vand.u32 %v1174, 4294901760
      %v1176 = vsub.f32 %v1174, %v1175
      %v1177 = vand.u32 %v1176, 4294901760
      %1178 = vmatpush.msra.mxu0 %v1177
      %v1179 = vand.u32 %v1011, 4294901760
      %1180 = vmatmul.f32.gmra.mxu0 %v1179
      %v1181 = vpop.f32.mrf.mxu0
      %v1182 = vadd.f32 %v1065, %v1181
      %v1183 = vand.u32 %v1014, 4294901760
      %1184 = vmatmul.f32.gmra.mxu0 %v1183
      %v1185 = vpop.f32.mrf.mxu0
      %v1186 = vadd.f32 %v1073, %v1185
      %v1187 = vand.u32 %v1017, 4294901760
      %1188 = vmatmul.f32.gmra.mxu0 %v1187
      %v1189 = vpop.f32.mrf.mxu0
      %v1190 = vadd.f32 %v1081, %v1189
      %v1191 = vand.u32 %v1020, 4294901760
      %1192 = vmatmul.f32.gmra.mxu0 %v1191
      %v1193 = vpop.f32.mrf.mxu0
      %v1194 = vadd.f32 %v1089, %v1193
      %v1195 = vand.u32 %v1023, 4294901760
      %1196 = vmatmul.f32.gmra.mxu0 %v1195
      %v1197 = vpop.f32.mrf.mxu0
      %v1198 = vadd.f32 %v1097, %v1197
      %v1199 = vand.u32 %v1026, 4294901760
      %1200 = vmatmul.f32.gmra.mxu0 %v1199
      %v1201 = vpop.f32.mrf.mxu0
      %v1202 = vadd.f32 %v1105, %v1201
      %v1203 = vand.u32 %v1029, 4294901760
      %1204 = vmatmul.f32.gmra.mxu0 %v1203
      %v1205 = vpop.f32.mrf.mxu0
      %v1206 = vadd.f32 %v1113, %v1205
      %v1207 = vand.u32 %v1032, 4294901760
      %1208 = vmatmul.f32.gmra.mxu0 %v1207
      %v1209 = vpop.f32.mrf.mxu0
      %v1210 = vadd.f32 %v1121, %v1209
      %1211 = vdwg.mxu0
      %1212 = vmatpush.msra.mxu0 0.0
      %1213 = vmatpush.msra.mxu0 0.0
      %1214 = vmatpush.msra.mxu0 0.0
      %1215 = vmatpush.msra.mxu0 0.0
      %1216 = vmatpush.msra.mxu0 0.0
      %1217 = vmatpush.msra.mxu0 0.0
      %1218 = vmatpush.msra.mxu0 0.0
      %1219 = vmatpush.msra.mxu0 0.0
      %v1220 = vand.u32 %v952, 4294901760
      %v1221 = vsub.f32 %v952, %v1220
      %1222 = vmatpush.msra.mxu0 %v1221
      %v1223 = vand.u32 %v951, 4294901760
      %v1224 = vsub.f32 %v951, %v1223
      %1225 = vmatpush.msra.mxu0 %v1224
      %v1226 = vand.u32 %v950, 4294901760
      %v1227 = vsub.f32 %v950, %v1226
      %1228 = vmatpush.msra.mxu0 %v1227
      %v1229 = vand.u32 %v949, 4294901760
      %v1230 = vsub.f32 %v949, %v1229
      %1231 = vmatpush.msra.mxu0 %v1230
      %v1232 = vand.u32 %v948, 4294901760
      %v1233 = vsub.f32 %v948, %v1232
      %1234 = vmatpush.msra.mxu0 %v1233
      %v1235 = vand.u32 %v947, 4294901760
      %v1236 = vsub.f32 %v947, %v1235
      %1237 = vmatpush.msra.mxu0 %v1236
      %v1238 = vand.u32 %v946, 4294901760
      %v1239 = vsub.f32 %v946, %v1238
      %1240 = vmatpush.msra.mxu0 %v1239
      %v1241 = vand.u32 %v945, 4294901760
      %v1242 = vsub.f32 %v945, %v1241
      %1243 = vmatpush.msra.mxu0 %v1242
      %v1244 = vand.u32 %v1011, 4294901760
      %v1245 = vsub.f32 %v1011, %v1244
      %1246 = vmatmul.f32.gmra.mxu0 %v1245
      %v1247 = vpop.f32.mrf.mxu0
      %v1248 = vadd.f32 %v1182, %v1247
      %v1249 = vand.u32 %v1014, 4294901760
      %v1250 = vsub.f32 %v1014, %v1249
      %1251 = vmatmul.f32.gmra.mxu0 %v1250
      %v1252 = vpop.f32.mrf.mxu0
      %v1253 = vadd.f32 %v1186, %v1252
      %v1254 = vand.u32 %v1017, 4294901760
      %v1255 = vsub.f32 %v1017, %v1254
      %1256 = vmatmul.f32.gmra.mxu0 %v1255
      %v1257 = vpop.f32.mrf.mxu0
      %v1258 = vadd.f32 %v1190, %v1257
      %v1259 = vand.u32 %v1020, 4294901760
      %v1260 = vsub.f32 %v1020, %v1259
      %1261 = vmatmul.f32.gmra.mxu0 %v1260
      %v1262 = vpop.f32.mrf.mxu0
      %v1263 = vadd.f32 %v1194, %v1262
      %v1264 = vand.u32 %v1023, 4294901760
      %v1265 = vsub.f32 %v1023, %v1264
      %1266 = vmatmul.f32.gmra.mxu0 %v1265
      %v1267 = vpop.f32.mrf.mxu0
      %v1268 = vadd.f32 %v1198, %v1267
      %v1269 = vand.u32 %v1026, 4294901760
      %v1270 = vsub.f32 %v1026, %v1269
      %1271 = vmatmul.f32.gmra.mxu0 %v1270
      %v1272 = vpop.f32.mrf.mxu0
      %v1273 = vadd.f32 %v1202, %v1272
      %v1274 = vand.u32 %v1029, 4294901760
      %v1275 = vsub.f32 %v1029, %v1274
      %1276 = vmatmul.f32.gmra.mxu0 %v1275
      %v1277 = vpop.f32.mrf.mxu0
      %v1278 = vadd.f32 %v1206, %v1277
      %v1279 = vand.u32 %v1032, 4294901760
      %v1280 = vsub.f32 %v1032, %v1279
      %1281 = vmatmul.f32.gmra.mxu0 %v1280
      %v1282 = vpop.f32.mrf.mxu0
      %v1283 = vadd.f32 %v1210, %v1282
      %1284 = vdwg.mxu0
      %1285 = vmatpush.msra.mxu0 0.0
      %1286 = vmatpush.msra.mxu0 0.0
      %1287 = vmatpush.msra.mxu0 0.0
      %1288 = vmatpush.msra.mxu0 0.0
      %1289 = vmatpush.msra.mxu0 0.0
      %1290 = vmatpush.msra.mxu0 0.0
      %1291 = vmatpush.msra.mxu0 0.0
      %1292 = vmatpush.msra.mxu0 0.0
      %v1293 = vand.u32 %v952, 4294901760
      %1294 = vmatpush.msra.mxu0 %v1293
      %v1295 = vand.u32 %v951, 4294901760
      %1296 = vmatpush.msra.mxu0 %v1295
      %v1297 = vand.u32 %v950, 4294901760
      %1298 = vmatpush.msra.mxu0 %v1297
      %v1299 = vand.u32 %v949, 4294901760
      %1300 = vmatpush.msra.mxu0 %v1299
      %v1301 = vand.u32 %v948, 4294901760
      %1302 = vmatpush.msra.mxu0 %v1301
      %v1303 = vand.u32 %v947, 4294901760
      %1304 = vmatpush.msra.mxu0 %v1303
      %v1305 = vand.u32 %v946, 4294901760
      %1306 = vmatpush.msra.mxu0 %v1305
      %v1307 = vand.u32 %v945, 4294901760
      %1308 = vmatpush.msra.mxu0 %v1307
      %v1309 = vand.u32 %v1011, 4294901760
      %v1310 = vsub.f32 %v1011, %v1309
      %v1311 = vand.u32 %v1310, 4294901760
      %1312 = vmatmul.f32.gmra.mxu0 %v1311
      %v1313 = vpop.f32.mrf.mxu0
      %v1314 = vadd.f32 %v1248, %v1313
      %v1315 = vand.u32 %v1014, 4294901760
      %v1316 = vsub.f32 %v1014, %v1315
      %v1317 = vand.u32 %v1316, 4294901760
      %1318 = vmatmul.f32.gmra.mxu0 %v1317
      %v1319 = vpop.f32.mrf.mxu0
      %v1320 = vadd.f32 %v1253, %v1319
      %v1321 = vand.u32 %v1017, 4294901760
      %v1322 = vsub.f32 %v1017, %v1321
      %v1323 = vand.u32 %v1322, 4294901760
      %1324 = vmatmul.f32.gmra.mxu0 %v1323
      %v1325 = vpop.f32.mrf.mxu0
      %v1326 = vadd.f32 %v1258, %v1325
      %v1327 = vand.u32 %v1020, 4294901760
      %v1328 = vsub.f32 %v1020, %v1327
      %v1329 = vand.u32 %v1328, 4294901760
      %1330 = vmatmul.f32.gmra.mxu0 %v1329
      %v1331 = vpop.f32.mrf.mxu0
      %v1332 = vadd.f32 %v1263, %v1331
      %v1333 = vand.u32 %v1023, 4294901760
      %v1334 = vsub.f32 %v1023, %v1333
      %v1335 = vand.u32 %v1334, 4294901760
      %1336 = vmatmul.f32.gmra.mxu0 %v1335
      %v1337 = vpop.f32.mrf.mxu0
      %v1338 = vadd.f32 %v1268, %v1337
      %v1339 = vand.u32 %v1026, 4294901760
      %v1340 = vsub.f32 %v1026, %v1339
      %v1341 = vand.u32 %v1340, 4294901760
      %1342 = vmatmul.f32.gmra.mxu0 %v1341
      %v1343 = vpop.f32.mrf.mxu0
      %v1344 = vadd.f32 %v1273, %v1343
      %v1345 = vand.u32 %v1029, 4294901760
      %v1346 = vsub.f32 %v1029, %v1345
      %v1347 = vand.u32 %v1346, 4294901760
      %1348 = vmatmul.f32.gmra.mxu0 %v1347
      %v1349 = vpop.f32.mrf.mxu0
      %v1350 = vadd.f32 %v1278, %v1349
      %v1351 = vand.u32 %v1032, 4294901760
      %v1352 = vsub.f32 %v1032, %v1351
      %v1353 = vand.u32 %v1352, 4294901760
      %1354 = vmatmul.f32.gmra.mxu0 %v1353
      %v1355 = vpop.f32.mrf.mxu0
      %v1356 = vadd.f32 %v1283, %v1355
      %1357 = vdwg.mxu0
      %1358 = vmatpush.msra.mxu0 0.0
      %1359 = vmatpush.msra.mxu0 0.0
      %1360 = vmatpush.msra.mxu0 0.0
      %1361 = vmatpush.msra.mxu0 0.0
      %1362 = vmatpush.msra.mxu0 0.0
      %1363 = vmatpush.msra.mxu0 0.0
      %1364 = vmatpush.msra.mxu0 0.0
      %1365 = vmatpush.msra.mxu0 0.0
      %v1366 = vand.u32 %v952, 4294901760
      %v1367 = vsub.f32 %v952, %v1366
      %v1368 = vand.u32 %v1367, 4294901760
      %1369 = vmatpush.msra.mxu0 %v1368
      %v1370 = vand.u32 %v951, 4294901760
      %v1371 = vsub.f32 %v951, %v1370
      %v1372 = vand.u32 %v1371, 4294901760
      %1373 = vmatpush.msra.mxu0 %v1372
      %v1374 = vand.u32 %v950, 4294901760
      %v1375 = vsub.f32 %v950, %v1374
      %v1376 = vand.u32 %v1375, 4294901760
      %1377 = vmatpush.msra.mxu0 %v1376
      %v1378 = vand.u32 %v949, 4294901760
      %v1379 = vsub.f32 %v949, %v1378
      %v1380 = vand.u32 %v1379, 4294901760
      %1381 = vmatpush.msra.mxu0 %v1380
      %v1382 = vand.u32 %v948, 4294901760
      %v1383 = vsub.f32 %v948, %v1382
      %v1384 = vand.u32 %v1383, 4294901760
      %1385 = vmatpush.msra.mxu0 %v1384
      %v1386 = vand.u32 %v947, 4294901760
      %v1387 = vsub.f32 %v947, %v1386
      %v1388 = vand.u32 %v1387, 4294901760
      %1389 = vmatpush.msra.mxu0 %v1388
      %v1390 = vand.u32 %v946, 4294901760
      %v1391 = vsub.f32 %v946, %v1390
      %v1392 = vand.u32 %v1391, 4294901760
      %1393 = vmatpush.msra.mxu0 %v1392
      %v1394 = vand.u32 %v945, 4294901760
      %v1395 = vsub.f32 %v945, %v1394
      %v1396 = vand.u32 %v1395, 4294901760
      %1397 = vmatpush.msra.mxu0 %v1396
      %v1398 = vand.u32 %v1011, 4294901760
      %1399 = vmatmul.f32.gmra.mxu0 %v1398
      %v1400 = vpop.f32.mrf.mxu0
      %v1401 = vadd.f32 %v1314, %v1400
      %v1402 = vand.u32 %v1014, 4294901760
      %1403 = vmatmul.f32.gmra.mxu0 %v1402
      %v1404 = vpop.f32.mrf.mxu0
      %v1405 = vadd.f32 %v1320, %v1404
      %v1406 = vand.u32 %v1017, 4294901760
      %1407 = vmatmul.f32.gmra.mxu0 %v1406
      %v1408 = vpop.f32.mrf.mxu0
      %v1409 = vadd.f32 %v1326, %v1408
      %v1410 = vand.u32 %v1020, 4294901760
      %1411 = vmatmul.f32.gmra.mxu0 %v1410
      %v1412 = vpop.f32.mrf.mxu0
      %v1413 = vadd.f32 %v1332, %v1412
      %v1414 = vand.u32 %v1023, 4294901760
      %1415 = vmatmul.f32.gmra.mxu0 %v1414
      %v1416 = vpop.f32.mrf.mxu0
      %v1417 = vadd.f32 %v1338, %v1416
      %v1418 = vand.u32 %v1026, 4294901760
      %1419 = vmatmul.f32.gmra.mxu0 %v1418
      %v1420 = vpop.f32.mrf.mxu0
      %v1421 = vadd.f32 %v1344, %v1420
      %v1422 = vand.u32 %v1029, 4294901760
      %1423 = vmatmul.f32.gmra.mxu0 %v1422
      %v1424 = vpop.f32.mrf.mxu0
      %v1425 = vadd.f32 %v1350, %v1424
      %v1426 = vand.u32 %v1032, 4294901760
      %1427 = vmatmul.f32.gmra.mxu0 %v1426
      %v1428 = vpop.f32.mrf.mxu0
      %v1429 = vadd.f32 %v1356, %v1428
      %1430 = vdwg.mxu0
      %1431 = vmatpush.msra.mxu0 0.0
      %1432 = vmatpush.msra.mxu0 0.0
      %1433 = vmatpush.msra.mxu0 0.0
      %1434 = vmatpush.msra.mxu0 0.0
      %1435 = vmatpush.msra.mxu0 0.0
      %1436 = vmatpush.msra.mxu0 0.0
      %1437 = vmatpush.msra.mxu0 0.0
      %1438 = vmatpush.msra.mxu0 0.0
      %v1439 = vand.u32 %v952, 4294901760
      %1440 = vmatpush.msra.mxu0 %v1439
      %v1441 = vand.u32 %v951, 4294901760
      %1442 = vmatpush.msra.mxu0 %v1441
      %v1443 = vand.u32 %v950, 4294901760
      %1444 = vmatpush.msra.mxu0 %v1443
      %v1445 = vand.u32 %v949, 4294901760
      %1446 = vmatpush.msra.mxu0 %v1445
      %v1447 = vand.u32 %v948, 4294901760
      %1448 = vmatpush.msra.mxu0 %v1447
      %v1449 = vand.u32 %v947, 4294901760
      %1450 = vmatpush.msra.mxu0 %v1449
      %v1451 = vand.u32 %v946, 4294901760
      %1452 = vmatpush.msra.mxu0 %v1451
      %v1453 = vand.u32 %v945, 4294901760
      %1454 = vmatpush.msra.mxu0 %v1453
      %v1455 = vand.u32 %v1011, 4294901760
      %1456 = vmatmul.f32.gmra.mxu0 %v1455
      %v1457 = vpop.f32.mrf.mxu0
      %v1458 = vadd.f32 %v1401, %v1457
      %v1459 = vand.u32 %v1014, 4294901760
      %1460 = vmatmul.f32.gmra.mxu0 %v1459
      %v1461 = vpop.f32.mrf.mxu0
      %v1462 = vadd.f32 %v1405, %v1461
      %v1463 = vand.u32 %v1017, 4294901760
      %1464 = vmatmul.f32.gmra.mxu0 %v1463
      %v1465 = vpop.f32.mrf.mxu0
      %v1466 = vadd.f32 %v1409, %v1465
      %v1467 = vand.u32 %v1020, 4294901760
      %1468 = vmatmul.f32.gmra.mxu0 %v1467
      %v1469 = vpop.f32.mrf.mxu0
      %v1470 = vadd.f32 %v1413, %v1469
      %v1471 = vand.u32 %v1023, 4294901760
      %1472 = vmatmul.f32.gmra.mxu0 %v1471
      %v1473 = vpop.f32.mrf.mxu0
      %v1474 = vadd.f32 %v1417, %v1473
      %v1475 = vand.u32 %v1026, 4294901760
      %1476 = vmatmul.f32.gmra.mxu0 %v1475
      %v1477 = vpop.f32.mrf.mxu0
      %v1478 = vadd.f32 %v1421, %v1477
      %v1479 = vand.u32 %v1029, 4294901760
      %1480 = vmatmul.f32.gmra.mxu0 %v1479
      %v1481 = vpop.f32.mrf.mxu0
      %v1482 = vadd.f32 %v1425, %v1481
      %v1483 = vand.u32 %v1032, 4294901760
      %1484 = vmatmul.f32.gmra.mxu0 %v1483
      %v1485 = vpop.f32.mrf.mxu0
      %v1486 = vadd.f32 %v1429, %v1485
      %1487 = vdwg.mxu0
      %v1488 = vmax.f32 %v1458, 0.0
      %v1489 = vmax.f32 %v1462, 0.0
      %v1490 = vmax.f32 %v1466, 0.0
      %v1491 = vmax.f32 %v1470, 0.0
      %v1492 = vmax.f32 %v1474, 0.0
      %v1493 = vmax.f32 %v1478, 0.0
      %v1494 = vmax.f32 %v1482, 0.0
      %v1495 = vmax.f32 %v1486, 0.0
      %v1496 = vld [vmem:[%s477] sm:$0x7]
      %v1497 = vld [vmem:[%s482] sm:$0xff]
      %v1498 = vld [vmem:[%s482 + $0x8] sm:$0xff]
      %v1499 = vld [vmem:[%s482 + $0x10] sm:$0xff]
      %v1500 = vld [vmem:[%s482 + $0x18] sm:$0xff]
      %v1501 = vld [vmem:[%s482 + $0x20] sm:$0xff]
      %v1502 = vld [vmem:[%s482 + $0x28] sm:$0xff]
      %v1503 = vld [vmem:[%s482 + $0x30] sm:$0xff]
      %v1504 = vld [vmem:[%s482 + $0x38] sm:$0xff]
      %v1505 = vld [vmem:[%s487] sm:$0xff]
      %v1506 = vld [vmem:[%s487 + $0x8] sm:$0xff]
      %v1507 = vld [vmem:[%s487 + $0x10] sm:$0xff]
      %v1508 = vld [vmem:[%s487 + $0x18] sm:$0xff]
      %v1509 = vld [vmem:[%s487 + $0x20] sm:$0xff]
      %v1510 = vld [vmem:[%s487 + $0x28] sm:$0xff]
      %v1511 = vld [vmem:[%s487 + $0x30] sm:$0xff]
      %v1512 = vld [vmem:[%s487 + $0x38] sm:$0xff]
      %1514 = vset.pattern.permute.xlu0 0
      %1515 = vperm.xlu0 %1514, %v1505
      %v1516 = vpop.permute.xlu0 %1515
      %1519 = vset.pattern.permute.xlu0 0
      %1520 = vperm.xlu0 %1519, %v1506
      %v1521 = vpop.permute.xlu0 %1520
      %1524 = vset.pattern.permute.xlu0 0
      %1525 = vperm.xlu0 %1524, %v1507
      %v1526 = vpop.permute.xlu0 %1525
      %1529 = vset.pattern.permute.xlu0 0
      %1530 = vperm.xlu0 %1529, %v1508
      %v1531 = vpop.permute.xlu0 %1530
      %1534 = vset.pattern.permute.xlu0 0
      %1535 = vperm.xlu0 %1534, %v1509
      %v1536 = vpop.permute.xlu0 %1535
      %1539 = vset.pattern.permute.xlu0 0
      %1540 = vperm.xlu0 %1539, %v1510
      %v1541 = vpop.permute.xlu0 %1540
      %1544 = vset.pattern.permute.xlu0 0
      %1545 = vperm.xlu0 %1544, %v1511
      %v1546 = vpop.permute.xlu0 %1545
      %1549 = vset.pattern.permute.xlu0 0
      %1550 = vperm.xlu0 %1549, %v1512
      %v1551 = vpop.permute.xlu0 %1550
      %v1554 = vsel %vm553, %v1497, 0
      %v1557 = vsel %vm553, %v1498, 0
      %v1560 = vsel %vm553, %v1499, 0
      %v1563 = vsel %vm553, %v1500, 0
      %v1566 = vsel %vm553, %v1501, 0
      %v1569 = vsel %vm553, %v1502, 0
      %v1572 = vsel %vm553, %v1503, 0
      %v1575 = vsel %vm553, %v1504, 0
      %v1578 = vsel %vm578, %v1496, 0
      %1580 = vmatpush.msra.mxu0 0.0
      %1581 = vmatpush.msra.mxu0 0.0
      %1582 = vmatpush.msra.mxu0 0.0
      %1583 = vmatpush.msra.mxu0 0.0
      %1584 = vmatpush.msra.mxu0 0.0
      %1585 = vmatpush.msra.mxu0 0.0
      %1586 = vmatpush.msra.mxu0 0.0
      %1587 = vmatpush.msra.mxu0 0.0
      %1588 = vmatpush.msra.mxu0 0.0
      %1589 = vmatpush.msra.mxu0 0.0
      %1590 = vmatpush.msra.mxu0 0.0
      %1591 = vmatpush.msra.mxu0 0.0
      %1592 = vmatpush.msra.mxu0 0.0
      %1593 = vmatpush.msra.mxu0 0.0
      %1594 = vmatpush.msra.mxu0 0.0
      %v1595 = vand.u32 %v1578, 4294901760
      %1596 = vmatpush.msra.mxu0 %v1595
      %v1597 = vand.u32 %v1554, 4294901760
      %v1598 = vsub.f32 %v1554, %v1597
      %v1599 = vand.u32 %v1598, 4294901760
      %v1600 = vsub.f32 %v1598, %v1599
      %v1601 = vand.u32 %v1600, 4294901760
      %1602 = vmatmul.f32.gmra.mxu0 %v1601
      %v1603 = vpop.f32.mrf.mxu0
      %v1604 = vadd.f32 %v1516, %v1603
      %v1605 = vand.u32 %v1557, 4294901760
      %v1606 = vsub.f32 %v1557, %v1605
      %v1607 = vand.u32 %v1606, 4294901760
      %v1608 = vsub.f32 %v1606, %v1607
      %v1609 = vand.u32 %v1608, 4294901760
      %1610 = vmatmul.f32.gmra.mxu0 %v1609
      %v1611 = vpop.f32.mrf.mxu0
      %v1612 = vadd.f32 %v1521, %v1611
      %v1613 = vand.u32 %v1560, 4294901760
      %v1614 = vsub.f32 %v1560, %v1613
      %v1615 = vand.u32 %v1614, 4294901760
      %v1616 = vsub.f32 %v1614, %v1615
      %v1617 = vand.u32 %v1616, 4294901760
      %1618 = vmatmul.f32.gmra.mxu0 %v1617
      %v1619 = vpop.f32.mrf.mxu0
      %v1620 = vadd.f32 %v1526, %v1619
      %v1621 = vand.u32 %v1563, 4294901760
      %v1622 = vsub.f32 %v1563, %v1621
      %v1623 = vand.u32 %v1622, 4294901760
      %v1624 = vsub.f32 %v1622, %v1623
      %v1625 = vand.u32 %v1624, 4294901760
      %1626 = vmatmul.f32.gmra.mxu0 %v1625
      %v1627 = vpop.f32.mrf.mxu0
      %v1628 = vadd.f32 %v1531, %v1627
      %v1629 = vand.u32 %v1566, 4294901760
      %v1630 = vsub.f32 %v1566, %v1629
      %v1631 = vand.u32 %v1630, 4294901760
      %v1632 = vsub.f32 %v1630, %v1631
      %v1633 = vand.u32 %v1632, 4294901760
      %1634 = vmatmul.f32.gmra.mxu0 %v1633
      %v1635 = vpop.f32.mrf.mxu0
      %v1636 = vadd.f32 %v1536, %v1635
      %v1637 = vand.u32 %v1569, 4294901760
      %v1638 = vsub.f32 %v1569, %v1637
      %v1639 = vand.u32 %v1638, 4294901760
      %v1640 = vsub.f32 %v1638, %v1639
      %v1641 = vand.u32 %v1640, 4294901760
      %1642 = vmatmul.f32.gmra.mxu0 %v1641
      %v1643 = vpop.f32.mrf.mxu0
      %v1644 = vadd.f32 %v1541, %v1643
      %v1645 = vand.u32 %v1572, 4294901760
      %v1646 = vsub.f32 %v1572, %v1645
      %v1647 = vand.u32 %v1646, 4294901760
      %v1648 = vsub.f32 %v1646, %v1647
      %v1649 = vand.u32 %v1648, 4294901760
      %1650 = vmatmul.f32.gmra.mxu0 %v1649
      %v1651 = vpop.f32.mrf.mxu0
      %v1652 = vadd.f32 %v1546, %v1651
      %v1653 = vand.u32 %v1575, 4294901760
      %v1654 = vsub.f32 %v1575, %v1653
      %v1655 = vand.u32 %v1654, 4294901760
      %v1656 = vsub.f32 %v1654, %v1655
      %v1657 = vand.u32 %v1656, 4294901760
      %1658 = vmatmul.f32.gmra.mxu0 %v1657
      %v1659 = vpop.f32.mrf.mxu0
      %v1660 = vadd.f32 %v1551, %v1659
      %1661 = vdwg.mxu0
      %1662 = vmatpush.msra.mxu0 0.0
      %1663 = vmatpush.msra.mxu0 0.0
      %1664 = vmatpush.msra.mxu0 0.0
      %1665 = vmatpush.msra.mxu0 0.0
      %1666 = vmatpush.msra.mxu0 0.0
      %1667 = vmatpush.msra.mxu0 0.0
      %1668 = vmatpush.msra.mxu0 0.0
      %1669 = vmatpush.msra.mxu0 0.0
      %1670 = vmatpush.msra.mxu0 0.0
      %1671 = vmatpush.msra.mxu0 0.0
      %1672 = vmatpush.msra.mxu0 0.0
      %1673 = vmatpush.msra.mxu0 0.0
      %1674 = vmatpush.msra.mxu0 0.0
      %1675 = vmatpush.msra.mxu0 0.0
      %1676 = vmatpush.msra.mxu0 0.0
      %v1677 = vand.u32 %v1578, 4294901760
      %v1678 = vsub.f32 %v1578, %v1677
      %v1679 = vand.u32 %v1678, 4294901760
      %v1680 = vsub.f32 %v1678, %v1679
      %v1681 = vand.u32 %v1680, 4294901760
      %1682 = vmatpush.msra.mxu0 %v1681
      %v1683 = vand.u32 %v1554, 4294901760
      %1684 = vmatmul.f32.gmra.mxu0 %v1683
      %v1685 = vpop.f32.mrf.mxu0
      %v1686 = vadd.f32 %v1604, %v1685
      %v1687 = vand.u32 %v1557, 4294901760
      %1688 = vmatmul.f32.gmra.mxu0 %v1687
      %v1689 = vpop.f32.mrf.mxu0
      %v1690 = vadd.f32 %v1612, %v1689
      %v1691 = vand.u32 %v1560, 4294901760
      %1692 = vmatmul.f32.gmra.mxu0 %v1691
      %v1693 = vpop.f32.mrf.mxu0
      %v1694 = vadd.f32 %v1620, %v1693
      %v1695 = vand.u32 %v1563, 4294901760
      %1696 = vmatmul.f32.gmra.mxu0 %v1695
      %v1697 = vpop.f32.mrf.mxu0
      %v1698 = vadd.f32 %v1628, %v1697
      %v1699 = vand.u32 %v1566, 4294901760
      %1700 = vmatmul.f32.gmra.mxu0 %v1699
      %v1701 = vpop.f32.mrf.mxu0
      %v1702 = vadd.f32 %v1636, %v1701
      %v1703 = vand.u32 %v1569, 4294901760
      %1704 = vmatmul.f32.gmra.mxu0 %v1703
      %v1705 = vpop.f32.mrf.mxu0
      %v1706 = vadd.f32 %v1644, %v1705
      %v1707 = vand.u32 %v1572, 4294901760
      %1708 = vmatmul.f32.gmra.mxu0 %v1707
      %v1709 = vpop.f32.mrf.mxu0
      %v1710 = vadd.f32 %v1652, %v1709
      %v1711 = vand.u32 %v1575, 4294901760
      %1712 = vmatmul.f32.gmra.mxu0 %v1711
      %v1713 = vpop.f32.mrf.mxu0
      %v1714 = vadd.f32 %v1660, %v1713
      %1715 = vdwg.mxu0
      %1716 = vmatpush.msra.mxu0 0.0
      %1717 = vmatpush.msra.mxu0 0.0
      %1718 = vmatpush.msra.mxu0 0.0
      %1719 = vmatpush.msra.mxu0 0.0
      %1720 = vmatpush.msra.mxu0 0.0
      %1721 = vmatpush.msra.mxu0 0.0
      %1722 = vmatpush.msra.mxu0 0.0
      %1723 = vmatpush.msra.mxu0 0.0
      %1724 = vmatpush.msra.mxu0 0.0
      %1725 = vmatpush.msra.mxu0 0.0
      %1726 = vmatpush.msra.mxu0 0.0
      %1727 = vmatpush.msra.mxu0 0.0
      %1728 = vmatpush.msra.mxu0 0.0
      %1729 = vmatpush.msra.mxu0 0.0
      %1730 = vmatpush.msra.mxu0 0.0
      %v1731 = vand.u32 %v1578, 4294901760
      %v1732 = vsub.f32 %v1578, %v1731
      %1733 = vmatpush.msra.mxu0 %v1732
      %v1734 = vand.u32 %v1554, 4294901760
      %v1735 = vsub.f32 %v1554, %v1734
      %1736 = vmatmul.f32.gmra.mxu0 %v1735
      %v1737 = vpop.f32.mrf.mxu0
      %v1738 = vadd.f32 %v1686, %v1737
      %v1739 = vand.u32 %v1557, 4294901760
      %v1740 = vsub.f32 %v1557, %v1739
      %1741 = vmatmul.f32.gmra.mxu0 %v1740
      %v1742 = vpop.f32.mrf.mxu0
      %v1743 = vadd.f32 %v1690, %v1742
      %v1744 = vand.u32 %v1560, 4294901760
      %v1745 = vsub.f32 %v1560, %v1744
      %1746 = vmatmul.f32.gmra.mxu0 %v1745
      %v1747 = vpop.f32.mrf.mxu0
      %v1748 = vadd.f32 %v1694, %v1747
      %v1749 = vand.u32 %v1563, 4294901760
      %v1750 = vsub.f32 %v1563, %v1749
      %1751 = vmatmul.f32.gmra.mxu0 %v1750
      %v1752 = vpop.f32.mrf.mxu0
      %v1753 = vadd.f32 %v1698, %v1752
      %v1754 = vand.u32 %v1566, 4294901760
      %v1755 = vsub.f32 %v1566, %v1754
      %1756 = vmatmul.f32.gmra.mxu0 %v1755
      %v1757 = vpop.f32.mrf.mxu0
      %v1758 = vadd.f32 %v1702, %v1757
      %v1759 = vand.u32 %v1569, 4294901760
      %v1760 = vsub.f32 %v1569, %v1759
      %1761 = vmatmul.f32.gmra.mxu0 %v1760
      %v1762 = vpop.f32.mrf.mxu0
      %v1763 = vadd.f32 %v1706, %v1762
      %v1764 = vand.u32 %v1572, 4294901760
      %v1765 = vsub.f32 %v1572, %v1764
      %1766 = vmatmul.f32.gmra.mxu0 %v1765
      %v1767 = vpop.f32.mrf.mxu0
      %v1768 = vadd.f32 %v1710, %v1767
      %v1769 = vand.u32 %v1575, 4294901760
      %v1770 = vsub.f32 %v1575, %v1769
      %1771 = vmatmul.f32.gmra.mxu0 %v1770
      %v1772 = vpop.f32.mrf.mxu0
      %v1773 = vadd.f32 %v1714, %v1772
      %1774 = vdwg.mxu0
      %1775 = vmatpush.msra.mxu0 0.0
      %1776 = vmatpush.msra.mxu0 0.0
      %1777 = vmatpush.msra.mxu0 0.0
      %1778 = vmatpush.msra.mxu0 0.0
      %1779 = vmatpush.msra.mxu0 0.0
      %1780 = vmatpush.msra.mxu0 0.0
      %1781 = vmatpush.msra.mxu0 0.0
      %1782 = vmatpush.msra.mxu0 0.0
      %1783 = vmatpush.msra.mxu0 0.0
      %1784 = vmatpush.msra.mxu0 0.0
      %1785 = vmatpush.msra.mxu0 0.0
      %1786 = vmatpush.msra.mxu0 0.0
      %1787 = vmatpush.msra.mxu0 0.0
      %1788 = vmatpush.msra.mxu0 0.0
      %1789 = vmatpush.msra.mxu0 0.0
      %v1790 = vand.u32 %v1578, 4294901760
      %1791 = vmatpush.msra.mxu0 %v1790
      %v1792 = vand.u32 %v1554, 4294901760
      %v1793 = vsub.f32 %v1554, %v1792
      %v1794 = vand.u32 %v1793, 4294901760
      %1795 = vmatmul.f32.gmra.mxu0 %v1794
      %v1796 = vpop.f32.mrf.mxu0
      %v1797 = vadd.f32 %v1738, %v1796
      %v1798 = vand.u32 %v1557, 4294901760
      %v1799 = vsub.f32 %v1557, %v1798
      %v1800 = vand.u32 %v1799, 4294901760
      %1801 = vmatmul.f32.gmra.mxu0 %v1800
      %v1802 = vpop.f32.mrf.mxu0
      %v1803 = vadd.f32 %v1743, %v1802
      %v1804 = vand.u32 %v1560, 4294901760
      %v1805 = vsub.f32 %v1560, %v1804
      %v1806 = vand.u32 %v1805, 4294901760
      %1807 = vmatmul.f32.gmra.mxu0 %v1806
      %v1808 = vpop.f32.mrf.mxu0
      %v1809 = vadd.f32 %v1748, %v1808
      %v1810 = vand.u32 %v1563, 4294901760
      %v1811 = vsub.f32 %v1563, %v1810
      %v1812 = vand.u32 %v1811, 4294901760
      %1813 = vmatmul.f32.gmra.mxu0 %v1812
      %v1814 = vpop.f32.mrf.mxu0
      %v1815 = vadd.f32 %v1753, %v1814
      %v1816 = vand.u32 %v1566, 4294901760
      %v1817 = vsub.f32 %v1566, %v1816
      %v1818 = vand.u32 %v1817, 4294901760
      %1819 = vmatmul.f32.gmra.mxu0 %v1818
      %v1820 = vpop.f32.mrf.mxu0
      %v1821 = vadd.f32 %v1758, %v1820
      %v1822 = vand.u32 %v1569, 4294901760
      %v1823 = vsub.f32 %v1569, %v1822
      %v1824 = vand.u32 %v1823, 4294901760
      %1825 = vmatmul.f32.gmra.mxu0 %v1824
      %v1826 = vpop.f32.mrf.mxu0
      %v1827 = vadd.f32 %v1763, %v1826
      %v1828 = vand.u32 %v1572, 4294901760
      %v1829 = vsub.f32 %v1572, %v1828
      %v1830 = vand.u32 %v1829, 4294901760
      %1831 = vmatmul.f32.gmra.mxu0 %v1830
      %v1832 = vpop.f32.mrf.mxu0
      %v1833 = vadd.f32 %v1768, %v1832
      %v1834 = vand.u32 %v1575, 4294901760
      %v1835 = vsub.f32 %v1575, %v1834
      %v1836 = vand.u32 %v1835, 4294901760
      %1837 = vmatmul.f32.gmra.mxu0 %v1836
      %v1838 = vpop.f32.mrf.mxu0
      %v1839 = vadd.f32 %v1773, %v1838
      %1840 = vdwg.mxu0
      %1841 = vmatpush.msra.mxu0 0.0
      %1842 = vmatpush.msra.mxu0 0.0
      %1843 = vmatpush.msra.mxu0 0.0
      %1844 = vmatpush.msra.mxu0 0.0
      %1845 = vmatpush.msra.mxu0 0.0
      %1846 = vmatpush.msra.mxu0 0.0
      %1847 = vmatpush.msra.mxu0 0.0
      %1848 = vmatpush.msra.mxu0 0.0
      %1849 = vmatpush.msra.mxu0 0.0
      %1850 = vmatpush.msra.mxu0 0.0
      %1851 = vmatpush.msra.mxu0 0.0
      %1852 = vmatpush.msra.mxu0 0.0
      %1853 = vmatpush.msra.mxu0 0.0
      %1854 = vmatpush.msra.mxu0 0.0
      %1855 = vmatpush.msra.mxu0 0.0
      %v1856 = vand.u32 %v1578, 4294901760
      %v1857 = vsub.f32 %v1578, %v1856
      %v1858 = vand.u32 %v1857, 4294901760
      %1859 = vmatpush.msra.mxu0 %v1858
      %v1860 = vand.u32 %v1554, 4294901760
      %1861 = vmatmul.f32.gmra.mxu0 %v1860
      %v1862 = vpop.f32.mrf.mxu0
      %v1863 = vadd.f32 %v1797, %v1862
      %v1864 = vand.u32 %v1557, 4294901760
      %1865 = vmatmul.f32.gmra.mxu0 %v1864
      %v1866 = vpop.f32.mrf.mxu0
      %v1867 = vadd.f32 %v1803, %v1866
      %v1868 = vand.u32 %v1560, 4294901760
      %1869 = vmatmul.f32.gmra.mxu0 %v1868
      %v1870 = vpop.f32.mrf.mxu0
      %v1871 = vadd.f32 %v1809, %v1870
      %v1872 = vand.u32 %v1563, 4294901760
      %1873 = vmatmul.f32.gmra.mxu0 %v1872
      %v1874 = vpop.f32.mrf.mxu0
      %v1875 = vadd.f32 %v1815, %v1874
      %v1876 = vand.u32 %v1566, 4294901760
      %1877 = vmatmul.f32.gmra.mxu0 %v1876
      %v1878 = vpop.f32.mrf.mxu0
      %v1879 = vadd.f32 %v1821, %v1878
      %v1880 = vand.u32 %v1569, 4294901760
      %1881 = vmatmul.f32.gmra.mxu0 %v1880
      %v1882 = vpop.f32.mrf.mxu0
      %v1883 = vadd.f32 %v1827, %v1882
      %v1884 = vand.u32 %v1572, 4294901760
      %1885 = vmatmul.f32.gmra.mxu0 %v1884
      %v1886 = vpop.f32.mrf.mxu0
      %v1887 = vadd.f32 %v1833, %v1886
      %v1888 = vand.u32 %v1575, 4294901760
      %1889 = vmatmul.f32.gmra.mxu0 %v1888
      %v1890 = vpop.f32.mrf.mxu0
      %v1891 = vadd.f32 %v1839, %v1890
      %1892 = vdwg.mxu0
      %1893 = vmatpush.msra.mxu0 0.0
      %1894 = vmatpush.msra.mxu0 0.0
      %1895 = vmatpush.msra.mxu0 0.0
      %1896 = vmatpush.msra.mxu0 0.0
      %1897 = vmatpush.msra.mxu0 0.0
      %1898 = vmatpush.msra.mxu0 0.0
      %1899 = vmatpush.msra.mxu0 0.0
      %1900 = vmatpush.msra.mxu0 0.0
      %1901 = vmatpush.msra.mxu0 0.0
      %1902 = vmatpush.msra.mxu0 0.0
      %1903 = vmatpush.msra.mxu0 0.0
      %1904 = vmatpush.msra.mxu0 0.0
      %1905 = vmatpush.msra.mxu0 0.0
      %1906 = vmatpush.msra.mxu0 0.0
      %1907 = vmatpush.msra.mxu0 0.0
      %v1908 = vand.u32 %v1578, 4294901760
      %1909 = vmatpush.msra.mxu0 %v1908
      %v1910 = vand.u32 %v1554, 4294901760
      %1911 = vmatmul.f32.gmra.mxu0 %v1910
      %v1912 = vpop.f32.mrf.mxu0
      %v1913 = vadd.f32 %v1863, %v1912
      %v1914 = vand.u32 %v1557, 4294901760
      %1915 = vmatmul.f32.gmra.mxu0 %v1914
      %v1916 = vpop.f32.mrf.mxu0
      %v1917 = vadd.f32 %v1867, %v1916
      %v1918 = vand.u32 %v1560, 4294901760
      %1919 = vmatmul.f32.gmra.mxu0 %v1918
      %v1920 = vpop.f32.mrf.mxu0
      %v1921 = vadd.f32 %v1871, %v1920
      %v1922 = vand.u32 %v1563, 4294901760
      %1923 = vmatmul.f32.gmra.mxu0 %v1922
      %v1924 = vpop.f32.mrf.mxu0
      %v1925 = vadd.f32 %v1875, %v1924
      %v1926 = vand.u32 %v1566, 4294901760
      %1927 = vmatmul.f32.gmra.mxu0 %v1926
      %v1928 = vpop.f32.mrf.mxu0
      %v1929 = vadd.f32 %v1879, %v1928
      %v1930 = vand.u32 %v1569, 4294901760
      %1931 = vmatmul.f32.gmra.mxu0 %v1930
      %v1932 = vpop.f32.mrf.mxu0
      %v1933 = vadd.f32 %v1883, %v1932
      %v1934 = vand.u32 %v1572, 4294901760
      %1935 = vmatmul.f32.gmra.mxu0 %v1934
      %v1936 = vpop.f32.mrf.mxu0
      %v1937 = vadd.f32 %v1887, %v1936
      %v1938 = vand.u32 %v1575, 4294901760
      %1939 = vmatmul.f32.gmra.mxu0 %v1938
      %v1940 = vpop.f32.mrf.mxu0
      %v1941 = vadd.f32 %v1891, %v1940
      %1942 = vdwg.mxu0
      %v1943 = vmax.f32 %v1913, 0.0
      %v1944 = vmax.f32 %v1917, 0.0
      %v1945 = vmax.f32 %v1921, 0.0
      %v1946 = vmax.f32 %v1925, 0.0
      %v1947 = vmax.f32 %v1929, 0.0
      %v1948 = vmax.f32 %v1933, 0.0
      %v1949 = vmax.f32 %v1937, 0.0
      %v1950 = vmax.f32 %v1941, 0.0
      %v1951 = vld [vmem:[%s8] sm:$0xff]
      %v1952 = vld [vmem:[%s8 + $0x8] sm:$0xff]
      %v1953 = vld [vmem:[%s8 + $0x10] sm:$0xff]
      %v1954 = vld [vmem:[%s8 + $0x18] sm:$0xff]
      %v1955 = vld [vmem:[%s8 + $0x20] sm:$0xff]
      %v1956 = vld [vmem:[%s8 + $0x28] sm:$0xff]
      %v1957 = vld [vmem:[%s8 + $0x30] sm:$0xff]
      %v1958 = vld [vmem:[%s8 + $0x38] sm:$0xff]
      %v1959 = vld [vmem:[%s9] sm:$0xff]
      %v1960 = vld [vmem:[%s9 + $0x8] sm:$0xff]
      %v1961 = vld [vmem:[%s9 + $0x10] sm:$0xff]
      %v1962 = vld [vmem:[%s9 + $0x18] sm:$0xff]
      %v1963 = vld [vmem:[%s9 + $0x20] sm:$0xff]
      %v1964 = vld [vmem:[%s9 + $0x28] sm:$0xff]
      %v1965 = vld [vmem:[%s9 + $0x30] sm:$0xff]
      %v1966 = vld [vmem:[%s9 + $0x38] sm:$0xff]
      %1968 = vset.pattern.permute.xlu0 0
      %1969 = vperm.xlu0 %1968, %v1959
      %v1970 = vpop.permute.xlu0 %1969
      %1973 = vset.pattern.permute.xlu0 0
      %1974 = vperm.xlu0 %1973, %v1960
      %v1975 = vpop.permute.xlu0 %1974
      %1978 = vset.pattern.permute.xlu0 0
      %1979 = vperm.xlu0 %1978, %v1961
      %v1980 = vpop.permute.xlu0 %1979
      %1983 = vset.pattern.permute.xlu0 0
      %1984 = vperm.xlu0 %1983, %v1962
      %v1985 = vpop.permute.xlu0 %1984
      %1988 = vset.pattern.permute.xlu0 0
      %1989 = vperm.xlu0 %1988, %v1963
      %v1990 = vpop.permute.xlu0 %1989
      %1993 = vset.pattern.permute.xlu0 0
      %1994 = vperm.xlu0 %1993, %v1964
      %v1995 = vpop.permute.xlu0 %1994
      %1998 = vset.pattern.permute.xlu0 0
      %1999 = vperm.xlu0 %1998, %v1965
      %v2000 = vpop.permute.xlu0 %1999
      %2003 = vset.pattern.permute.xlu0 0
      %2004 = vperm.xlu0 %2003, %v1966
      %v2005 = vpop.permute.xlu0 %2004
      %v2008 = vsel %vm1009, %v1951, 0
      %v2011 = vsel %vm1009, %v1952, 0
      %v2014 = vsel %vm1009, %v1953, 0
      %v2017 = vsel %vm1009, %v1954, 0
      %v2020 = vsel %vm1009, %v1955, 0
      %v2023 = vsel %vm1009, %v1956, 0
      %v2026 = vsel %vm1009, %v1957, 0
      %v2029 = vsel %vm1009, %v1958, 0
      %2031 = vmatpush.msra.mxu0 0.0
      %2032 = vmatpush.msra.mxu0 0.0
      %2033 = vmatpush.msra.mxu0 0.0
      %2034 = vmatpush.msra.mxu0 0.0
      %2035 = vmatpush.msra.mxu0 0.0
      %2036 = vmatpush.msra.mxu0 0.0
      %2037 = vmatpush.msra.mxu0 0.0
      %2038 = vmatpush.msra.mxu0 0.0
      %v2039 = vand.u32 %v1950, 4294901760
      %2040 = vmatpush.msra.mxu0 %v2039
      %v2041 = vand.u32 %v1949, 4294901760
      %2042 = vmatpush.msra.mxu0 %v2041
      %v2043 = vand.u32 %v1948, 4294901760
      %2044 = vmatpush.msra.mxu0 %v2043
      %v2045 = vand.u32 %v1947, 4294901760
      %2046 = vmatpush.msra.mxu0 %v2045
      %v2047 = vand.u32 %v1946, 4294901760
      %2048 = vmatpush.msra.mxu0 %v2047
      %v2049 = vand.u32 %v1945, 4294901760
      %2050 = vmatpush.msra.mxu0 %v2049
      %v2051 = vand.u32 %v1944, 4294901760
      %2052 = vmatpush.msra.mxu0 %v2051
      %v2053 = vand.u32 %v1943, 4294901760
      %2054 = vmatpush.msra.mxu0 %v2053
      %v2055 = vand.u32 %v2008, 4294901760
      %v2056 = vsub.f32 %v2008, %v2055
      %v2057 = vand.u32 %v2056, 4294901760
      %v2058 = vsub.f32 %v2056, %v2057
      %v2059 = vand.u32 %v2058, 4294901760
      %2060 = vmatmul.f32.gmra.mxu0 %v2059
      %v2061 = vpop.f32.mrf.mxu0
      %v2062 = vadd.f32 %v1970, %v2061
      %v2063 = vand.u32 %v2011, 4294901760
      %v2064 = vsub.f32 %v2011, %v2063
      %v2065 = vand.u32 %v2064, 4294901760
      %v2066 = vsub.f32 %v2064, %v2065
      %v2067 = vand.u32 %v2066, 4294901760
      %2068 = vmatmul.f32.gmra.mxu0 %v2067
      %v2069 = vpop.f32.mrf.mxu0
      %v2070 = vadd.f32 %v1975, %v2069
      %v2071 = vand.u32 %v2014, 4294901760
      %v2072 = vsub.f32 %v2014, %v2071
      %v2073 = vand.u32 %v2072, 4294901760
      %v2074 = vsub.f32 %v2072, %v2073
      %v2075 = vand.u32 %v2074, 4294901760
      %2076 = vmatmul.f32.gmra.mxu0 %v2075
      %v2077 = vpop.f32.mrf.mxu0
      %v2078 = vadd.f32 %v1980, %v2077
      %v2079 = vand.u32 %v2017, 4294901760
      %v2080 = vsub.f32 %v2017, %v2079
      %v2081 = vand.u32 %v2080, 4294901760
      %v2082 = vsub.f32 %v2080, %v2081
      %v2083 = vand.u32 %v2082, 4294901760
      %2084 = vmatmul.f32.gmra.mxu0 %v2083
      %v2085 = vpop.f32.mrf.mxu0
      %v2086 = vadd.f32 %v1985, %v2085
      %v2087 = vand.u32 %v2020, 4294901760
      %v2088 = vsub.f32 %v2020, %v2087
      %v2089 = vand.u32 %v2088, 4294901760
      %v2090 = vsub.f32 %v2088, %v2089
      %v2091 = vand.u32 %v2090, 4294901760
      %2092 = vmatmul.f32.gmra.mxu0 %v2091
      %v2093 = vpop.f32.mrf.mxu0
      %v2094 = vadd.f32 %v1990, %v2093
      %v2095 = vand.u32 %v2023, 4294901760
      %v2096 = vsub.f32 %v2023, %v2095
      %v2097 = vand.u32 %v2096, 4294901760
      %v2098 = vsub.f32 %v2096, %v2097
      %v2099 = vand.u32 %v2098, 4294901760
      %2100 = vmatmul.f32.gmra.mxu0 %v2099
      %v2101 = vpop.f32.mrf.mxu0
      %v2102 = vadd.f32 %v1995, %v2101
      %v2103 = vand.u32 %v2026, 4294901760
      %v2104 = vsub.f32 %v2026, %v2103
      %v2105 = vand.u32 %v2104, 4294901760
      %v2106 = vsub.f32 %v2104, %v2105
      %v2107 = vand.u32 %v2106, 4294901760
      %2108 = vmatmul.f32.gmra.mxu0 %v2107
      %v2109 = vpop.f32.mrf.mxu0
      %v2110 = vadd.f32 %v2000, %v2109
      %v2111 = vand.u32 %v2029, 4294901760
      %v2112 = vsub.f32 %v2029, %v2111
      %v2113 = vand.u32 %v2112, 4294901760
      %v2114 = vsub.f32 %v2112, %v2113
      %v2115 = vand.u32 %v2114, 4294901760
      %2116 = vmatmul.f32.gmra.mxu0 %v2115
      %v2117 = vpop.f32.mrf.mxu0
      %v2118 = vadd.f32 %v2005, %v2117
      %2119 = vdwg.mxu0
      %2120 = vmatpush.msra.mxu0 0.0
      %2121 = vmatpush.msra.mxu0 0.0
      %2122 = vmatpush.msra.mxu0 0.0
      %2123 = vmatpush.msra.mxu0 0.0
      %2124 = vmatpush.msra.mxu0 0.0
      %2125 = vmatpush.msra.mxu0 0.0
      %2126 = vmatpush.msra.mxu0 0.0
      %2127 = vmatpush.msra.mxu0 0.0
      %v2128 = vand.u32 %v1950, 4294901760
      %v2129 = vsub.f32 %v1950, %v2128
      %v2130 = vand.u32 %v2129, 4294901760
      %v2131 = vsub.f32 %v2129, %v2130
      %v2132 = vand.u32 %v2131, 4294901760
      %2133 = vmatpush.msra.mxu0 %v2132
      %v2134 = vand.u32 %v1949, 4294901760
      %v2135 = vsub.f32 %v1949, %v2134
      %v2136 = vand.u32 %v2135, 4294901760
      %v2137 = vsub.f32 %v2135, %v2136
      %v2138 = vand.u32 %v2137, 4294901760
      %2139 = vmatpush.msra.mxu0 %v2138
      %v2140 = vand.u32 %v1948, 4294901760
      %v2141 = vsub.f32 %v1948, %v2140
      %v2142 = vand.u32 %v2141, 4294901760
      %v2143 = vsub.f32 %v2141, %v2142
      %v2144 = vand.u32 %v2143, 4294901760
      %2145 = vmatpush.msra.mxu0 %v2144
      %v2146 = vand.u32 %v1947, 4294901760
      %v2147 = vsub.f32 %v1947, %v2146
      %v2148 = vand.u32 %v2147, 4294901760
      %v2149 = vsub.f32 %v2147, %v2148
      %v2150 = vand.u32 %v2149, 4294901760
      %2151 = vmatpush.msra.mxu0 %v2150
      %v2152 = vand.u32 %v1946, 4294901760
      %v2153 = vsub.f32 %v1946, %v2152
      %v2154 = vand.u32 %v2153, 4294901760
      %v2155 = vsub.f32 %v2153, %v2154
      %v2156 = vand.u32 %v2155, 4294901760
      %2157 = vmatpush.msra.mxu0 %v2156
      %v2158 = vand.u32 %v1945, 4294901760
      %v2159 = vsub.f32 %v1945, %v2158
      %v2160 = vand.u32 %v2159, 4294901760
      %v2161 = vsub.f32 %v2159, %v2160
      %v2162 = vand.u32 %v2161, 4294901760
      %2163 = vmatpush.msra.mxu0 %v2162
      %v2164 = vand.u32 %v1944, 4294901760
      %v2165 = vsub.f32 %v1944, %v2164
      %v2166 = vand.u32 %v2165, 4294901760
      %v2167 = vsub.f32 %v2165, %v2166
      %v2168 = vand.u32 %v2167, 4294901760
      %2169 = vmatpush.msra.mxu0 %v2168
      %v2170 = vand.u32 %v1943, 4294901760
      %v2171 = vsub.f32 %v1943, %v2170
      %v2172 = vand.u32 %v2171, 4294901760
      %v2173 = vsub.f32 %v2171, %v2172
      %v2174 = vand.u32 %v2173, 4294901760
      %2175 = vmatpush.msra.mxu0 %v2174
      %v2176 = vand.u32 %v2008, 4294901760
      %2177 = vmatmul.f32.gmra.mxu0 %v2176
      %v2178 = vpop.f32.mrf.mxu0
      %v2179 = vadd.f32 %v2062, %v2178
      %v2180 = vand.u32 %v2011, 4294901760
      %2181 = vmatmul.f32.gmra.mxu0 %v2180
      %v2182 = vpop.f32.mrf.mxu0
      %v2183 = vadd.f32 %v2070, %v2182
      %v2184 = vand.u32 %v2014, 4294901760
      %2185 = vmatmul.f32.gmra.mxu0 %v2184
      %v2186 = vpop.f32.mrf.mxu0
      %v2187 = vadd.f32 %v2078, %v2186
      %v2188 = vand.u32 %v2017, 4294901760
      %2189 = vmatmul.f32.gmra.mxu0 %v2188
      %v2190 = vpop.f32.mrf.mxu0
      %v2191 = vadd.f32 %v2086, %v2190
      %v2192 = vand.u32 %v2020, 4294901760
      %2193 = vmatmul.f32.gmra.mxu0 %v2192
      %v2194 = vpop.f32.mrf.mxu0
      %v2195 = vadd.f32 %v2094, %v2194
      %v2196 = vand.u32 %v2023, 4294901760
      %2197 = vmatmul.f32.gmra.mxu0 %v2196
      %v2198 = vpop.f32.mrf.mxu0
      %v2199 = vadd.f32 %v2102, %v2198
      %v2200 = vand.u32 %v2026, 4294901760
      %2201 = vmatmul.f32.gmra.mxu0 %v2200
      %v2202 = vpop.f32.mrf.mxu0
      %v2203 = vadd.f32 %v2110, %v2202
      %v2204 = vand.u32 %v2029, 4294901760
      %2205 = vmatmul.f32.gmra.mxu0 %v2204
      %v2206 = vpop.f32.mrf.mxu0
      %v2207 = vadd.f32 %v2118, %v2206
      %2208 = vdwg.mxu0
      %2209 = vmatpush.msra.mxu0 0.0
      %2210 = vmatpush.msra.mxu0 0.0
      %2211 = vmatpush.msra.mxu0 0.0
      %2212 = vmatpush.msra.mxu0 0.0
      %2213 = vmatpush.msra.mxu0 0.0
      %2214 = vmatpush.msra.mxu0 0.0
      %2215 = vmatpush.msra.mxu0 0.0
      %2216 = vmatpush.msra.mxu0 0.0
      %v2217 = vand.u32 %v1950, 4294901760
      %v2218 = vsub.f32 %v1950, %v2217
      %2219 = vmatpush.msra.mxu0 %v2218
      %v2220 = vand.u32 %v1949, 4294901760
      %v2221 = vsub.f32 %v1949, %v2220
      %2222 = vmatpush.msra.mxu0 %v2221
      %v2223 = vand.u32 %v1948, 4294901760
      %v2224 = vsub.f32 %v1948, %v2223
      %2225 = vmatpush.msra.mxu0 %v2224
      %v2226 = vand.u32 %v1947, 4294901760
      %v2227 = vsub.f32 %v1947, %v2226
      %2228 = vmatpush.msra.mxu0 %v2227
      %v2229 = vand.u32 %v1946, 4294901760
      %v2230 = vsub.f32 %v1946, %v2229
      %2231 = vmatpush.msra.mxu0 %v2230
      %v2232 = vand.u32 %v1945, 4294901760
      %v2233 = vsub.f32 %v1945, %v2232
      %2234 = vmatpush.msra.mxu0 %v2233
      %v2235 = vand.u32 %v1944, 4294901760
      %v2236 = vsub.f32 %v1944, %v2235
      %2237 = vmatpush.msra.mxu0 %v2236
      %v2238 = vand.u32 %v1943, 4294901760
      %v2239 = vsub.f32 %v1943, %v2238
      %2240 = vmatpush.msra.mxu0 %v2239
      %v2241 = vand.u32 %v2008, 4294901760
      %v2242 = vsub.f32 %v2008, %v2241
      %2243 = vmatmul.f32.gmra.mxu0 %v2242
      %v2244 = vpop.f32.mrf.mxu0
      %v2245 = vadd.f32 %v2179, %v2244
      %v2246 = vand.u32 %v2011, 4294901760
      %v2247 = vsub.f32 %v2011, %v2246
      %2248 = vmatmul.f32.gmra.mxu0 %v2247
      %v2249 = vpop.f32.mrf.mxu0
      %v2250 = vadd.f32 %v2183, %v2249
      %v2251 = vand.u32 %v2014, 4294901760
      %v2252 = vsub.f32 %v2014, %v2251
      %2253 = vmatmul.f32.gmra.mxu0 %v2252
      %v2254 = vpop.f32.mrf.mxu0
      %v2255 = vadd.f32 %v2187, %v2254
      %v2256 = vand.u32 %v2017, 4294901760
      %v2257 = vsub.f32 %v2017, %v2256
      %2258 = vmatmul.f32.gmra.mxu0 %v2257
      %v2259 = vpop.f32.mrf.mxu0
      %v2260 = vadd.f32 %v2191, %v2259
      %v2261 = vand.u32 %v2020, 4294901760
      %v2262 = vsub.f32 %v2020, %v2261
      %2263 = vmatmul.f32.gmra.mxu0 %v2262
      %v2264 = vpop.f32.mrf.mxu0
      %v2265 = vadd.f32 %v2195, %v2264
      %v2266 = vand.u32 %v2023, 4294901760
      %v2267 = vsub.f32 %v2023, %v2266
      %2268 = vmatmul.f32.gmra.mxu0 %v2267
      %v2269 = vpop.f32.mrf.mxu0
      %v2270 = vadd.f32 %v2199, %v2269
      %v2271 = vand.u32 %v2026, 4294901760
      %v2272 = vsub.f32 %v2026, %v2271
      %2273 = vmatmul.f32.gmra.mxu0 %v2272
      %v2274 = vpop.f32.mrf.mxu0
      %v2275 = vadd.f32 %v2203, %v2274
      %v2276 = vand.u32 %v2029, 4294901760
      %v2277 = vsub.f32 %v2029, %v2276
      %2278 = vmatmul.f32.gmra.mxu0 %v2277
      %v2279 = vpop.f32.mrf.mxu0
      %v2280 = vadd.f32 %v2207, %v2279
      %2281 = vdwg.mxu0
      %2282 = vmatpush.msra.mxu0 0.0
      %2283 = vmatpush.msra.mxu0 0.0
      %2284 = vmatpush.msra.mxu0 0.0
      %2285 = vmatpush.msra.mxu0 0.0
      %2286 = vmatpush.msra.mxu0 0.0
      %2287 = vmatpush.msra.mxu0 0.0
      %2288 = vmatpush.msra.mxu0 0.0
      %2289 = vmatpush.msra.mxu0 0.0
      %v2290 = vand.u32 %v1950, 4294901760
      %2291 = vmatpush.msra.mxu0 %v2290
      %v2292 = vand.u32 %v1949, 4294901760
      %2293 = vmatpush.msra.mxu0 %v2292
      %v2294 = vand.u32 %v1948, 4294901760
      %2295 = vmatpush.msra.mxu0 %v2294
      %v2296 = vand.u32 %v1947, 4294901760
      %2297 = vmatpush.msra.mxu0 %v2296
      %v2298 = vand.u32 %v1946, 4294901760
      %2299 = vmatpush.msra.mxu0 %v2298
      %v2300 = vand.u32 %v1945, 4294901760
      %2301 = vmatpush.msra.mxu0 %v2300
      %v2302 = vand.u32 %v1944, 4294901760
      %2303 = vmatpush.msra.mxu0 %v2302
      %v2304 = vand.u32 %v1943, 4294901760
      %2305 = vmatpush.msra.mxu0 %v2304
      %v2306 = vand.u32 %v2008, 4294901760
      %v2307 = vsub.f32 %v2008, %v2306
      %v2308 = vand.u32 %v2307, 4294901760
      %2309 = vmatmul.f32.gmra.mxu0 %v2308
      %v2310 = vpop.f32.mrf.mxu0
      %v2311 = vadd.f32 %v2245, %v2310
      %v2312 = vand.u32 %v2011, 4294901760
      %v2313 = vsub.f32 %v2011, %v2312
      %v2314 = vand.u32 %v2313, 4294901760
      %2315 = vmatmul.f32.gmra.mxu0 %v2314
      %v2316 = vpop.f32.mrf.mxu0
      %v2317 = vadd.f32 %v2250, %v2316
      %v2318 = vand.u32 %v2014, 4294901760
      %v2319 = vsub.f32 %v2014, %v2318
      %v2320 = vand.u32 %v2319, 4294901760
      %2321 = vmatmul.f32.gmra.mxu0 %v2320
      %v2322 = vpop.f32.mrf.mxu0
      %v2323 = vadd.f32 %v2255, %v2322
      %v2324 = vand.u32 %v2017, 4294901760
      %v2325 = vsub.f32 %v2017, %v2324
      %v2326 = vand.u32 %v2325, 4294901760
      %2327 = vmatmul.f32.gmra.mxu0 %v2326
      %v2328 = vpop.f32.mrf.mxu0
      %v2329 = vadd.f32 %v2260, %v2328
      %v2330 = vand.u32 %v2020, 4294901760
      %v2331 = vsub.f32 %v2020, %v2330
      %v2332 = vand.u32 %v2331, 4294901760
      %2333 = vmatmul.f32.gmra.mxu0 %v2332
      %v2334 = vpop.f32.mrf.mxu0
      %v2335 = vadd.f32 %v2265, %v2334
      %v2336 = vand.u32 %v2023, 4294901760
      %v2337 = vsub.f32 %v2023, %v2336
      %v2338 = vand.u32 %v2337, 4294901760
      %2339 = vmatmul.f32.gmra.mxu0 %v2338
      %v2340 = vpop.f32.mrf.mxu0
      %v2341 = vadd.f32 %v2270, %v2340
      %v2342 = vand.u32 %v2026, 4294901760
      %v2343 = vsub.f32 %v2026, %v2342
      %v2344 = vand.u32 %v2343, 4294901760
      %2345 = vmatmul.f32.gmra.mxu0 %v2344
      %v2346 = vpop.f32.mrf.mxu0
      %v2347 = vadd.f32 %v2275, %v2346
      %v2348 = vand.u32 %v2029, 4294901760
      %v2349 = vsub.f32 %v2029, %v2348
      %v2350 = vand.u32 %v2349, 4294901760
      %2351 = vmatmul.f32.gmra.mxu0 %v2350
      %v2352 = vpop.f32.mrf.mxu0
      %v2353 = vadd.f32 %v2280, %v2352
      %2354 = vdwg.mxu0
      %2355 = vmatpush.msra.mxu0 0.0
      %2356 = vmatpush.msra.mxu0 0.0
      %2357 = vmatpush.msra.mxu0 0.0
      %2358 = vmatpush.msra.mxu0 0.0
      %2359 = vmatpush.msra.mxu0 0.0
      %2360 = vmatpush.msra.mxu0 0.0
      %2361 = vmatpush.msra.mxu0 0.0
      %2362 = vmatpush.msra.mxu0 0.0
      %v2363 = vand.u32 %v1950, 4294901760
      %v2364 = vsub.f32 %v1950, %v2363
      %v2365 = vand.u32 %v2364, 4294901760
      %2366 = vmatpush.msra.mxu0 %v2365
      %v2367 = vand.u32 %v1949, 4294901760
      %v2368 = vsub.f32 %v1949, %v2367
      %v2369 = vand.u32 %v2368, 4294901760
      %2370 = vmatpush.msra.mxu0 %v2369
      %v2371 = vand.u32 %v1948, 4294901760
      %v2372 = vsub.f32 %v1948, %v2371
      %v2373 = vand.u32 %v2372, 4294901760
      %2374 = vmatpush.msra.mxu0 %v2373
      %v2375 = vand.u32 %v1947, 4294901760
      %v2376 = vsub.f32 %v1947, %v2375
      %v2377 = vand.u32 %v2376, 4294901760
      %2378 = vmatpush.msra.mxu0 %v2377
      %v2379 = vand.u32 %v1946, 4294901760
      %v2380 = vsub.f32 %v1946, %v2379
      %v2381 = vand.u32 %v2380, 4294901760
      %2382 = vmatpush.msra.mxu0 %v2381
      %v2383 = vand.u32 %v1945, 4294901760
      %v2384 = vsub.f32 %v1945, %v2383
      %v2385 = vand.u32 %v2384, 4294901760
      %2386 = vmatpush.msra.mxu0 %v2385
      %v2387 = vand.u32 %v1944, 4294901760
      %v2388 = vsub.f32 %v1944, %v2387
      %v2389 = vand.u32 %v2388, 4294901760
      %2390 = vmatpush.msra.mxu0 %v2389
      %v2391 = vand.u32 %v1943, 4294901760
      %v2392 = vsub.f32 %v1943, %v2391
      %v2393 = vand.u32 %v2392, 4294901760
      %2394 = vmatpush.msra.mxu0 %v2393
      %v2395 = vand.u32 %v2008, 4294901760
      %2396 = vmatmul.f32.gmra.mxu0 %v2395
      %v2397 = vpop.f32.mrf.mxu0
      %v2398 = vadd.f32 %v2311, %v2397
      %v2399 = vand.u32 %v2011, 4294901760
      %2400 = vmatmul.f32.gmra.mxu0 %v2399
      %v2401 = vpop.f32.mrf.mxu0
      %v2402 = vadd.f32 %v2317, %v2401
      %v2403 = vand.u32 %v2014, 4294901760
      %2404 = vmatmul.f32.gmra.mxu0 %v2403
      %v2405 = vpop.f32.mrf.mxu0
      %v2406 = vadd.f32 %v2323, %v2405
      %v2407 = vand.u32 %v2017, 4294901760
      %2408 = vmatmul.f32.gmra.mxu0 %v2407
      %v2409 = vpop.f32.mrf.mxu0
      %v2410 = vadd.f32 %v2329, %v2409
      %v2411 = vand.u32 %v2020, 4294901760
      %2412 = vmatmul.f32.gmra.mxu0 %v2411
      %v2413 = vpop.f32.mrf.mxu0
      %v2414 = vadd.f32 %v2335, %v2413
      %v2415 = vand.u32 %v2023, 4294901760
      %2416 = vmatmul.f32.gmra.mxu0 %v2415
      %v2417 = vpop.f32.mrf.mxu0
      %v2418 = vadd.f32 %v2341, %v2417
      %v2419 = vand.u32 %v2026, 4294901760
      %2420 = vmatmul.f32.gmra.mxu0 %v2419
      %v2421 = vpop.f32.mrf.mxu0
      %v2422 = vadd.f32 %v2347, %v2421
      %v2423 = vand.u32 %v2029, 4294901760
      %2424 = vmatmul.f32.gmra.mxu0 %v2423
      %v2425 = vpop.f32.mrf.mxu0
      %v2426 = vadd.f32 %v2353, %v2425
      %2427 = vdwg.mxu0
      %2428 = vmatpush.msra.mxu0 0.0
      %2429 = vmatpush.msra.mxu0 0.0
      %2430 = vmatpush.msra.mxu0 0.0
      %2431 = vmatpush.msra.mxu0 0.0
      %2432 = vmatpush.msra.mxu0 0.0
      %2433 = vmatpush.msra.mxu0 0.0
      %2434 = vmatpush.msra.mxu0 0.0
      %2435 = vmatpush.msra.mxu0 0.0
      %v2436 = vand.u32 %v1950, 4294901760
      %2437 = vmatpush.msra.mxu0 %v2436
      %v2438 = vand.u32 %v1949, 4294901760
      %2439 = vmatpush.msra.mxu0 %v2438
      %v2440 = vand.u32 %v1948, 4294901760
      %2441 = vmatpush.msra.mxu0 %v2440
      %v2442 = vand.u32 %v1947, 4294901760
      %2443 = vmatpush.msra.mxu0 %v2442
      %v2444 = vand.u32 %v1946, 4294901760
      %2445 = vmatpush.msra.mxu0 %v2444
      %v2446 = vand.u32 %v1945, 4294901760
      %2447 = vmatpush.msra.mxu0 %v2446
      %v2448 = vand.u32 %v1944, 4294901760
      %2449 = vmatpush.msra.mxu0 %v2448
      %v2450 = vand.u32 %v1943, 4294901760
      %2451 = vmatpush.msra.mxu0 %v2450
      %v2452 = vand.u32 %v2008, 4294901760
      %2453 = vmatmul.f32.gmra.mxu0 %v2452
      %v2454 = vpop.f32.mrf.mxu0
      %v2455 = vadd.f32 %v2398, %v2454
      %v2456 = vand.u32 %v2011, 4294901760
      %2457 = vmatmul.f32.gmra.mxu0 %v2456
      %v2458 = vpop.f32.mrf.mxu0
      %v2459 = vadd.f32 %v2402, %v2458
      %v2460 = vand.u32 %v2014, 4294901760
      %2461 = vmatmul.f32.gmra.mxu0 %v2460
      %v2462 = vpop.f32.mrf.mxu0
      %v2463 = vadd.f32 %v2406, %v2462
      %v2464 = vand.u32 %v2017, 4294901760
      %2465 = vmatmul.f32.gmra.mxu0 %v2464
      %v2466 = vpop.f32.mrf.mxu0
      %v2467 = vadd.f32 %v2410, %v2466
      %v2468 = vand.u32 %v2020, 4294901760
      %2469 = vmatmul.f32.gmra.mxu0 %v2468
      %v2470 = vpop.f32.mrf.mxu0
      %v2471 = vadd.f32 %v2414, %v2470
      %v2472 = vand.u32 %v2023, 4294901760
      %2473 = vmatmul.f32.gmra.mxu0 %v2472
      %v2474 = vpop.f32.mrf.mxu0
      %v2475 = vadd.f32 %v2418, %v2474
      %v2476 = vand.u32 %v2026, 4294901760
      %2477 = vmatmul.f32.gmra.mxu0 %v2476
      %v2478 = vpop.f32.mrf.mxu0
      %v2479 = vadd.f32 %v2422, %v2478
      %v2480 = vand.u32 %v2029, 4294901760
      %2481 = vmatmul.f32.gmra.mxu0 %v2480
      %v2482 = vpop.f32.mrf.mxu0
      %v2483 = vadd.f32 %v2426, %v2482
      %2484 = vdwg.mxu0
      %v2485 = vmax.f32 %v2455, 0.0
      %v2486 = vmax.f32 %v2459, 0.0
      %v2487 = vmax.f32 %v2463, 0.0
      %v2488 = vmax.f32 %v2467, 0.0
      %v2489 = vmax.f32 %v2471, 0.0
      %v2490 = vmax.f32 %v2475, 0.0
      %v2491 = vmax.f32 %v2479, 0.0
      %v2492 = vmax.f32 %v2483, 0.0
      %v2493 = vadd.f32 %v1488, %v2485
      %v2494 = vadd.f32 %v1489, %v2486
      %v2495 = vadd.f32 %v1490, %v2487
      %v2496 = vadd.f32 %v1491, %v2488
      %v2497 = vadd.f32 %v1492, %v2489
      %v2498 = vadd.f32 %v1493, %v2490
      %v2499 = vadd.f32 %v1494, %v2491
      %v2500 = vadd.f32 %v1495, %v2492
      %2501 = vst [vmem:[%s495] sm:$0xff] %v2493
      %2502 = vst [vmem:[%s495 + $0x8] sm:$0xff] %v2494
      %2503 = vst [vmem:[%s495 + $0x10] sm:$0xff] %v2495
      %2504 = vst [vmem:[%s495 + $0x18] sm:$0xff] %v2496
      %2505 = vst [vmem:[%s495 + $0x20] sm:$0xff] %v2497
      %2506 = vst [vmem:[%s495 + $0x28] sm:$0xff] %v2498
      %2507 = vst [vmem:[%s495 + $0x30] sm:$0xff] %v2499
      %2508 = vst [vmem:[%s495 + $0x38] sm:$0xff] %v2500
      %p2509 = scmp.lt.s32.totalorder %s25, 24
      %s2510 = scalar_select %p2509, %s25, 24
      %p2511 = scmp.lt.s32.totalorder %s26, 0
      %s2512 = scalar_select %p2511, %s26, 0
      %s2513 = smul.addr %s2510, 8
      %s2514 = sadd.s32 %s2512, %s2513
      %s2515 = smul.addr %s2514, 8
      %s2516 = scalar_lea.vmem %s10, %s2515
      // Predicated region
      $region61: #{block_bone_input_forward.5} parent=59 // pred_check
        %p2517 = pneg %p297
      $region62: #{block_bone_input_forward.5} parent=59 // pred_check_branch
        %2519 = sbr.rel (%p2517) target = $region64
      $region63: #{block_bone_input_forward.5} parent=59 // pred_region
        _
      $region64: #{block_bone_input_forward.5} parent=59 // pred_fallthru
        _
    $region60: #{block_bone_input_forward.5} parent=5 // pred_fallthru
      _
    %p2520 = scmp.le.s32.totalorder 2, %s16
    // Predicated region
    $region65: #{block_bone_input_forward.5} parent=5 // pred_check
      %p2521 = pneg %p2520
    $region66: #{block_bone_input_forward.5} parent=5 // pred_check_branch
      %2523 = sbr.rel (%p2521) target = $region68
    $region67: #{block_bone_input_forward.5} parent=5 // pred_region
      %s2524 = ssub.s32 %s16, 2
      // Predicated region
      $region69: #{block_bone_input_forward.5} parent=67 // pred_check
        %p2525 = pneg %p303
      $region70: #{block_bone_input_forward.5} parent=67 // pred_check_branch
        %2527 = sbr.rel (%p2525) target = $region72
      $region71: #{block_bone_input_forward.5} parent=67 // pred_region
        %p2528 = scmp.lt.s32.totalorder %s27, 24
        %s2529 = scalar_select %p2528, %s27, 24
        %p2530 = scmp.lt.s32.totalorder %s28, 0
        %s2531 = scalar_select %p2530, %s28, 0
        %s2532 = smul.addr %s2529, 8
        %s2533 = sadd.s32 %s2531, %s2532
        %s2534 = smul.addr %s2533, 8
        %s2535 = scalar_lea.vmem %s10, %s2534
      $region72: #{block_bone_input_forward.5} parent=67 // pred_fallthru
        _
    $region68: #{block_bone_input_forward.5} parent=5 // pred_fallthru
      _
  $region6: #{block_bone_input_forward.5} parent=0 // loop_footer
    %s20 = sadd.s32 1, %s16
  $region7: #{block_bone_input_forward.5} parent=0 // loop_footer_branch
    %15 = sbr.rel target = $region3
  $region8: #{block_bone_input_forward.5} parent=0 // loop_exit
    _

</llo_original>
